<compile_context>
chip_gen: v5e
topology: v5e:2x2
jax: 0.10.0
libtpu: 0.0.40
codegen_flags: <defaults>
</compile_context>

<pallas_src>
import functools

import jax
import jax.numpy as jnp
from jax.experimental import pallas as pl
from jax.experimental.pallas import tpu as pltpu

EPS = 1e-5

# Row indices inside the packed (6, H) "vec" operand.
_G1, _BE1, _G2, _BE2, _BM, _BH = range(6)


def _round_up(x, m):
    return ((x + m - 1) // m) * m


def _pad_axis(a, target, axis):
    pad = target - a.shape[axis]
    if pad <= 0:
        return a
    widths = [(0, 0)] * a.ndim
    widths[axis] = (0, pad)
    return jnp.pad(a, widths)


# ----------------------------------------------------------------------------
# Kernel: one grid step == one modality.  Blocks are full-size (batch kept
# whole so BatchNorm batch statistics are exact).
# ----------------------------------------------------------------------------
def _cpah_kernel(x_ref, w1_ref, w2_ref, wm_ref, wh_ref, vec_ref,
                 h_ref, frc_ref, frp_ref):
    n_pad = h_ref.shape[-1]
    x = x_ref[...]  # (B, K_pad) f32, zero-padded beyond the real input dim

    # ---- feature layer 1: Linear (bias cancelled by BN mean) -> BN(train) -> ReLU
    z = jnp.dot(x.astype(jnp.bfloat16), w1_ref[...],
                preferred_element_type=jnp.float32)
    d = z - jnp.mean(z, axis=0, keepdims=True)
    var = jnp.mean(d * d, axis=0, keepdims=True)
    a = jnp.maximum(
        d * (vec_ref[_G1:_G1 + 1, :] * jax.lax.rsqrt(var + EPS))
        + vec_ref[_BE1:_BE1 + 1, :], 0.0)

    # ---- feature layer 2
    z = jnp.dot(a.astype(jnp.bfloat16), w2_ref[...],
                preferred_element_type=jnp.float32)
    d = z - jnp.mean(z, axis=0, keepdims=True)
    var = jnp.mean(d * d, axis=0, keepdims=True)
    f = jnp.maximum(
        d * (vec_ref[_G2:_G2 + 1, :] * jax.lax.rsqrt(var + EPS))
        + vec_ref[_BE2:_BE2 + 1, :], 0.0)

    # ---- mask module: (Conv1d over feature axis == Linear) -> Sigmoid
    mc = jax.nn.sigmoid(
        jnp.dot(f.astype(jnp.bfloat16), wm_ref[...],
                preferred_element_type=jnp.float32)
        + vec_ref[_BM:_BM + 1, :])

    f_rc = f * mc
    frc_ref[...] = f_rc
    frp_ref[...] = f - f_rc          # == f * (1 - mc)

    # ---- hash module: Linear -> Tanh (lane-dense padded output, sliced outside)
    bh = vec_ref[_BH:_BH + 1, :][:, :n_pad]
    h_ref[...] = jnp.tanh(
        jnp.dot(f_rc.astype(jnp.bfloat16), wh_ref[...],
                preferred_element_type=jnp.float32) + bh)


# ----------------------------------------------------------------------------
# One-time parameter preprocessing (do at setup time, NOT per forward call).
# ----------------------------------------------------------------------------
def prepare_cpah_params(img_params, txt_params):
    in_img = img_params["w1"].shape[0]
    in_txt = txt_params["w1"].shape[0]
    hidden_dim = img_params["w1"].shape[1]
    hash_dim = img_params["wh"].shape[1]
    k_pad = _round_up(max(in_img, in_txt, 128), 128)
    n_pad = _round_up(max(hash_dim, 128), 128)
    assert n_pad <= hidden_dim and hash_dim <= hidden_dim

    def stk(key, dtype, pad_axis=None, pad_to=None):
        a, b = img_params[key], txt_params[key]
        if pad_axis is not None:
            a = _pad_axis(a, pad_to, pad_axis)
            b = _pad_axis(b, pad_to, pad_axis)
        return jnp.stack([a, b], axis=0).astype(dtype)

    w1 = stk("w1", jnp.bfloat16, 0, k_pad)      # (2, K_pad, H)
    w2 = stk("w2", jnp.bfloat16)                # (2, H, H)
    wm = stk("wm", jnp.bfloat16)                # (2, H, H)
    wh = stk("wh", jnp.bfloat16, 1, n_pad)      # (2, H, n_pad)

    # b1/b2 intentionally dropped (cancelled by training-mode BN mean subtraction).
    def vec_row(key, pad_to_h=False):
        a, b = img_params[key], txt_params[key]
        if pad_to_h:
            a = _pad_axis(a, hidden_dim, 1)
            b = _pad_axis(b, hidden_dim, 1)
        return jnp.stack([a, b], axis=0)        # (2, 1, H)

    vec = jnp.concatenate(
        [vec_row("g1"), vec_row("be1"),
         vec_row("g2"), vec_row("be2"),
         vec_row("bm"), vec_row("bh", pad_to_h=True)],
        axis=1).astype(jnp.float32)             # (2, 6, H)

    return {"w1": w1, "w2": w2, "wm": wm, "wh": wh, "vec": vec}


# ----------------------------------------------------------------------------
# Forward wrapper.  Matches CPAH.forward: returns
# (h_img, h_txt, f_rc_img, f_rc_txt, f_rp_img, f_rp_txt).
# ----------------------------------------------------------------------------
@functools.partial(jax.jit, static_argnames=("hash_dim",))
def cpah_forward(r_img, r_txt, params, *, hash_dim):
    w1, w2, wm, wh, vec = (params["w1"], params["w2"], params["wm"],
                           params["wh"], params["vec"])
    B = r_img.shape[0]
    k_pad, H = w1.shape[1], w1.shape[2]
    n_pad = wh.shape[2]

    # Per-call input prep is tiny: pad both modalities to a common K, stack.
    x = jnp.stack([_pad_axis(r_img.astype(jnp.float32), k_pad, 1),
                   _pad_axis(r_txt.astype(jnp.float32), k_pad, 1)], axis=0)

    def mspec(*dims):
        zeros = (0,) * len(dims)
        return pl.BlockSpec((None,) + tuple(dims),
                            lambda m, zeros=zeros: (m,) + zeros)

    in_specs = [
        mspec(B, k_pad),     # x
        mspec(k_pad, H),     # w1
        mspec(H, H),         # w2
        mspec(H, H),         # wm
        mspec(H, n_pad),     # wh
        mspec(6, H),         # vec (g1, be1, g2, be2, bm, bh)
    ]
    out_specs = (mspec(B, n_pad), mspec(B, H), mspec(B, H))
    out_shape = (
        jax.ShapeDtypeStruct((2, B, n_pad), jnp.float32),   # h (padded lanes)
        jax.ShapeDtypeStruct((2, B, H), jnp.float32),       # f_rc
        jax.ShapeDtypeStruct((2, B, H), jnp.float32),       # f_rp
    )

    flops = 4 * B * (k_pad * H + 2 * H * H + H * n_pad)
    transcendentals = 2 * (B * H + B * n_pad + 2 * H)
    bytes_accessed = (2 * B * k_pad * 4                              # x
                      + 2 * (k_pad * H + 2 * H * H + H * n_pad) * 2  # bf16 weights
                      + 2 * 6 * H * 4                                # vec
                      + 2 * B * (n_pad + 2 * H) * 4)                 # outputs

    h_pad, f_rc, f_rp = pl.pallas_call(
        _cpah_kernel,
        out_shape=out_shape,
        grid_spec=pl.GridSpec(grid=(2,), in_specs=in_specs, out_specs=out_specs),
        compiler_params=pltpu.CompilerParams(
            dimension_semantics=("parallel",)),
        cost_estimate=pl.CostEstimate(
            flops=flops, transcendentals=transcendentals,
            bytes_accessed=bytes_accessed),
    )(x, w1, w2, wm, wh, vec)

    return (h_pad[0, :, :hash_dim], h_pad[1, :, :hash_dim],
            f_rc[0], f_rc[1], f_rp[0], f_rp[1])


# ----------------------------------------------------------------------------
# Parameter construction (deterministic, synthetic) and pure-JAX reference.
# ----------------------------------------------------------------------------
def make_modality_params(key, in_dim, hidden_dim, hash_dim):
    ks = jax.random.split(key, 12)
    s = 0.1
    return {
        "w1": jax.random.normal(ks[0], (in_dim, hidden_dim), jnp.float32) * s,
        "b1": jax.random.normal(ks[1], (1, hidden_dim), jnp.float32) * s,
        "g1": 1.0 + jax.random.normal(ks[2], (1, hidden_dim), jnp.float32) * s,
        "be1": jax.random.normal(ks[3], (1, hidden_dim), jnp.float32) * s,
        "w2": jax.random.normal(ks[4], (hidden_dim, hidden_dim), jnp.float32) * s,
        "b2": jax.random.normal(ks[5], (1, hidden_dim), jnp.float32) * s,
        "g2": 1.0 + jax.random.normal(ks[6], (1, hidden_dim), jnp.float32) * s,
        "be2": jax.random.normal(ks[7], (1, hidden_dim), jnp.float32) * s,
        # mask conv weight (H_out, 1, H, 1) collapsed & transposed to (H_in, H_out)
        "wm": jax.random.normal(ks[8], (hidden_dim, hidden_dim), jnp.float32) * s,
        "bm": jax.random.normal(ks[9], (1, hidden_dim), jnp.float32) * s,
        # hash head: original is nn.Linear(512, hash_dim) => hidden_dim must be 512
        "wh": jax.random.normal(ks[10], (hidden_dim, hash_dim), jnp.float32) * s,
        "bh": jax.random.normal(ks[11], (1, hash_dim), jnp.float32) * s,
    }


def _ref_modality(x, p):
    """Pure-JAX reference of the module math (bf16 matmuls matching the kernel).
    Includes b1/b2 exactly as the PyTorch module does; training-mode BN cancels
    them, so the kernel (which drops them) agrees to within FP noise."""
    bf = jnp.bfloat16
    z1 = jnp.dot(x.astype(bf), p["w1"].astype(bf),
                 preferred_element_type=jnp.float32) + p["b1"]
    mu1 = z1.mean(0, keepdims=True)
    v1 = ((z1 - mu1) ** 2).mean(0, keepdims=True)
    a1 = jnp.maximum((z1 - mu1) * (p["g1"] * jax.lax.rsqrt(v1 + EPS)) + p["be1"], 0.0)

    z2 = jnp.dot(a1.astype(bf), p["w2"].astype(bf),
                 preferred_element_type=jnp.float32) + p["b2"]
    mu2 = z2.mean(0, keepdims=True)
    v2 = ((z2 - mu2) ** 2).mean(0, keepdims=True)
    f = jnp.maximum((z2 - mu2) * (p["g2"] * jax.lax.rsqrt(v2 + EPS)) + p["be2"], 0.0)

    mc = jax.nn.sigmoid(jnp.dot(f.astype(bf), p["wm"].astype(bf),
                                preferred_element_type=jnp.float32) + p["bm"])
    f_rc = f * mc
    f_rp = f - f_rc
    h = jnp.tanh(jnp.dot(f_rc.astype(bf), p["wh"].astype(bf),
                         preferred_element_type=jnp.float32) + p["bh"])
    return h, f_rc, f_rp


if __name__ == "__main__":
    # Small, module-consistent shapes.  hidden_dim = 512 because the PyTorch
    # module hard-codes nn.Linear(512, hash_dim) in the hash heads.
    B = 8
    image_dim = 64
    text_dim = 48
    hidden_dim = 512
    hash_dim = 16
    # label_dim / discriminator heads are not used by forward().

    key = jax.random.PRNGKey(0)
    k_img_x, k_txt_x, k_img_p, k_txt_p = jax.random.split(key, 4)

    r_img = jax.random.normal(k_img_x, (B, image_dim), jnp.float32)
    r_txt = jax.random.normal(k_txt_x, (B, text_dim), jnp.float32)

    img_params = make_modality_params(k_img_p, image_dim, hidden_dim, hash_dim)
    txt_params = make_modality_params(k_txt_p, text_dim, hidden_dim, hash_dim)

    # One-time weight preprocessing (stack / pad / bf16-cast), hoisted out of
    # the per-call path.
    prepared = prepare_cpah_params(img_params, txt_params)

    outs = cpah_forward(r_img, r_txt, prepared, hash_dim=hash_dim)
    outs = jax.block_until_ready(outs)

    # Verify against a bf16-matched pure-JAX reference of the same math.
    ref_img = _ref_modality(r_img, img_params)
    ref_txt = _ref_modality(r_txt, txt_params)
    refs = (ref_img[0], ref_txt[0], ref_img[1], ref_txt[1], ref_img[2], ref_txt[2])
    for got, want in zip(outs, refs):
        assert got.shape == want.shape, (got.shape, want.shape)
        assert jnp.allclose(got, want, atol=2e-2, rtol=2e-2), float(
            jnp.max(jnp.abs(got - want)))

    print("KERNEL_OK")
</pallas_src>

<mosaic_0001>
module attributes {stable_mosaic.version = 11 : i64} {
  func.func @_cpah_kernel(%arg0: i32, %arg1: memref<1x8x128xf32, #tpu.memory_space<vmem>>, %arg2: memref<1x128x512xbf16, #tpu.memory_space<vmem>>, %arg3: memref<1x512x512xbf16, #tpu.memory_space<vmem>>, %arg4: memref<1x512x512xbf16, #tpu.memory_space<vmem>>, %arg5: memref<1x512x128xbf16, #tpu.memory_space<vmem>>, %arg6: memref<1x6x512xf32, #tpu.memory_space<vmem>>, %arg7: memref<1x8x128xf32, #tpu.memory_space<vmem>>, %arg8: memref<1x8x512xf32, #tpu.memory_space<vmem>>, %arg9: memref<1x8x512xf32, #tpu.memory_space<vmem>>) attributes {dimension_semantics = [#tpu.dimension_semantics<parallel>], iteration_bounds = array<i64: 2>, scalar_prefetch = 0 : i64, scratch_operands = 0 : i64, tpu.core_type = #tpu.core_type<tc>, window_params = [{transform_indices = @transform_0, window_bounds = array<i64: 1, 8, 128>}, {transform_indices = @transform_1, window_bounds = array<i64: 1, 128, 512>}, {transform_indices = @transform_2, window_bounds = array<i64: 1, 512, 512>}, {transform_indices = @transform_3, window_bounds = array<i64: 1, 512, 512>}, {transform_indices = @transform_4, window_bounds = array<i64: 1, 512, 128>}, {transform_indices = @transform_5, window_bounds = array<i64: 1, 6, 512>}, {transform_indices = @transform_6, window_bounds = array<i64: 1, 8, 128>}, {transform_indices = @transform_7, window_bounds = array<i64: 1, 8, 512>}, {transform_indices = @transform_8, window_bounds = array<i64: 1, 8, 512>}]} {
    %c0 = arith.constant 0 : index
    %c0_0 = arith.constant 0 : index
    %c0_1 = arith.constant 0 : index
    %0 = vector.load %arg1[%c0, %c0_0, %c0_1] : memref<1x8x128xf32, #tpu.memory_space<vmem>>, vector<1x8x128xf32>
    %1 = vector.shape_cast %0 : vector<1x8x128xf32> to vector<8x128xf32>
    %2 = arith.truncf %1 : vector<8x128xf32> to vector<8x128xbf16>
    %c0_2 = arith.constant 0 : index
    %c0_3 = arith.constant 0 : index
    %c0_4 = arith.constant 0 : index
    %3 = vector.load %arg2[%c0_2, %c0_3, %c0_4] : memref<1x128x512xbf16, #tpu.memory_space<vmem>>, vector<1x128x512xbf16>
    %4 = vector.shape_cast %3 : vector<1x128x512xbf16> to vector<128x512xbf16>
    %cst = arith.constant dense<0.000000e+00> : vector<8x512xf32>
    %5 = tpu.matmul %2, %4, %cst {dimension_numbers = #tpu.dot_dimension_numbers<[1], [0], [0], [1], [0, 0, 1, 1], [], []>} : vector<8x128xbf16>, vector<128x512xbf16>, vector<8x512xf32> -> vector<8x512xf32>
    %cst_5 = arith.constant dense<0.000000e+00> : vector<512xf32>
    %6 = vector.multi_reduction <add>, %5, %cst_5 [0] : vector<8x512xf32> to vector<512xf32>
    %7 = vector.shape_cast %6 : vector<512xf32> to vector<1x512xf32>
    %cst_6 = arith.constant 8.000000e+00 : f32
    %8 = vector.broadcast %cst_6 : f32 to vector<1x512xf32>
    %9 = arith.divf %7, %8 : vector<1x512xf32>
    %10 = vector.broadcast %9 : vector<1x512xf32> to vector<8x512xf32>
    %11 = arith.subf %5, %10 : vector<8x512xf32>
    %12 = arith.mulf %11, %11 : vector<8x512xf32>
    %cst_7 = arith.constant dense<0.000000e+00> : vector<512xf32>
    %13 = vector.multi_reduction <add>, %12, %cst_7 [0] : vector<8x512xf32> to vector<512xf32>
    %14 = vector.shape_cast %13 : vector<512xf32> to vector<1x512xf32>
    %cst_8 = arith.constant 8.000000e+00 : f32
    %15 = vector.broadcast %cst_8 : f32 to vector<1x512xf32>
    %16 = arith.divf %14, %15 : vector<1x512xf32>
    %c0_9 = arith.constant 0 : index
    %c0_10 = arith.constant 0 : index
    %c0_11 = arith.constant 0 : index
    %17 = vector.load %arg6[%c0_9, %c0_10, %c0_11] : memref<1x6x512xf32, #tpu.memory_space<vmem>>, vector<1x1x512xf32>
    %18 = vector.shape_cast %17 : vector<1x1x512xf32> to vector<1x512xf32>
    %cst_12 = arith.constant 9.99999974E-6 : f32
    %19 = vector.broadcast %cst_12 : f32 to vector<1x512xf32>
    %20 = arith.addf %16, %19 : vector<1x512xf32>
    %21 = math.rsqrt %20 : vector<1x512xf32>
    %22 = arith.mulf %18, %21 : vector<1x512xf32>
    %23 = vector.broadcast %22 : vector<1x512xf32> to vector<8x512xf32>
    %24 = arith.mulf %11, %23 : vector<8x512xf32>
    %c0_13 = arith.constant 0 : index
    %c1 = arith.constant 1 : index
    %c0_14 = arith.constant 0 : index
    %25 = vector.load %arg6[%c0_13, %c1, %c0_14] : memref<1x6x512xf32, #tpu.memory_space<vmem>>, vector<1x1x512xf32>
    %26 = vector.shape_cast %25 : vector<1x1x512xf32> to vector<1x512xf32>
    %27 = vector.broadcast %26 : vector<1x512xf32> to vector<8x512xf32>
    %28 = arith.addf %24, %27 : vector<8x512xf32>
    %cst_15 = arith.constant 0.000000e+00 : f32
    %29 = vector.broadcast %cst_15 : f32 to vector<8x512xf32>
    %30 = arith.maximumf %28, %29 : vector<8x512xf32>
    %31 = arith.truncf %30 : vector<8x512xf32> to vector<8x512xbf16>
    %c0_16 = arith.constant 0 : index
    %c0_17 = arith.constant 0 : index
    %c0_18 = arith.constant 0 : index
    %32 = vector.load %arg3[%c0_16, %c0_17, %c0_18] : memref<1x512x512xbf16, #tpu.memory_space<vmem>>, vector<1x512x512xbf16>
    %33 = vector.shape_cast %32 : vector<1x512x512xbf16> to vector<512x512xbf16>
    %cst_19 = arith.constant dense<0.000000e+00> : vector<8x512xf32>
    %34 = tpu.matmul %31, %33, %cst_19 {dimension_numbers = #tpu.dot_dimension_numbers<[1], [0], [0], [1], [0, 0, 1, 1], [], []>} : vector<8x512xbf16>, vector<512x512xbf16>, vector<8x512xf32> -> vector<8x512xf32>
    %cst_20 = arith.constant dense<0.000000e+00> : vector<512xf32>
    %35 = vector.multi_reduction <add>, %34, %cst_20 [0] : vector<8x512xf32> to vector<512xf32>
    %36 = vector.shape_cast %35 : vector<512xf32> to vector<1x512xf32>
    %cst_21 = arith.constant 8.000000e+00 : f32
    %37 = vector.broadcast %cst_21 : f32 to vector<1x512xf32>
    %38 = arith.divf %36, %37 : vector<1x512xf32>
    %39 = vector.broadcast %38 : vector<1x512xf32> to vector<8x512xf32>
    %40 = arith.subf %34, %39 : vector<8x512xf32>
    %41 = arith.mulf %40, %40 : vector<8x512xf32>
    %cst_22 = arith.constant dense<0.000000e+00> : vector<512xf32>
    %42 = vector.multi_reduction <add>, %41, %cst_22 [0] : vector<8x512xf32> to vector<512xf32>
    %43 = vector.shape_cast %42 : vector<512xf32> to vector<1x512xf32>
    %cst_23 = arith.constant 8.000000e+00 : f32
    %44 = vector.broadcast %cst_23 : f32 to vector<1x512xf32>
    %45 = arith.divf %43, %44 : vector<1x512xf32>
    %c0_24 = arith.constant 0 : index
    %c2 = arith.constant 2 : index
    %c0_25 = arith.constant 0 : index
    %46 = vector.load %arg6[%c0_24, %c2, %c0_25] : memref<1x6x512xf32, #tpu.memory_space<vmem>>, vector<1x1x512xf32>
    %47 = vector.shape_cast %46 : vector<1x1x512xf32> to vector<1x512xf32>
    %cst_26 = arith.constant 9.99999974E-6 : f32
    %48 = vector.broadcast %cst_26 : f32 to vector<1x512xf32>
    %49 = arith.addf %45, %48 : vector<1x512xf32>
    %50 = math.rsqrt %49 : vector<1x512xf32>
    %51 = arith.mulf %47, %50 : vector<1x512xf32>
    %52 = vector.broadcast %51 : vector<1x512xf32> to vector<8x512xf32>
    %53 = arith.mulf %40, %52 : vector<8x512xf32>
    %c0_27 = arith.constant 0 : index
    %c3 = arith.constant 3 : index
    %c0_28 = arith.constant 0 : index
    %54 = vector.load %arg6[%c0_27, %c3, %c0_28] : memref<1x6x512xf32, #tpu.memory_space<vmem>>, vector<1x1x512xf32>
    %55 = vector.shape_cast %54 : vector<1x1x512xf32> to vector<1x512xf32>
    %56 = vector.broadcast %55 : vector<1x512xf32> to vector<8x512xf32>
    %57 = arith.addf %53, %56 : vector<8x512xf32>
    %cst_29 = arith.constant 0.000000e+00 : f32
    %58 = vector.broadcast %cst_29 : f32 to vector<8x512xf32>
    %59 = arith.maximumf %57, %58 : vector<8x512xf32>
    %60 = arith.truncf %59 : vector<8x512xf32> to vector<8x512xbf16>
    %c0_30 = arith.constant 0 : index
    %c0_31 = arith.constant 0 : index
    %c0_32 = arith.constant 0 : index
    %61 = vector.load %arg4[%c0_30, %c0_31, %c0_32] : memref<1x512x512xbf16, #tpu.memory_space<vmem>>, vector<1x512x512xbf16>
    %62 = vector.shape_cast %61 : vector<1x512x512xbf16> to vector<512x512xbf16>
    %cst_33 = arith.constant dense<0.000000e+00> : vector<8x512xf32>
    %63 = tpu.matmul %60, %62, %cst_33 {dimension_numbers = #tpu.dot_dimension_numbers<[1], [0], [0], [1], [0, 0, 1, 1], [], []>} : vector<8x512xbf16>, vector<512x512xbf16>, vector<8x512xf32> -> vector<8x512xf32>
    %c0_34 = arith.constant 0 : index
    %c4 = arith.constant 4 : index
    %c0_35 = arith.constant 0 : index
    %64 = vector.load %arg6[%c0_34, %c4, %c0_35] : memref<1x6x512xf32, #tpu.memory_space<vmem>>, vector<1x1x512xf32>
    %65 = vector.shape_cast %64 : vector<1x1x512xf32> to vector<1x512xf32>
    %66 = vector.broadcast %65 : vector<1x512xf32> to vector<8x512xf32>
    %67 = arith.addf %63, %66 : vector<8x512xf32>
    %68 = arith.negf %67 : vector<8x512xf32>
    %69 = math.exp %68 : vector<8x512xf32>
    %cst_36 = arith.constant 1.000000e+00 : f32
    %70 = vector.broadcast %cst_36 : f32 to vector<8x512xf32>
    %71 = arith.addf %70, %69 : vector<8x512xf32>
    %72 = arith.divf %70, %71 : vector<8x512xf32>
    %73 = arith.mulf %59, %72 : vector<8x512xf32>
    %c0_37 = arith.constant 0 : index
    %c0_38 = arith.constant 0 : index
    %c0_39 = arith.constant 0 : index
    %74 = vector.load %arg8[%c0_37, %c0_38, %c0_39] : memref<1x8x512xf32, #tpu.memory_space<vmem>>, vector<1x8x512xf32>
    %75 = vector.shape_cast %74 : vector<1x8x512xf32> to vector<8x512xf32>
    %76 = vector.shape_cast %73 : vector<8x512xf32> to vector<1x8x512xf32>
    tpu.vector_store %arg8[%c0_37, %c0_38, %c0_39], %76 {strides = array<i32>} : memref<1x8x512xf32, #tpu.memory_space<vmem>>, vector<1x8x512xf32>,
    %77 = arith.subf %59, %73 : vector<8x512xf32>
    %c0_40 = arith.constant 0 : index
    %c0_41 = arith.constant 0 : index
    %c0_42 = arith.constant 0 : index
    %78 = vector.load %arg9[%c0_40, %c0_41, %c0_42] : memref<1x8x512xf32, #tpu.memory_space<vmem>>, vector<1x8x512xf32>
    %79 = vector.shape_cast %78 : vector<1x8x512xf32> to vector<8x512xf32>
    %80 = vector.shape_cast %77 : vector<8x512xf32> to vector<1x8x512xf32>
    tpu.vector_store %arg9[%c0_40, %c0_41, %c0_42], %80 {strides = array<i32>} : memref<1x8x512xf32, #tpu.memory_space<vmem>>, vector<1x8x512xf32>,
    %c0_43 = arith.constant 0 : index
    %c5 = arith.constant 5 : index
    %c0_44 = arith.constant 0 : index
    %81 = vector.load %arg6[%c0_43, %c5, %c0_44] : memref<1x6x512xf32, #tpu.memory_space<vmem>>, vector<1x1x512xf32>
    %82 = vector.shape_cast %81 : vector<1x1x512xf32> to vector<1x512xf32>
    %83 = vector.extract_strided_slice %82 {offsets = [0, 0], sizes = [1, 128], strides = [1, 1]} : vector<1x512xf32> to vector<1x128xf32>
    %84 = arith.truncf %73 : vector<8x512xf32> to vector<8x512xbf16>
    %c0_45 = arith.constant 0 : index
    %c0_46 = arith.constant 0 : index
    %c0_47 = arith.constant 0 : index
    %85 = vector.load %arg5[%c0_45, %c0_46, %c0_47] : memref<1x512x128xbf16, #tpu.memory_space<vmem>>, vector<1x512x128xbf16>
    %86 = vector.shape_cast %85 : vector<1x512x128xbf16> to vector<512x128xbf16>
    %cst_48 = arith.constant dense<0.000000e+00> : vector<8x128xf32>
    %87 = tpu.matmul %84, %86, %cst_48 {dimension_numbers = #tpu.dot_dimension_numbers<[1], [0], [0], [1], [0, 0, 1, 1], [], []>} : vector<8x512xbf16>, vector<512x128xbf16>, vector<8x128xf32> -> vector<8x128xf32>
    %88 = vector.broadcast %83 : vector<1x128xf32> to vector<8x128xf32>
    %89 = arith.addf %87, %88 : vector<8x128xf32>
    %90 = math.tanh %89 : vector<8x128xf32>
    %c0_49 = arith.constant 0 : index
    %c0_50 = arith.constant 0 : index
    %c0_51 = arith.constant 0 : index
    %91 = vector.load %arg7[%c0_49, %c0_50, %c0_51] : memref<1x8x128xf32, #tpu.memory_space<vmem>>, vector<1x8x128xf32>
    %92 = vector.shape_cast %91 : vector<1x8x128xf32> to vector<8x128xf32>
    %93 = vector.shape_cast %90 : vector<8x128xf32> to vector<1x8x128xf32>
    tpu.vector_store %arg7[%c0_49, %c0_50, %c0_51], %93 {strides = array<i32>} : memref<1x8x128xf32, #tpu.memory_space<vmem>>, vector<1x8x128xf32>,
    return
  }
  func.func @transform_0(%arg0: i32) -> (i32, i32, i32) {
    %c0_i32 = arith.constant 0 : i32
    %c0_i32_0 = arith.constant 0 : i32
    %c0_i32_1 = arith.constant 0 : i32
    return %arg0, %c0_i32, %c0_i32_0 : i32, i32, i32
  }
  func.func @transform_1(%arg0: i32) -> (i32, i32, i32) {
    %c0_i32 = arith.constant 0 : i32
    %c0_i32_0 = arith.constant 0 : i32
    %c0_i32_1 = arith.constant 0 : i32
    return %arg0, %c0_i32, %c0_i32_0 : i32, i32, i32
  }
  func.func @transform_2(%arg0: i32) -> (i32, i32, i32) {
    %c0_i32 = arith.constant 0 : i32
    %c0_i32_0 = arith.constant 0 : i32
    %c0_i32_1 = arith.constant 0 : i32
    return %arg0, %c0_i32, %c0_i32_0 : i32, i32, i32
  }
  func.func @transform_3(%arg0: i32) -> (i32, i32, i32) {
    %c0_i32 = arith.constant 0 : i32
    %c0_i32_0 = arith.constant 0 : i32
    %c0_i32_1 = arith.constant 0 : i32
    return %arg0, %c0_i32, %c0_i32_0 : i32, i32, i32
  }
  func.func @transform_4(%arg0: i32) -> (i32, i32, i32) {
    %c0_i32 = arith.constant 0 : i32
    %c0_i32_0 = arith.constant 0 : i32
    %c0_i32_1 = arith.constant 0 : i32
    return %arg0, %c0_i32, %c0_i32_0 : i32, i32, i32
  }
  func.func @transform_5(%arg0: i32) -> (i32, i32, i32) {
    %c0_i32 = arith.constant 0 : i32
    %c0_i32_0 = arith.constant 0 : i32
    %c0_i32_1 = arith.constant 0 : i32
    return %arg0, %c0_i32, %c0_i32_0 : i32, i32, i32
  }
  func.func @transform_6(%arg0: i32) -> (i32, i32, i32) {
    %c0_i32 = arith.constant 0 : i32
    %c0_i32_0 = arith.constant 0 : i32
    %c0_i32_1 = arith.constant 0 : i32
    return %arg0, %c0_i32, %c0_i32_0 : i32, i32, i32
  }
  func.func @transform_7(%arg0: i32) -> (i32, i32, i32) {
    %c0_i32 = arith.constant 0 : i32
    %c0_i32_0 = arith.constant 0 : i32
    %c0_i32_1 = arith.constant 0 : i32
    return %arg0, %c0_i32, %c0_i32_0 : i32, i32, i32
  }
  func.func @transform_8(%arg0: i32) -> (i32, i32, i32) {
    %c0_i32 = arith.constant 0 : i32
    %c0_i32_0 = arith.constant 0 : i32
    %c0_i32_1 = arith.constant 0 : i32
    return %arg0, %c0_i32, %c0_i32_0 : i32, i32, i32
  }
}

</mosaic_0001>

<llo_original>
// kernel: cpah_forward.1
$region0: #{cpah_forward.1}
  #allocation0 [shape = 'u32[]', space=smem, size = 0x4, offset = 0x4, fixed_abs, tag = 'smem constant byte address 0x4 - core index']
  #allocation1 [shape = 'u32[72,128]{1,0:T(1,128)}', space=vmem, size = 0x9000, scoped, tag = 'internal scratch']
  %s0 = inlined_call_operand.vmem [shape: f32[2,8,128], index: 0, kind: input, shape index: {}]
  %s1 = inlined_call_operand.hbm [shape: bf16[2,128,512], index: 1, kind: input, shape index: {}]
  %s2 = inlined_call_operand.hbm [shape: bf16[2,512,512], index: 2, kind: input, shape index: {}]
  %s3 = inlined_call_operand.hbm [shape: bf16[2,512,512], index: 3, kind: input, shape index: {}]
  %s4 = inlined_call_operand.hbm [shape: bf16[2,512,128], index: 4, kind: input, shape index: {}]
  %s5 = inlined_call_operand.vmem [shape: f32[2,6,512], index: 5, kind: input, shape index: {}]
  %s6 = inlined_call_operand.vmem [shape: f32[2,8,128], index: 6, kind: output, shape index: {0}]
  %s7 = inlined_call_operand.vmem [shape: f32[2,8,512], index: 7, kind: output, shape index: {1}]
  %s8 = inlined_call_operand.vmem [shape: f32[2,8,512], index: 8, kind: output, shape index: {2}]
  %9 = xla_tuple %s6, %s7, %s8
  %s10 = sld [smem:[#allocation0]]
  $region89: #{cpah_forward.1} parent=0
    _
  %s12 = ssub.s32 1, %s10
  %s13 = scalar_select 0, %s12, %s10
  $region1: #{cpah_forward.1} parent=0
    #allocation2 [shape = 'u8[262144]{0}', space=vmem, size = 0x40000, scoped, tag = 'input window, operand 1']
    #allocation3 [shape = 's32[2]{0}', space=sflag, size = 0x8, scoped, tag = 'scoped memory for cpah_forward.1']
    #allocation4 [shape = 'u8[1048576]{0}', space=vmem, size = 0x100000, scoped, tag = 'input window, operand 2']
    #allocation5 [shape = 's32[2]{0}', space=sflag, size = 0x8, scoped, tag = 'scoped memory for cpah_forward.1']
    #allocation6 [shape = 'u8[1048576]{0}', space=vmem, size = 0x100000, scoped, tag = 'input window, operand 3']
    #allocation7 [shape = 'u8[262144]{0}', space=vmem, size = 0x40000, scoped, tag = 'input window, operand 4']
    #allocation8 [shape = 's32[2]{0}', space=sflag, size = 0x8, scoped, tag = 'scoped memory for cpah_forward.1']
    %14 = vsyncpa [#allocation3], 0
    %s15 = scalar_lea.sflag [#allocation3], 1
    %16 = vsyncpa %s15, 0
    %17 = vsyncpa [#allocation5], 0
    %s18 = scalar_lea.sflag [#allocation5], 1
    %19 = vsyncpa %s18, 0
    %20 = vsyncpa [#allocation8], 0
    %s21 = scalar_lea.sflag [#allocation8], 1
    %22 = vsyncpa %s21, 0
    loop: start=0, step=1, limit=4
    $region2: #{cpah_forward.1} parent=1 // loop_pre_header
      _
    $region3: #{cpah_forward.1} parent=1 // loop_header
      %s24 = sphi 0, %s28
      %p25 = scmp.ge.s32.totalorder %s24, 4
      %s34 = sphi 0, %s36
      %s37 = sphi 0, %s34
      %s38 = sphi 0, %s37
      %s54 = sphi 0, %s38
      %s60 = sphi 0, %s62
      %s63 = sphi 0, %s60
      %s64 = sphi 0, %s63
      %s80 = sphi 0, %s64
      %s86 = sphi 0, %s88
      %s89 = sphi 0, %s86
      %s90 = sphi 0, %s89
      %s106 = sphi 0, %s90
      %s112 = sphi 0, %s114
      %s115 = sphi 0, %s112
      %s116 = sphi 0, %s115
      %s132 = sphi 0, %s116
      %s138 = sphi 0, %s140
      %s141 = sphi 0, %s138
      %s142 = sphi 0, %s141
      %s158 = sphi 0, %s142
      %s164 = sphi 0, %s166
      %s167 = sphi 0, %s164
      %s168 = sphi 0, %s167
      %s184 = sphi 0, %s168
      %s190 = sphi 0, %s192
      %s193 = sphi 0, %s190
      %s194 = sphi 0, %s193
      %s210 = sphi 0, %s194
      %s216 = sphi 0, %s218
      %s219 = sphi 0, %s216
      %s220 = sphi 0, %s219
      %s236 = sphi 0, %s220
      %s242 = sphi 0, %s244
      %s245 = sphi 0, %s242
      %s246 = sphi 0, %s245
      %s262 = sphi 0, %s246
    $region4: #{cpah_forward.1} parent=1 // loop_header_branch
      %27 = sbr.rel (%p25) target = $region8
    $region5: #{cpah_forward.1} parent=1 // loop_body
      %s29 = ssub.s32 %s24, 1
      %s30 = ssub.s32 %s24, 2
      %s31 = sadd.s32 %s24, 1
      %s32 = ssub.s32 %s24, %s31
      %p33 = scmp.eq.s32.totalorder %s32, 0
      %s35 = sadd.s32 %s34, 1
      %s36 = scalar_select %p33, %s34, %s35
      %p39 = pneg %p33
      %p40 = scmp.eq.s32.totalorder %s24, 1
      %p41 = por %p39, %p40
      %p42 = scmp.ne.s32.totalorder %s34, %s37
      %p43 = scmp.eq.s32.totalorder %s24, 0
      %p44 = por %p42, %p43
      %p45 = scmp.ne.s32.totalorder %s34, %s37
      %p46 = scmp.eq.s32.totalorder %s29, 1
      %p47 = por %p45, %p46
      %p48 = scmp.ne.s32.totalorder %s37, %s38
      %p49 = scmp.eq.s32.totalorder %s29, 0
      %p50 = por %p48, %p49
      %p51 = scmp.ne.s32.totalorder %s37, %s38
      %p52 = scmp.eq.s32.totalorder %s30, 1
      %p53 = por %p51, %p52
      %p55 = scmp.ne.s32.totalorder %s38, %s54
      %p56 = scmp.eq.s32.totalorder %s30, 0
      %p57 = por %p55, %p56
      %s58 = ssub.s32 %s24, %s31
      %p59 = scmp.eq.s32.totalorder %s58, 0
      %s61 = sadd.s32 %s60, 1
      %s62 = scalar_select %p59, %s60, %s61
      %p65 = pneg %p59
      %p66 = scmp.eq.s32.totalorder %s24, 1
      %p67 = por %p65, %p66
      %p68 = scmp.ne.s32.totalorder %s60, %s63
      %p69 = scmp.eq.s32.totalorder %s24, 0
      %p70 = por %p68, %p69
      %p71 = scmp.ne.s32.totalorder %s60, %s63
      %p72 = scmp.eq.s32.totalorder %s29, 1
      %p73 = por %p71, %p72
      %p74 = scmp.ne.s32.totalorder %s63, %s64
      %p75 = scmp.eq.s32.totalorder %s29, 0
      %p76 = por %p74, %p75
      %p77 = scmp.ne.s32.totalorder %s63, %s64
      %p78 = scmp.eq.s32.totalorder %s30, 1
      %p79 = por %p77, %p78
      %p81 = scmp.ne.s32.totalorder %s64, %s80
      %p82 = scmp.eq.s32.totalorder %s30, 0
      %p83 = por %p81, %p82
      %s84 = ssub.s32 %s24, %s31
      %p85 = scmp.eq.s32.totalorder %s84, 0
      %s87 = sadd.s32 %s86, 1
      %s88 = scalar_select %p85, %s86, %s87
      %p91 = pneg %p85
      %p92 = scmp.eq.s32.totalorder %s24, 1
      %p93 = por %p91, %p92
      %p94 = scmp.ne.s32.totalorder %s86, %s89
      %p95 = scmp.eq.s32.totalorder %s24, 0
      %p96 = por %p94, %p95
      %p97 = scmp.ne.s32.totalorder %s86, %s89
      %p98 = scmp.eq.s32.totalorder %s29, 1
      %p99 = por %p97, %p98
      %p100 = scmp.ne.s32.totalorder %s89, %s90
      %p101 = scmp.eq.s32.totalorder %s29, 0
      %p102 = por %p100, %p101
      %p103 = scmp.ne.s32.totalorder %s89, %s90
      %p104 = scmp.eq.s32.totalorder %s30, 1
      %p105 = por %p103, %p104
      %p107 = scmp.ne.s32.totalorder %s90, %s106
      %p108 = scmp.eq.s32.totalorder %s30, 0
      %p109 = por %p107, %p108
      %s110 = ssub.s32 %s24, %s31
      %p111 = scmp.eq.s32.totalorder %s110, 0
      %s113 = sadd.s32 %s112, 1
      %s114 = scalar_select %p111, %s112, %s113
      %p117 = pneg %p111
      %p118 = scmp.eq.s32.totalorder %s24, 1
      %p119 = por %p117, %p118
      %p120 = scmp.ne.s32.totalorder %s112, %s115
      %p121 = scmp.eq.s32.totalorder %s24, 0
      %p122 = por %p120, %p121
      %p123 = scmp.ne.s32.totalorder %s112, %s115
      %p124 = scmp.eq.s32.totalorder %s29, 1
      %p125 = por %p123, %p124
      %p126 = scmp.ne.s32.totalorder %s115, %s116
      %p127 = scmp.eq.s32.totalorder %s29, 0
      %p128 = por %p126, %p127
      %p129 = scmp.ne.s32.totalorder %s115, %s116
      %p130 = scmp.eq.s32.totalorder %s30, 1
      %p131 = por %p129, %p130
      %p133 = scmp.ne.s32.totalorder %s116, %s132
      %p134 = scmp.eq.s32.totalorder %s30, 0
      %p135 = por %p133, %p134
      %s136 = ssub.s32 %s24, %s31
      %p137 = scmp.eq.s32.totalorder %s136, 0
      %s139 = sadd.s32 %s138, 1
      %s140 = scalar_select %p137, %s138, %s139
      %p143 = pneg %p137
      %p144 = scmp.eq.s32.totalorder %s24, 1
      %p145 = por %p143, %p144
      %p146 = scmp.ne.s32.totalorder %s138, %s141
      %p147 = scmp.eq.s32.totalorder %s24, 0
      %p148 = por %p146, %p147
      %p149 = scmp.ne.s32.totalorder %s138, %s141
      %p150 = scmp.eq.s32.totalorder %s29, 1
      %p151 = por %p149, %p150
      %p152 = scmp.ne.s32.totalorder %s141, %s142
      %p153 = scmp.eq.s32.totalorder %s29, 0
      %p154 = por %p152, %p153
      %p155 = scmp.ne.s32.totalorder %s141, %s142
      %p156 = scmp.eq.s32.totalorder %s30, 1
      %p157 = por %p155, %p156
      %p159 = scmp.ne.s32.totalorder %s142, %s158
      %p160 = scmp.eq.s32.totalorder %s30, 0
      %p161 = por %p159, %p160
      %s162 = ssub.s32 %s24, %s31
      %p163 = scmp.eq.s32.totalorder %s162, 0
      %s165 = sadd.s32 %s164, 1
      %s166 = scalar_select %p163, %s164, %s165
      %p169 = pneg %p163
      %p170 = scmp.eq.s32.totalorder %s24, 1
      %p171 = por %p169, %p170
      %p172 = scmp.ne.s32.totalorder %s164, %s167
      %p173 = scmp.eq.s32.totalorder %s24, 0
      %p174 = por %p172, %p173
      %p175 = scmp.ne.s32.totalorder %s164, %s167
      %p176 = scmp.eq.s32.totalorder %s29, 1
      %p177 = por %p175, %p176
      %p178 = scmp.ne.s32.totalorder %s167, %s168
      %p179 = scmp.eq.s32.totalorder %s29, 0
      %p180 = por %p178, %p179
      %p181 = scmp.ne.s32.totalorder %s167, %s168
      %p182 = scmp.eq.s32.totalorder %s30, 1
      %p183 = por %p181, %p182
      %p185 = scmp.ne.s32.totalorder %s168, %s184
      %p186 = scmp.eq.s32.totalorder %s30, 0
      %p187 = por %p185, %p186
      %s188 = ssub.s32 %s24, %s31
      %p189 = scmp.eq.s32.totalorder %s188, 0
      %s191 = sadd.s32 %s190, 1
      %s192 = scalar_select %p189, %s190, %s191
      %p195 = pneg %p189
      %p196 = scmp.eq.s32.totalorder %s24, 1
      %p197 = por %p195, %p196
      %p198 = scmp.ne.s32.totalorder %s190, %s193
      %p199 = scmp.eq.s32.totalorder %s24, 0
      %p200 = por %p198, %p199
      %p201 = scmp.ne.s32.totalorder %s190, %s193
      %p202 = scmp.eq.s32.totalorder %s29, 1
      %p203 = por %p201, %p202
      %p204 = scmp.ne.s32.totalorder %s193, %s194
      %p205 = scmp.eq.s32.totalorder %s29, 0
      %p206 = por %p204, %p205
      %p207 = scmp.ne.s32.totalorder %s193, %s194
      %p208 = scmp.eq.s32.totalorder %s30, 1
      %p209 = por %p207, %p208
      %p211 = scmp.ne.s32.totalorder %s194, %s210
      %p212 = scmp.eq.s32.totalorder %s30, 0
      %p213 = por %p211, %p212
      %s214 = ssub.s32 %s24, %s31
      %p215 = scmp.eq.s32.totalorder %s214, 0
      %s217 = sadd.s32 %s216, 1
      %s218 = scalar_select %p215, %s216, %s217
      %p221 = pneg %p215
      %p222 = scmp.eq.s32.totalorder %s24, 1
      %p223 = por %p221, %p222
      %p224 = scmp.ne.s32.totalorder %s216, %s219
      %p225 = scmp.eq.s32.totalorder %s24, 0
      %p226 = por %p224, %p225
      %p227 = scmp.ne.s32.totalorder %s216, %s219
      %p228 = scmp.eq.s32.totalorder %s29, 1
      %p229 = por %p227, %p228
      %p230 = scmp.ne.s32.totalorder %s219, %s220
      %p231 = scmp.eq.s32.totalorder %s29, 0
      %p232 = por %p230, %p231
      %p233 = scmp.ne.s32.totalorder %s219, %s220
      %p234 = scmp.eq.s32.totalorder %s30, 1
      %p235 = por %p233, %p234
      %p237 = scmp.ne.s32.totalorder %s220, %s236
      %p238 = scmp.eq.s32.totalorder %s30, 0
      %p239 = por %p237, %p238
      %s240 = ssub.s32 %s24, %s31
      %p241 = scmp.eq.s32.totalorder %s240, 0
      %s243 = sadd.s32 %s242, 1
      %s244 = scalar_select %p241, %s242, %s243
      %p247 = pneg %p241
      %p248 = scmp.eq.s32.totalorder %s24, 1
      %p249 = por %p247, %p248
      %p250 = scmp.ne.s32.totalorder %s242, %s245
      %p251 = scmp.eq.s32.totalorder %s24, 0
      %p252 = por %p250, %p251
      %p253 = scmp.ne.s32.totalorder %s242, %s245
      %p254 = scmp.eq.s32.totalorder %s29, 1
      %p255 = por %p253, %p254
      %p256 = scmp.ne.s32.totalorder %s245, %s246
      %p257 = scmp.eq.s32.totalorder %s29, 0
      %p258 = por %p256, %p257
      %p259 = scmp.ne.s32.totalorder %s245, %s246
      %p260 = scmp.eq.s32.totalorder %s30, 1
      %p261 = por %p259, %p260
      %p263 = scmp.ne.s32.totalorder %s246, %s262
      %p264 = scmp.eq.s32.totalorder %s30, 0
      %p265 = por %p263, %p264
      %p266 = scmp.le.s32.totalorder 1, %s24
      %p267 = scmp.lt.s32.totalorder %s24, 3
      %p268 = pnand %p266, %p267
      %p269 = pneg %p268
      // Predicated region
      $region9: #{cpah_forward.1} parent=5 // pred_check
        _
      $region10: #{cpah_forward.1} parent=5 // pred_check_branch
        %271 = sbr.rel (%p268) target = $region12
      $region11: #{cpah_forward.1} parent=5 // pred_region
        %s272 = ssub.s32 %s24, 1
      $region12: #{cpah_forward.1} parent=5 // pred_fallthru
        _
      %p273 = scmp.lt.s32.totalorder %s24, 2
      // Predicated region
      $region13: #{cpah_forward.1} parent=5 // pred_check
        %p274 = pneg %p273
      $region14: #{cpah_forward.1} parent=5 // pred_check_branch
        %276 = sbr.rel (%p274) target = $region16
      $region15: #{cpah_forward.1} parent=5 // pred_region
        // Predicated region
        $region17: #{cpah_forward.1} parent=15 // pred_check
          %p277 = pneg %p44
        $region18: #{cpah_forward.1} parent=15 // pred_check_branch
          %279 = sbr.rel (%p277) target = $region20
        $region19: #{cpah_forward.1} parent=15 // pred_region
          %p280 = scmp.lt.s32.totalorder %s24, 1
          %s281 = scalar_select %p280, %s24, 1
          %s282 = smul.addr %s281, 8
          %s283 = scalar_lea.vmem %s0, %s282
        $region20: #{cpah_forward.1} parent=15 // pred_fallthru
          _
        // Predicated region
        $region21: #{cpah_forward.1} parent=15 // pred_check
          %p284 = pneg %p70
        $region22: #{cpah_forward.1} parent=15 // pred_check_branch
          %286 = sbr.rel (%p284) target = $region24
        $region23: #{cpah_forward.1} parent=15 // pred_region
          %s287 = sand.u32 %s60, 1
          %s288 = scalar_lea.sflag [#allocation3], %s287
          %s289 = sand.u32 %s60, 1
          %s290 = smul.addr %s289, 256
          %s291 = scalar_lea.vmem [#allocation2], %s290
          %293 = vsyncadd %s288, 0
          %s294 = smul.addr %s24, 64
          %s295 = smul.addr %s294, 4
          %s296 = scalar_lea.hbm %s1, %s295
          %s297 = sshll.u32 %s296, 4
          %s298 = int_to_ptr.hbm [resolvable:$true] %s297
          %s299 = sshll.u32 %s291, 4
          %s300 = int_to_ptr.vmem [resolvable:$true] %s299
          %305 = dma.hbm_to_vmem [thread:$0]  %s298, 4096, %s300, %s288, 256, 256, 16
        $region24: #{cpah_forward.1} parent=15 // pred_fallthru
          _
        // Predicated region
        $region25: #{cpah_forward.1} parent=15 // pred_check
          %p306 = pneg %p96
        $region26: #{cpah_forward.1} parent=15 // pred_check_branch
          %308 = sbr.rel (%p306) target = $region28
        $region27: #{cpah_forward.1} parent=15 // pred_region
          %s309 = sand.u32 %s24, 1
          %s310 = scalar_lea.sflag [#allocation5], %s309
          %s311 = sand.u32 %s86, 1
          %s312 = smul.addr %s311, 1024
          %s313 = scalar_lea.vmem [#allocation4], %s312
          %315 = vsyncadd %s310, 0
          %s316 = smul.addr %s24, 256
          %s317 = smul.addr %s316, 4
          %s318 = scalar_lea.hbm %s2, %s317
          %s319 = sshll.u32 %s318, 4
          %s320 = int_to_ptr.hbm [resolvable:$true] %s319
          %s321 = sshll.u32 %s313, 4
          %s322 = int_to_ptr.vmem [resolvable:$true] %s321
          %327 = dma.hbm_to_vmem [thread:$0]  %s320, 16384, %s322, %s310, 256, 256, 16
        $region28: #{cpah_forward.1} parent=15 // pred_fallthru
          _
        // Predicated region
        $region29: #{cpah_forward.1} parent=15 // pred_check
          %p328 = pneg %p122
        $region30: #{cpah_forward.1} parent=15 // pred_check_branch
          %330 = sbr.rel (%p328) target = $region32
        $region31: #{cpah_forward.1} parent=15 // pred_region
          %s331 = sand.u32 %s24, 1
          %s332 = scalar_lea.sflag [#allocation5], %s331
          %s333 = sand.u32 %s112, 1
          %s334 = smul.addr %s333, 1024
          %s335 = scalar_lea.vmem [#allocation6], %s334
          %337 = vsyncadd %s332, 0
          %s338 = smul.addr %s24, 256
          %s339 = smul.addr %s338, 4
          %s340 = scalar_lea.hbm %s3, %s339
          %s341 = sshll.u32 %s340, 4
          %s342 = int_to_ptr.hbm [resolvable:$true] %s341
          %s343 = sshll.u32 %s335, 4
          %s344 = int_to_ptr.vmem [resolvable:$true] %s343
          %349 = dma.hbm_to_vmem [thread:$0]  %s342, 16384, %s344, %s332, 256, 256, 16
        $region32: #{cpah_forward.1} parent=15 // pred_fallthru
          _
        // Predicated region
        $region33: #{cpah_forward.1} parent=15 // pred_check
          %p350 = pneg %p148
        $region34: #{cpah_forward.1} parent=15 // pred_check_branch
          %352 = sbr.rel (%p350) target = $region36
        $region35: #{cpah_forward.1} parent=15 // pred_region
          %s353 = sand.u32 %s138, 1
          %s354 = scalar_lea.sflag [#allocation8], %s353
          %s355 = sand.u32 %s138, 1
          %s356 = smul.addr %s355, 256
          %s357 = scalar_lea.vmem [#allocation7], %s356
          %359 = vsyncadd %s354, 0
          %s360 = smul.addr %s24, 64
          %s361 = smul.addr %s360, 4
          %s362 = scalar_lea.hbm %s4, %s361
          %s363 = sshll.u32 %s362, 4
          %s364 = int_to_ptr.hbm [resolvable:$true] %s363
          %s365 = sshll.u32 %s357, 4
          %s366 = int_to_ptr.vmem [resolvable:$true] %s365
          %371 = dma.hbm_to_vmem [thread:$0]  %s364, 4096, %s366, %s354, 64, 64, 4
        $region36: #{cpah_forward.1} parent=15 // pred_fallthru
          _
        // Predicated region
        $region37: #{cpah_forward.1} parent=15 // pred_check
          %p372 = pneg %p174
        $region38: #{cpah_forward.1} parent=15 // pred_check_branch
          %374 = sbr.rel (%p372) target = $region40
        $region39: #{cpah_forward.1} parent=15 // pred_region
          %p375 = scmp.lt.s32.totalorder %s24, 1
          %s376 = scalar_select %p375, %s24, 1
          %s377 = smul.addr %s376, 4
          %s378 = smul.addr %s377, 8
          %s379 = scalar_lea.vmem %s5, %s378
        $region40: #{cpah_forward.1} parent=15 // pred_fallthru
          _
      $region16: #{cpah_forward.1} parent=5 // pred_fallthru
        _
      %p380 = scmp.le.s32.totalorder 1, %s24
      %p381 = scmp.lt.s32.totalorder %s24, 3
      %p382 = pnand %p380, %p381
      %p383 = pneg %p382
      // Predicated region
      $region41: #{cpah_forward.1} parent=5 // pred_check
        _
      $region42: #{cpah_forward.1} parent=5 // pred_check_branch
        %385 = sbr.rel (%p382) target = $region44
      $region43: #{cpah_forward.1} parent=5 // pred_region
        %s386 = ssub.s32 %s24, 1
        %s387 = sand.u32 %s63, 1
        %s388 = scalar_lea.sflag [#allocation3], %s387
        %s389 = sand.u32 %s63, 1
        %s390 = smul.addr %s389, 256
        %s391 = scalar_lea.vmem [#allocation2], %s390
        // Predicated region
        $region45: #{cpah_forward.1} parent=43 // pred_check
          %p392 = pneg %p76
        $region46: #{cpah_forward.1} parent=43 // pred_check_branch
          %394 = sbr.rel (%p392) target = $region48
        $region47: #{cpah_forward.1} parent=43 // pred_region
          %396 = dma.done %s388, 4096
        $region48: #{cpah_forward.1} parent=43 // pred_fallthru
          _
        %s397 = sand.u32 %s29, 1
        %s398 = scalar_lea.sflag [#allocation5], %s397
        %s399 = sand.u32 %s89, 1
        %s400 = smul.addr %s399, 1024
        %s401 = scalar_lea.vmem [#allocation4], %s400
        // Predicated region
        $region49: #{cpah_forward.1} parent=43 // pred_check
          %p402 = pneg %p102
        $region50: #{cpah_forward.1} parent=43 // pred_check_branch
          %404 = sbr.rel (%p402) target = $region52
        $region51: #{cpah_forward.1} parent=43 // pred_region
          %406 = dma.done %s398, 16384
        $region52: #{cpah_forward.1} parent=43 // pred_fallthru
          _
        %s407 = sand.u32 %s29, 1
        %s408 = scalar_lea.sflag [#allocation5], %s407
        %s409 = sand.u32 %s115, 1
        %s410 = smul.addr %s409, 1024
        %s411 = scalar_lea.vmem [#allocation6], %s410
        // Predicated region
        $region53: #{cpah_forward.1} parent=43 // pred_check
          %p412 = pneg %p128
        $region54: #{cpah_forward.1} parent=43 // pred_check_branch
          %414 = sbr.rel (%p412) target = $region56
        $region55: #{cpah_forward.1} parent=43 // pred_region
          %416 = dma.done %s408, 16384
        $region56: #{cpah_forward.1} parent=43 // pred_fallthru
          _
        %s417 = sand.u32 %s141, 1
        %s418 = scalar_lea.sflag [#allocation8], %s417
        %s419 = sand.u32 %s141, 1
        %s420 = smul.addr %s419, 256
        %s421 = scalar_lea.vmem [#allocation7], %s420
        // Predicated region
        $region57: #{cpah_forward.1} parent=43 // pred_check
          %p422 = pneg %p154
        $region58: #{cpah_forward.1} parent=43 // pred_check_branch
          %424 = sbr.rel (%p422) target = $region60
        $region59: #{cpah_forward.1} parent=43 // pred_region
          %426 = dma.done %s418, 4096
        $region60: #{cpah_forward.1} parent=43 // pred_fallthru
          _
        %p427 = scmp.lt.s32.totalorder %s29, 1
        %s428 = scalar_select %p427, %s29, 1
        %s429 = smul.addr %s428, 8
        %s430 = scalar_lea.vmem %s0, %s429
        %p431 = pneg %p50
        %p432 = pneg %p47
        %s433 = sand.u32 %s63, 1
        %s434 = scalar_lea.sflag [#allocation3], %s433
        %s435 = sand.u32 %s63, 1
        %s436 = smul.addr %s435, 256
        %s437 = scalar_lea.vmem [#allocation2], %s436
        %p438 = pneg %p76
        %p439 = pneg %p73
        %s440 = sand.u32 %s29, 1
        %s441 = scalar_lea.sflag [#allocation5], %s440
        %s442 = sand.u32 %s89, 1
        %s443 = smul.addr %s442, 1024
        %s444 = scalar_lea.vmem [#allocation4], %s443
        %p445 = pneg %p102
        %p446 = pneg %p99
        %s447 = sand.u32 %s29, 1
        %s448 = scalar_lea.sflag [#allocation5], %s447
        %s449 = sand.u32 %s115, 1
        %s450 = smul.addr %s449, 1024
        %s451 = scalar_lea.vmem [#allocation6], %s450
        %p452 = pneg %p128
        %p453 = pneg %p125
        %s454 = sand.u32 %s141, 1
        %s455 = scalar_lea.sflag [#allocation8], %s454
        %s456 = sand.u32 %s141, 1
        %s457 = smul.addr %s456, 256
        %s458 = scalar_lea.vmem [#allocation7], %s457
        %p459 = pneg %p154
        %p460 = pneg %p151
        %p461 = scmp.lt.s32.totalorder %s29, 1
        %s462 = scalar_select %p461, %s29, 1
        %s463 = smul.addr %s462, 4
        %s464 = smul.addr %s463, 8
        %s465 = scalar_lea.vmem %s5, %s464
        %p466 = pneg %p180
        %p467 = pneg %p177
        %p468 = pneg %p206
        %p469 = pneg %p203
        %p470 = scmp.lt.s32.totalorder %s29, 1
        %s471 = scalar_select %p470, %s29, 1
        %s472 = smul.addr %s471, 8
        %s473 = scalar_lea.vmem %s6, %s472
        %p474 = pneg %p232
        %p475 = pneg %p229
        %p476 = scmp.lt.s32.totalorder %s29, 1
        %s477 = scalar_select %p476, %s29, 1
        %s478 = smul.addr %s477, 4
        %s479 = smul.addr %s478, 8
        %s480 = scalar_lea.vmem %s7, %s479
        %p481 = pneg %p258
        %p482 = pneg %p255
        %p483 = scmp.lt.s32.totalorder %s29, 1
        %s484 = scalar_select %p483, %s29, 1
        %s485 = smul.addr %s484, 4
        %s486 = smul.addr %s485, 8
        %s487 = scalar_lea.vmem %s8, %s486
        %p488 = scmp.lt.s32.totalorder %s29, 1
        %s489 = scalar_select %p488, %s29, 1
        %s490 = smul.addr %s489, 8
        %s491 = scalar_lea.vmem %s0, %s490
        %p492 = scmp.lt.s32.totalorder %s29, 1
        %s493 = scalar_select %p492, %s29, 1
        %s494 = smul.addr %s493, 4
        %s495 = smul.addr %s494, 8
        %s496 = scalar_lea.vmem %s5, %s495
        %p497 = scmp.lt.s32.totalorder %s29, 1
        %s498 = scalar_select %p497, %s29, 1
        %s499 = smul.addr %s498, 8
        %s500 = scalar_lea.vmem %s6, %s499
        %p501 = scmp.lt.s32.totalorder %s29, 1
        %s502 = scalar_select %p501, %s29, 1
        %s503 = smul.addr %s502, 4
        %s504 = smul.addr %s503, 8
        %s505 = scalar_lea.vmem %s7, %s504
        %p506 = scmp.lt.s32.totalorder %s29, 1
        %s507 = scalar_select %p506, %s29, 1
        %s508 = smul.addr %s507, 4
        %s509 = smul.addr %s508, 8
        %s510 = scalar_lea.vmem %s8, %s509
        %v511 = vld [vmem:[%s491] sm:$0xff]
        %v512 = vpack.c.bf16 %v511, %v511
        %v513 = vld [vmem:[%s391] sm:$0xff]
        %v514 = vld [vmem:[%s391 + $0x8] sm:$0xff]
        %v515 = vld [vmem:[%s391 + $0x10] sm:$0xff]
        %v516 = vld [vmem:[%s391 + $0x18] sm:$0xff]
        %v517 = vld [vmem:[%s391 + $0x20] sm:$0xff]
        %v518 = vld [vmem:[%s391 + $0x28] sm:$0xff]
        %v519 = vld [vmem:[%s391 + $0x30] sm:$0xff]
        %v520 = vld [vmem:[%s391 + $0x38] sm:$0xff]
        %v521 = vld [vmem:[%s391 + $0x40] sm:$0xff]
        %v522 = vld [vmem:[%s391 + $0x48] sm:$0xff]
        %v523 = vld [vmem:[%s391 + $0x50] sm:$0xff]
        %v524 = vld [vmem:[%s391 + $0x58] sm:$0xff]
        %v525 = vld [vmem:[%s391 + $0x60] sm:$0xff]
        %v526 = vld [vmem:[%s391 + $0x68] sm:$0xff]
        %v527 = vld [vmem:[%s391 + $0x70] sm:$0xff]
        %v528 = vld [vmem:[%s391 + $0x78] sm:$0xff]
        %v529 = vld [vmem:[%s391 + $0x80] sm:$0xff]
        %v530 = vld [vmem:[%s391 + $0x88] sm:$0xff]
        %v531 = vld [vmem:[%s391 + $0x90] sm:$0xff]
        %v532 = vld [vmem:[%s391 + $0x98] sm:$0xff]
        %v533 = vld [vmem:[%s391 + $0xa0] sm:$0xff]
        %v534 = vld [vmem:[%s391 + $0xa8] sm:$0xff]
        %v535 = vld [vmem:[%s391 + $0xb0] sm:$0xff]
        %v536 = vld [vmem:[%s391 + $0xb8] sm:$0xff]
        %v537 = vld [vmem:[%s391 + $0xc0] sm:$0xff]
        %v538 = vld [vmem:[%s391 + $0xc8] sm:$0xff]
        %v539 = vld [vmem:[%s391 + $0xd0] sm:$0xff]
        %v540 = vld [vmem:[%s391 + $0xd8] sm:$0xff]
        %v541 = vld [vmem:[%s391 + $0xe0] sm:$0xff]
        %v542 = vld [vmem:[%s391 + $0xe8] sm:$0xff]
        %v543 = vld [vmem:[%s391 + $0xf0] sm:$0xff]
        %v544 = vld [vmem:[%s391 + $0xf8] sm:$0xff]
        %v577 = vunpack.c.l.b16 %v513
        %v578 = vunpack.c.h.b16 %v513
        %v579 = vunpack.c.l.b16 %v514
        %v580 = vunpack.c.h.b16 %v514
        %v581 = vunpack.c.l.b16 %v515
        %v582 = vunpack.c.h.b16 %v515
        %v583 = vunpack.c.l.b16 %v516
        %v584 = vunpack.c.h.b16 %v516
        %v585 = vunpack.c.l.b16 %v517
        %v586 = vunpack.c.h.b16 %v517
        %v587 = vunpack.c.l.b16 %v518
        %v588 = vunpack.c.h.b16 %v518
        %v589 = vunpack.c.l.b16 %v519
        %v590 = vunpack.c.h.b16 %v519
        %v591 = vunpack.c.l.b16 %v520
        %v592 = vunpack.c.h.b16 %v520
        %v593 = vunpack.c.l.b16 %v521
        %v594 = vunpack.c.h.b16 %v521
        %v595 = vunpack.c.l.b16 %v522
        %v596 = vunpack.c.h.b16 %v522
        %v597 = vunpack.c.l.b16 %v523
        %v598 = vunpack.c.h.b16 %v523
        %v599 = vunpack.c.l.b16 %v524
        %v600 = vunpack.c.h.b16 %v524
        %v601 = vunpack.c.l.b16 %v525
        %v602 = vunpack.c.h.b16 %v525
        %v603 = vunpack.c.l.b16 %v526
        %v604 = vunpack.c.h.b16 %v526
        %v605 = vunpack.c.l.b16 %v527
        %v606 = vunpack.c.h.b16 %v527
        %v607 = vunpack.c.l.b16 %v528
        %v608 = vunpack.c.h.b16 %v528
        %v609 = vunpack.c.l.b16 %v529
        %v610 = vunpack.c.h.b16 %v529
        %v611 = vunpack.c.l.b16 %v530
        %v612 = vunpack.c.h.b16 %v530
        %v613 = vunpack.c.l.b16 %v531
        %v614 = vunpack.c.h.b16 %v531
        %v615 = vunpack.c.l.b16 %v532
        %v616 = vunpack.c.h.b16 %v532
        %v617 = vunpack.c.l.b16 %v533
        %v618 = vunpack.c.h.b16 %v533
        %v619 = vunpack.c.l.b16 %v534
        %v620 = vunpack.c.h.b16 %v534
        %v621 = vunpack.c.l.b16 %v535
        %v622 = vunpack.c.h.b16 %v535
        %v623 = vunpack.c.l.b16 %v536
        %v624 = vunpack.c.h.b16 %v536
        %v625 = vunpack.c.l.b16 %v537
        %v626 = vunpack.c.h.b16 %v537
        %v627 = vunpack.c.l.b16 %v538
        %v628 = vunpack.c.h.b16 %v538
        %v629 = vunpack.c.l.b16 %v539
        %v630 = vunpack.c.h.b16 %v539
        %v631 = vunpack.c.l.b16 %v540
        %v632 = vunpack.c.h.b16 %v540
        %v633 = vunpack.c.l.b16 %v541
        %v634 = vunpack.c.h.b16 %v541
        %v635 = vunpack.c.l.b16 %v542
        %v636 = vunpack.c.h.b16 %v542
        %v637 = vunpack.c.l.b16 %v543
        %v638 = vunpack.c.h.b16 %v543
        %v639 = vunpack.c.l.b16 %v544
        %v640 = vunpack.c.h.b16 %v544
        %v641 = vpack.c.b16 %v581, %v577
        %v642 = vpack.c.b16 %v582, %v578
        %v643 = vpack.c.b16 %v583, %v579
        %v644 = vpack.c.b16 %v584, %v580
        %v645 = vpack.c.b16 %v589, %v585
        %v646 = vpack.c.b16 %v590, %v586
        %v647 = vpack.c.b16 %v591, %v587
        %v648 = vpack.c.b16 %v592, %v588
        %v649 = vpack.c.b16 %v597, %v593
        %v650 = vpack.c.b16 %v598, %v594
        %v651 = vpack.c.b16 %v599, %v595
        %v652 = vpack.c.b16 %v600, %v596
        %v653 = vpack.c.b16 %v605, %v601
        %v654 = vpack.c.b16 %v606, %v602
        %v655 = vpack.c.b16 %v607, %v603
        %v656 = vpack.c.b16 %v608, %v604
        %v657 = vpack.c.b16 %v613, %v609
        %v658 = vpack.c.b16 %v614, %v610
        %v659 = vpack.c.b16 %v615, %v611
        %v660 = vpack.c.b16 %v616, %v612
        %v661 = vpack.c.b16 %v621, %v617
        %v662 = vpack.c.b16 %v622, %v618
        %v663 = vpack.c.b16 %v623, %v619
        %v664 = vpack.c.b16 %v624, %v620
        %v665 = vpack.c.b16 %v629, %v625
        %v666 = vpack.c.b16 %v630, %v626
        %v667 = vpack.c.b16 %v631, %v627
        %v668 = vpack.c.b16 %v632, %v628
        %v669 = vpack.c.b16 %v637, %v633
        %v670 = vpack.c.b16 %v638, %v634
        %v671 = vpack.c.b16 %v639, %v635
        %v672 = vpack.c.b16 %v640, %v636
        %705 = vmatpush.bf16.msra.mxu0 %v669
        %706 = vmatpush.bf16.msra.mxu0 %v665
        %707 = vmatpush.bf16.msra.mxu0 %v661
        %708 = vmatpush.bf16.msra.mxu0 %v657
        %709 = vmatpush.bf16.msra.mxu0 %v653
        %710 = vmatpush.bf16.msra.mxu0 %v649
        %711 = vmatpush.bf16.msra.mxu0 %v645
        %712 = vmatpush.bf16.msra.mxu0 %v641
        %713 = vmatmul.bf16.gmra.mxu0 %v512
        %v714 = vpop.f32.mrf.mxu0
        %v715 = vadd.f32 0.0, %v714
        %v716 = vpop.f32.mrf.mxu0
        %717 = vdwg.mxu0
        %718 = vmatpush.bf16.msra.mxu0 %v670
        %719 = vmatpush.bf16.msra.mxu0 %v666
        %720 = vmatpush.bf16.msra.mxu0 %v662
        %721 = vmatpush.bf16.msra.mxu0 %v658
        %722 = vmatpush.bf16.msra.mxu0 %v654
        %723 = vmatpush.bf16.msra.mxu0 %v650
        %724 = vmatpush.bf16.msra.mxu0 %v646
        %725 = vmatpush.bf16.msra.mxu0 %v642
        %726 = vmatmul.bf16.gmra.mxu0 %v512
        %v727 = vpop.f32.mrf.mxu0
        %v728 = vadd.f32 0.0, %v727
        %v729 = vpop.f32.mrf.mxu0
        %730 = vdwg.mxu0
        %731 = vmatpush.bf16.msra.mxu0 %v671
        %732 = vmatpush.bf16.msra.mxu0 %v667
        %733 = vmatpush.bf16.msra.mxu0 %v663
        %734 = vmatpush.bf16.msra.mxu0 %v659
        %735 = vmatpush.bf16.msra.mxu0 %v655
        %736 = vmatpush.bf16.msra.mxu0 %v651
        %737 = vmatpush.bf16.msra.mxu0 %v647
        %738 = vmatpush.bf16.msra.mxu0 %v643
        %739 = vmatmul.bf16.gmra.mxu0 %v512
        %v740 = vpop.f32.mrf.mxu0
        %v741 = vadd.f32 0.0, %v740
        %v742 = vpop.f32.mrf.mxu0
        %743 = vdwg.mxu0
        %744 = vmatpush.bf16.msra.mxu0 %v672
        %745 = vmatpush.bf16.msra.mxu0 %v668
        %746 = vmatpush.bf16.msra.mxu0 %v664
        %747 = vmatpush.bf16.msra.mxu0 %v660
        %748 = vmatpush.bf16.msra.mxu0 %v656
        %749 = vmatpush.bf16.msra.mxu0 %v652
        %750 = vmatpush.bf16.msra.mxu0 %v648
        %751 = vmatpush.bf16.msra.mxu0 %v644
        %752 = vmatmul.bf16.gmra.mxu0 %v512
        %v753 = vpop.f32.mrf.mxu0
        %v754 = vadd.f32 0.0, %v753
        %v755 = vpop.f32.mrf.mxu0
        %756 = vdwg.mxu0
        %v757 = vrot.slane %v715, 4
        %v758 = vadd.f32 %v715, %v757
        %v759 = vrot.slane %v758, 2
        %v760 = vadd.f32 %v758, %v759
        %v761 = vrot.slane %v760, 1
        %v762 = vadd.f32 %v760, %v761
        %v763 = vrot.slane %v728, 4
        %v764 = vadd.f32 %v728, %v763
        %v765 = vrot.slane %v764, 2
        %v766 = vadd.f32 %v764, %v765
        %v767 = vrot.slane %v766, 1
        %v768 = vadd.f32 %v766, %v767
        %v769 = vrot.slane %v741, 4
        %v770 = vadd.f32 %v741, %v769
        %v771 = vrot.slane %v770, 2
        %v772 = vadd.f32 %v770, %v771
        %v773 = vrot.slane %v772, 1
        %v774 = vadd.f32 %v772, %v773
        %v775 = vrot.slane %v754, 4
        %v776 = vadd.f32 %v754, %v775
        %v777 = vrot.slane %v776, 2
        %v778 = vadd.f32 %v776, %v777
        %v779 = vrot.slane %v778, 1
        %v780 = vadd.f32 %v778, %v779
        %v781 = vrcp.pop 8.0
        %v782 = vmul.f32 8.0, %v781
        %v783 = vsub.f32 1.0, %v782
        %v784 = vmul.f32 %v781, %v783
        %v785 = vadd.f32 %v781, %v784
        %vm786 = vweird.f32 %v781
        %v787 = vsel %vm786, %v781, %v785
        %v788 = vmul.f32 %v762, %v787
        %v789 = vmul.f32 %v768, %v787
        %v790 = vmul.f32 %v774, %v787
        %v791 = vmul.f32 %v780, %v787
        %v792 = vsub.f32 %v715, %v788
        %v793 = vsub.f32 %v728, %v789
        %v794 = vsub.f32 %v741, %v790
        %v795 = vsub.f32 %v754, %v791
        %v796 = vmul.f32 %v792, %v792
        %v797 = vmul.f32 %v793, %v793
        %v798 = vmul.f32 %v794, %v794
        %v799 = vmul.f32 %v795, %v795
        %v800 = vrot.slane %v796, 4
        %v801 = vadd.f32 %v796, %v800
        %v802 = vrot.slane %v801, 2
        %v803 = vadd.f32 %v801, %v802
        %v804 = vrot.slane %v803, 1
        %v805 = vadd.f32 %v803, %v804
        %v806 = vrot.slane %v797, 4
        %v807 = vadd.f32 %v797, %v806
        %v808 = vrot.slane %v807, 2
        %v809 = vadd.f32 %v807, %v808
        %v810 = vrot.slane %v809, 1
        %v811 = vadd.f32 %v809, %v810
        %v812 = vrot.slane %v798, 4
        %v813 = vadd.f32 %v798, %v812
        %v814 = vrot.slane %v813, 2
        %v815 = vadd.f32 %v813, %v814
        %v816 = vrot.slane %v815, 1
        %v817 = vadd.f32 %v815, %v816
        %v818 = vrot.slane %v799, 4
        %v819 = vadd.f32 %v799, %v818
        %v820 = vrot.slane %v819, 2
        %v821 = vadd.f32 %v819, %v820
        %v822 = vrot.slane %v821, 1
        %v823 = vadd.f32 %v821, %v822
        %v824 = vmul.f32 %v805, %v787
        %v825 = vmul.f32 %v811, %v787
        %v826 = vmul.f32 %v817, %v787
        %v827 = vmul.f32 %v823, %v787
        %v828 = vld [vmem:[%s496] ss:$8 sm:$0xf]
        %v829 = vadd.f32 %v824, 1e-05
        %v830 = vadd.f32 %v825, 1e-05
        %v831 = vadd.f32 %v826, 1e-05
        %v832 = vadd.f32 %v827, 1e-05
        %v833 = vrsqrt.pop %v829
        %v834 = vmul.f32 %v833, %v829
        %v835 = vmul.f32 %v834, %v833
        %v836 = vmul.f32 0.5, %v835
        %v837 = vsub.f32 1.5, %v836
        %v838 = vmul.f32 %v833, %v837
        %vm839 = vweird.f32 %v829
        %vm840 = vweird.f32 %v833
        %vm841 = vmor %vm839, %vm840
        %v842 = vsel %vm841, %v833, %v838
        %v843 = vrsqrt.pop %v830
        %v844 = vmul.f32 %v843, %v830
        %v845 = vmul.f32 %v844, %v843
        %v846 = vmul.f32 0.5, %v845
        %v847 = vsub.f32 1.5, %v846
        %v848 = vmul.f32 %v843, %v847
        %vm849 = vweird.f32 %v830
        %vm850 = vweird.f32 %v843
        %vm851 = vmor %vm849, %vm850
        %v852 = vsel %vm851, %v843, %v848
        %v853 = vrsqrt.pop %v831
        %v854 = vmul.f32 %v853, %v831
        %v855 = vmul.f32 %v854, %v853
        %v856 = vmul.f32 0.5, %v855
        %v857 = vsub.f32 1.5, %v856
        %v858 = vmul.f32 %v853, %v857
        %vm859 = vweird.f32 %v831
        %vm860 = vweird.f32 %v853
        %vm861 = vmor %vm859, %vm860
        %v862 = vsel %vm861, %v853, %v858
        %v863 = vrsqrt.pop %v832
        %v864 = vmul.f32 %v863, %v832
        %v865 = vmul.f32 %v864, %v863
        %v866 = vmul.f32 0.5, %v865
        %v867 = vsub.f32 1.5, %v866
        %v868 = vmul.f32 %v863, %v867
        %vm869 = vweird.f32 %v832
        %vm870 = vweird.f32 %v863
        %vm871 = vmor %vm869, %vm870
        %v872 = vsel %vm871, %v863, %v868
        %v877 = vrot.slane %v852, 7
        %v878 = vrot.slane %v862, 6
        %v879 = vrot.slane %v872, 5
        %vm880 = vcmask 1040384
        %v881 = vsel %vm880, %v842, %v877
        %vm882 = vcmask 1042434
        %v883 = vsel %vm882, %v878, %v879
        %vm884 = vcmask 1041408
        %v885 = vsel %vm884, %v881, %v883
        %v887 = vmul.f32 %v828, %v885
        %v889 = vperm.slane %v887, 0
        %v890 = vperm.slane %v887, 1
        %v891 = vperm.slane %v887, 2
        %v892 = vperm.slane %v887, 3
        %v897 = vmul.f32 %v792, %v889
        %v898 = vmul.f32 %v793, %v890
        %v899 = vmul.f32 %v794, %v891
        %v900 = vmul.f32 %v795, %v892
        %s901 = scalar_lea.vmem %s496, 1
        %v902 = vld [vmem:[%s901] ss:$8 sm:$0xf]
        %v904 = vperm.slane %v902, 0
        %v905 = vperm.slane %v902, 1
        %v906 = vperm.slane %v902, 2
        %v907 = vperm.slane %v902, 3
        %v912 = vadd.f32 %v897, %v904
        %v913 = vadd.f32 %v898, %v905
        %v914 = vadd.f32 %v899, %v906
        %v915 = vadd.f32 %v900, %v907
        %v916 = vmax.f32 %v912, 0.0
        %v917 = vmax.f32 %v913, 0.0
        %v918 = vmax.f32 %v914, 0.0
        %v919 = vmax.f32 %v915, 0.0
        %v920 = vpack.c.bf16 %v916, %v916
        %v921 = vpack.c.bf16 %v917, %v917
        %v922 = vpack.c.bf16 %v918, %v918
        %v923 = vpack.c.bf16 %v919, %v919
        %v924 = vld [vmem:[%s401] sm:$0xff]
        %v925 = vld [vmem:[%s401 + $0x8] sm:$0xff]
        %v926 = vld [vmem:[%s401 + $0x10] sm:$0xff]
        %v927 = vld [vmem:[%s401 + $0x18] sm:$0xff]
        %v928 = vld [vmem:[%s401 + $0x20] sm:$0xff]
        %v929 = vld [vmem:[%s401 + $0x28] sm:$0xff]
        %v930 = vld [vmem:[%s401 + $0x30] sm:$0xff]
        %v931 = vld [vmem:[%s401 + $0x38] sm:$0xff]
        %v932 = vld [vmem:[%s401 + $0x40] sm:$0xff]
        %v933 = vld [vmem:[%s401 + $0x48] sm:$0xff]
        %v934 = vld [vmem:[%s401 + $0x50] sm:$0xff]
        %v935 = vld [vmem:[%s401 + $0x58] sm:$0xff]
        %v936 = vld [vmem:[%s401 + $0x60] sm:$0xff]
        %v937 = vld [vmem:[%s401 + $0x68] sm:$0xff]
        %v938 = vld [vmem:[%s401 + $0x70] sm:$0xff]
        %v939 = vld [vmem:[%s401 + $0x78] sm:$0xff]
        %v940 = vld [vmem:[%s401 + $0x80] sm:$0xff]
        %v941 = vld [vmem:[%s401 + $0x88] sm:$0xff]
        %v942 = vld [vmem:[%s401 + $0x90] sm:$0xff]
        %v943 = vld [vmem:[%s401 + $0x98] sm:$0xff]
        %v944 = vld [vmem:[%s401 + $0xa0] sm:$0xff]
        %v945 = vld [vmem:[%s401 + $0xa8] sm:$0xff]
        %v946 = vld [vmem:[%s401 + $0xb0] sm:$0xff]
        %v947 = vld [vmem:[%s401 + $0xb8] sm:$0xff]
        %v948 = vld [vmem:[%s401 + $0xc0] sm:$0xff]
        %v949 = vld [vmem:[%s401 + $0xc8] sm:$0xff]
        %v950 = vld [vmem:[%s401 + $0xd0] sm:$0xff]
        %v951 = vld [vmem:[%s401 + $0xd8] sm:$0xff]
        %v952 = vld [vmem:[%s401 + $0xe0] sm:$0xff]
        %v953 = vld [vmem:[%s401 + $0xe8] sm:$0xff]
        %v954 = vld [vmem:[%s401 + $0xf0] sm:$0xff]
        %v955 = vld [vmem:[%s401 + $0xf8] sm:$0xff]
        %v956 = vld [vmem:[%s401 + $0x100] sm:$0xff]
        %v957 = vld [vmem:[%s401 + $0x108] sm:$0xff]
        %v958 = vld [vmem:[%s401 + $0x110] sm:$0xff]
        %v959 = vld [vmem:[%s401 + $0x118] sm:$0xff]
        %v960 = vld [vmem:[%s401 + $0x120] sm:$0xff]
        %v961 = vld [vmem:[%s401 + $0x128] sm:$0xff]
        %v962 = vld [vmem:[%s401 + $0x130] sm:$0xff]
        %v963 = vld [vmem:[%s401 + $0x138] sm:$0xff]
        %v964 = vld [vmem:[%s401 + $0x140] sm:$0xff]
        %v965 = vld [vmem:[%s401 + $0x148] sm:$0xff]
        %v966 = vld [vmem:[%s401 + $0x150] sm:$0xff]
        %v967 = vld [vmem:[%s401 + $0x158] sm:$0xff]
        %v968 = vld [vmem:[%s401 + $0x160] sm:$0xff]
        %v969 = vld [vmem:[%s401 + $0x168] sm:$0xff]
        %v970 = vld [vmem:[%s401 + $0x170] sm:$0xff]
        %v971 = vld [vmem:[%s401 + $0x178] sm:$0xff]
        %v972 = vld [vmem:[%s401 + $0x180] sm:$0xff]
        %v973 = vld [vmem:[%s401 + $0x188] sm:$0xff]
        %v974 = vld [vmem:[%s401 + $0x190] sm:$0xff]
        %v975 = vld [vmem:[%s401 + $0x198] sm:$0xff]
        %v976 = vld [vmem:[%s401 + $0x1a0] sm:$0xff]
        %v977 = vld [vmem:[%s401 + $0x1a8] sm:$0xff]
        %v978 = vld [vmem:[%s401 + $0x1b0] sm:$0xff]
        %v979 = vld [vmem:[%s401 + $0x1b8] sm:$0xff]
        %v980 = vld [vmem:[%s401 + $0x1c0] sm:$0xff]
        %v981 = vld [vmem:[%s401 + $0x1c8] sm:$0xff]
        %v982 = vld [vmem:[%s401 + $0x1d0] sm:$0xff]
        %v983 = vld [vmem:[%s401 + $0x1d8] sm:$0xff]
        %v984 = vld [vmem:[%s401 + $0x1e0] sm:$0xff]
        %v985 = vld [vmem:[%s401 + $0x1e8] sm:$0xff]
        %v986 = vld [vmem:[%s401 + $0x1f0] sm:$0xff]
        %v987 = vld [vmem:[%s401 + $0x1f8] sm:$0xff]
        %v988 = vld [vmem:[%s401 + $0x200] sm:$0xff]
        %v989 = vld [vmem:[%s401 + $0x208] sm:$0xff]
        %v990 = vld [vmem:[%s401 + $0x210] sm:$0xff]
        %v991 = vld [vmem:[%s401 + $0x218] sm:$0xff]
        %v992 = vld [vmem:[%s401 + $0x220] sm:$0xff]
        %v993 = vld [vmem:[%s401 + $0x228] sm:$0xff]
        %v994 = vld [vmem:[%s401 + $0x230] sm:$0xff]
        %v995 = vld [vmem:[%s401 + $0x238] sm:$0xff]
        %v996 = vld [vmem:[%s401 + $0x240] sm:$0xff]
        %v997 = vld [vmem:[%s401 + $0x248] sm:$0xff]
        %v998 = vld [vmem:[%s401 + $0x250] sm:$0xff]
        %v999 = vld [vmem:[%s401 + $0x258] sm:$0xff]
        %v1000 = vld [vmem:[%s401 + $0x260] sm:$0xff]
        %v1001 = vld [vmem:[%s401 + $0x268] sm:$0xff]
        %v1002 = vld [vmem:[%s401 + $0x270] sm:$0xff]
        %v1003 = vld [vmem:[%s401 + $0x278] sm:$0xff]
        %v1004 = vld [vmem:[%s401 + $0x280] sm:$0xff]
        %v1005 = vld [vmem:[%s401 + $0x288] sm:$0xff]
        %v1006 = vld [vmem:[%s401 + $0x290] sm:$0xff]
        %v1007 = vld [vmem:[%s401 + $0x298] sm:$0xff]
        %v1008 = vld [vmem:[%s401 + $0x2a0] sm:$0xff]
        %v1009 = vld [vmem:[%s401 + $0x2a8] sm:$0xff]
        %v1010 = vld [vmem:[%s401 + $0x2b0] sm:$0xff]
        %v1011 = vld [vmem:[%s401 + $0x2b8] sm:$0xff]
        %v1012 = vld [vmem:[%s401 + $0x2c0] sm:$0xff]
        %v1013 = vld [vmem:[%s401 + $0x2c8] sm:$0xff]
        %v1014 = vld [vmem:[%s401 + $0x2d0] sm:$0xff]
        %v1015 = vld [vmem:[%s401 + $0x2d8] sm:$0xff]
        %v1016 = vld [vmem:[%s401 + $0x2e0] sm:$0xff]
        %v1017 = vld [vmem:[%s401 + $0x2e8] sm:$0xff]
        %v1018 = vld [vmem:[%s401 + $0x2f0] sm:$0xff]
        %v1019 = vld [vmem:[%s401 + $0x2f8] sm:$0xff]
        %v1020 = vld [vmem:[%s401 + $0x300] sm:$0xff]
        %v1021 = vld [vmem:[%s401 + $0x308] sm:$0xff]
        %v1022 = vld [vmem:[%s401 + $0x310] sm:$0xff]
        %v1023 = vld [vmem:[%s401 + $0x318] sm:$0xff]
        %v1024 = vld [vmem:[%s401 + $0x320] sm:$0xff]
        %v1025 = vld [vmem:[%s401 + $0x328] sm:$0xff]
        %v1026 = vld [vmem:[%s401 + $0x330] sm:$0xff]
        %v1027 = vld [vmem:[%s401 + $0x338] sm:$0xff]
        %v1028 = vld [vmem:[%s401 + $0x340] sm:$0xff]
        %v1029 = vld [vmem:[%s401 + $0x348] sm:$0xff]
        %v1030 = vld [vmem:[%s401 + $0x350] sm:$0xff]
        %v1031 = vld [vmem:[%s401 + $0x358] sm:$0xff]
        %v1032 = vld [vmem:[%s401 + $0x360] sm:$0xff]
        %v1033 = vld [vmem:[%s401 + $0x368] sm:$0xff]
        %v1034 = vld [vmem:[%s401 + $0x370] sm:$0xff]
        %v1035 = vld [vmem:[%s401 + $0x378] sm:$0xff]
        %v1036 = vld [vmem:[%s401 + $0x380] sm:$0xff]
        %v1037 = vld [vmem:[%s401 + $0x388] sm:$0xff]
        %v1038 = vld [vmem:[%s401 + $0x390] sm:$0xff]
        %v1039 = vld [vmem:[%s401 + $0x398] sm:$0xff]
        %v1040 = vld [vmem:[%s401 + $0x3a0] sm:$0xff]
        %v1041 = vld [vmem:[%s401 + $0x3a8] sm:$0xff]
        %v1042 = vld [vmem:[%s401 + $0x3b0] sm:$0xff]
        %v1043 = vld [vmem:[%s401 + $0x3b8] sm:$0xff]
        %v1044 = vld [vmem:[%s401 + $0x3c0] sm:$0xff]
        %v1045 = vld [vmem:[%s401 + $0x3c8] sm:$0xff]
        %v1046 = vld [vmem:[%s401 + $0x3d0] sm:$0xff]
        %v1047 = vld [vmem:[%s401 + $0x3d8] sm:$0xff]
        %v1048 = vld [vmem:[%s401 + $0x3e0] sm:$0xff]
        %v1049 = vld [vmem:[%s401 + $0x3e8] sm:$0xff]
        %v1050 = vld [vmem:[%s401 + $0x3f0] sm:$0xff]
        %v1051 = vld [vmem:[%s401 + $0x3f8] sm:$0xff]
        %v1180 = vunpack.c.l.b16 %v924
        %v1181 = vunpack.c.h.b16 %v924
        %v1182 = vunpack.c.l.b16 %v925
        %v1183 = vunpack.c.h.b16 %v925
        %v1184 = vunpack.c.l.b16 %v926
        %v1185 = vunpack.c.h.b16 %v926
        %v1186 = vunpack.c.l.b16 %v927
        %v1187 = vunpack.c.h.b16 %v927
        %v1188 = vunpack.c.l.b16 %v928
        %v1189 = vunpack.c.h.b16 %v928
        %v1190 = vunpack.c.l.b16 %v929
        %v1191 = vunpack.c.h.b16 %v929
        %v1192 = vunpack.c.l.b16 %v930
        %v1193 = vunpack.c.h.b16 %v930
        %v1194 = vunpack.c.l.b16 %v931
        %v1195 = vunpack.c.h.b16 %v931
        %v1196 = vunpack.c.l.b16 %v932
        %v1197 = vunpack.c.h.b16 %v932
        %v1198 = vunpack.c.l.b16 %v933
        %v1199 = vunpack.c.h.b16 %v933
        %v1200 = vunpack.c.l.b16 %v934
        %v1201 = vunpack.c.h.b16 %v934
        %v1202 = vunpack.c.l.b16 %v935
        %v1203 = vunpack.c.h.b16 %v935
        %v1204 = vunpack.c.l.b16 %v936
        %v1205 = vunpack.c.h.b16 %v936
        %v1206 = vunpack.c.l.b16 %v937
        %v1207 = vunpack.c.h.b16 %v937
        %v1208 = vunpack.c.l.b16 %v938
        %v1209 = vunpack.c.h.b16 %v938
        %v1210 = vunpack.c.l.b16 %v939
        %v1211 = vunpack.c.h.b16 %v939
        %v1212 = vunpack.c.l.b16 %v940
        %v1213 = vunpack.c.h.b16 %v940
        %v1214 = vunpack.c.l.b16 %v941
        %v1215 = vunpack.c.h.b16 %v941
        %v1216 = vunpack.c.l.b16 %v942
        %v1217 = vunpack.c.h.b16 %v942
        %v1218 = vunpack.c.l.b16 %v943
        %v1219 = vunpack.c.h.b16 %v943
        %v1220 = vunpack.c.l.b16 %v944
        %v1221 = vunpack.c.h.b16 %v944
        %v1222 = vunpack.c.l.b16 %v945
        %v1223 = vunpack.c.h.b16 %v945
        %v1224 = vunpack.c.l.b16 %v946
        %v1225 = vunpack.c.h.b16 %v946
        %v1226 = vunpack.c.l.b16 %v947
        %v1227 = vunpack.c.h.b16 %v947
        %v1228 = vunpack.c.l.b16 %v948
        %v1229 = vunpack.c.h.b16 %v948
        %v1230 = vunpack.c.l.b16 %v949
        %v1231 = vunpack.c.h.b16 %v949
        %v1232 = vunpack.c.l.b16 %v950
        %v1233 = vunpack.c.h.b16 %v950
        %v1234 = vunpack.c.l.b16 %v951
        %v1235 = vunpack.c.h.b16 %v951
        %v1236 = vunpack.c.l.b16 %v952
        %v1237 = vunpack.c.h.b16 %v952
        %v1238 = vunpack.c.l.b16 %v953
        %v1239 = vunpack.c.h.b16 %v953
        %v1240 = vunpack.c.l.b16 %v954
        %v1241 = vunpack.c.h.b16 %v954
        %v1242 = vunpack.c.l.b16 %v955
        %v1243 = vunpack.c.h.b16 %v955
        %v1244 = vunpack.c.l.b16 %v956
        %v1245 = vunpack.c.h.b16 %v956
        %v1246 = vunpack.c.l.b16 %v957
        %v1247 = vunpack.c.h.b16 %v957
        %v1248 = vunpack.c.l.b16 %v958
        %v1249 = vunpack.c.h.b16 %v958
        %v1250 = vunpack.c.l.b16 %v959
        %v1251 = vunpack.c.h.b16 %v959
        %v1252 = vunpack.c.l.b16 %v960
        %v1253 = vunpack.c.h.b16 %v960
        %v1254 = vunpack.c.l.b16 %v961
        %v1255 = vunpack.c.h.b16 %v961
        %v1256 = vunpack.c.l.b16 %v962
        %v1257 = vunpack.c.h.b16 %v962
        %v1258 = vunpack.c.l.b16 %v963
        %v1259 = vunpack.c.h.b16 %v963
        %v1260 = vunpack.c.l.b16 %v964
        %v1261 = vunpack.c.h.b16 %v964
        %v1262 = vunpack.c.l.b16 %v965
        %v1263 = vunpack.c.h.b16 %v965
        %v1264 = vunpack.c.l.b16 %v966
        %v1265 = vunpack.c.h.b16 %v966
        %v1266 = vunpack.c.l.b16 %v967
        %v1267 = vunpack.c.h.b16 %v967
        %v1268 = vunpack.c.l.b16 %v968
        %v1269 = vunpack.c.h.b16 %v968
        %v1270 = vunpack.c.l.b16 %v969
        %v1271 = vunpack.c.h.b16 %v969
        %v1272 = vunpack.c.l.b16 %v970
        %v1273 = vunpack.c.h.b16 %v970
        %v1274 = vunpack.c.l.b16 %v971
        %v1275 = vunpack.c.h.b16 %v971
        %v1276 = vunpack.c.l.b16 %v972
        %v1277 = vunpack.c.h.b16 %v972
        %v1278 = vunpack.c.l.b16 %v973
        %v1279 = vunpack.c.h.b16 %v973
        %v1280 = vunpack.c.l.b16 %v974
        %v1281 = vunpack.c.h.b16 %v974
        %v1282 = vunpack.c.l.b16 %v975
        %v1283 = vunpack.c.h.b16 %v975
        %v1284 = vunpack.c.l.b16 %v976
        %v1285 = vunpack.c.h.b16 %v976
        %v1286 = vunpack.c.l.b16 %v977
        %v1287 = vunpack.c.h.b16 %v977
        %v1288 = vunpack.c.l.b16 %v978
        %v1289 = vunpack.c.h.b16 %v978
        %v1290 = vunpack.c.l.b16 %v979
        %v1291 = vunpack.c.h.b16 %v979
        %v1292 = vunpack.c.l.b16 %v980
        %v1293 = vunpack.c.h.b16 %v980
        %v1294 = vunpack.c.l.b16 %v981
        %v1295 = vunpack.c.h.b16 %v981
        %v1296 = vunpack.c.l.b16 %v982
        %v1297 = vunpack.c.h.b16 %v982
        %v1298 = vunpack.c.l.b16 %v983
        %v1299 = vunpack.c.h.b16 %v983
        %v1300 = vunpack.c.l.b16 %v984
        %v1301 = vunpack.c.h.b16 %v984
        %v1302 = vunpack.c.l.b16 %v985
        %v1303 = vunpack.c.h.b16 %v985
        %v1304 = vunpack.c.l.b16 %v986
        %v1305 = vunpack.c.h.b16 %v986
        %v1306 = vunpack.c.l.b16 %v987
        %v1307 = vunpack.c.h.b16 %v987
        %v1308 = vunpack.c.l.b16 %v988
        %v1309 = vunpack.c.h.b16 %v988
        %v1310 = vunpack.c.l.b16 %v989
        %v1311 = vunpack.c.h.b16 %v989
        %v1312 = vunpack.c.l.b16 %v990
        %v1313 = vunpack.c.h.b16 %v990
        %v1314 = vunpack.c.l.b16 %v991
        %v1315 = vunpack.c.h.b16 %v991
        %v1316 = vunpack.c.l.b16 %v992
        %v1317 = vunpack.c.h.b16 %v992
        %v1318 = vunpack.c.l.b16 %v993
        %v1319 = vunpack.c.h.b16 %v993
        %v1320 = vunpack.c.l.b16 %v994
        %v1321 = vunpack.c.h.b16 %v994
        %v1322 = vunpack.c.l.b16 %v995
        %v1323 = vunpack.c.h.b16 %v995
        %v1324 = vunpack.c.l.b16 %v996
        %v1325 = vunpack.c.h.b16 %v996
        %v1326 = vunpack.c.l.b16 %v997
        %v1327 = vunpack.c.h.b16 %v997
        %v1328 = vunpack.c.l.b16 %v998
        %v1329 = vunpack.c.h.b16 %v998
        %v1330 = vunpack.c.l.b16 %v999
        %v1331 = vunpack.c.h.b16 %v999
        %v1332 = vunpack.c.l.b16 %v1000
        %v1333 = vunpack.c.h.b16 %v1000
        %v1334 = vunpack.c.l.b16 %v1001
        %v1335 = vunpack.c.h.b16 %v1001
        %v1336 = vunpack.c.l.b16 %v1002
        %v1337 = vunpack.c.h.b16 %v1002
        %v1338 = vunpack.c.l.b16 %v1003
        %v1339 = vunpack.c.h.b16 %v1003
        %v1340 = vunpack.c.l.b16 %v1004
        %v1341 = vunpack.c.h.b16 %v1004
        %v1342 = vunpack.c.l.b16 %v1005
        %v1343 = vunpack.c.h.b16 %v1005
        %v1344 = vunpack.c.l.b16 %v1006
        %v1345 = vunpack.c.h.b16 %v1006
        %v1346 = vunpack.c.l.b16 %v1007
        %v1347 = vunpack.c.h.b16 %v1007
        %v1348 = vunpack.c.l.b16 %v1008
        %v1349 = vunpack.c.h.b16 %v1008
        %v1350 = vunpack.c.l.b16 %v1009
        %v1351 = vunpack.c.h.b16 %v1009
        %v1352 = vunpack.c.l.b16 %v1010
        %v1353 = vunpack.c.h.b16 %v1010
        %v1354 = vunpack.c.l.b16 %v1011
        %v1355 = vunpack.c.h.b16 %v1011
        %v1356 = vunpack.c.l.b16 %v1012
        %v1357 = vunpack.c.h.b16 %v1012
        %v1358 = vunpack.c.l.b16 %v1013
        %v1359 = vunpack.c.h.b16 %v1013
        %v1360 = vunpack.c.l.b16 %v1014
        %v1361 = vunpack.c.h.b16 %v1014
        %v1362 = vunpack.c.l.b16 %v1015
        %v1363 = vunpack.c.h.b16 %v1015
        %v1364 = vunpack.c.l.b16 %v1016
        %v1365 = vunpack.c.h.b16 %v1016
        %v1366 = vunpack.c.l.b16 %v1017
        %v1367 = vunpack.c.h.b16 %v1017
        %v1368 = vunpack.c.l.b16 %v1018
        %v1369 = vunpack.c.h.b16 %v1018
        %v1370 = vunpack.c.l.b16 %v1019
        %v1371 = vunpack.c.h.b16 %v1019
        %v1372 = vunpack.c.l.b16 %v1020
        %v1373 = vunpack.c.h.b16 %v1020
        %v1374 = vunpack.c.l.b16 %v1021
        %v1375 = vunpack.c.h.b16 %v1021
        %v1376 = vunpack.c.l.b16 %v1022
        %v1377 = vunpack.c.h.b16 %v1022
        %v1378 = vunpack.c.l.b16 %v1023
        %v1379 = vunpack.c.h.b16 %v1023
        %v1380 = vunpack.c.l.b16 %v1024
        %v1381 = vunpack.c.h.b16 %v1024
        %v1382 = vunpack.c.l.b16 %v1025
        %v1383 = vunpack.c.h.b16 %v1025
        %v1384 = vunpack.c.l.b16 %v1026
        %v1385 = vunpack.c.h.b16 %v1026
        %v1386 = vunpack.c.l.b16 %v1027
        %v1387 = vunpack.c.h.b16 %v1027
        %v1388 = vunpack.c.l.b16 %v1028
        %v1389 = vunpack.c.h.b16 %v1028
        %v1390 = vunpack.c.l.b16 %v1029
        %v1391 = vunpack.c.h.b16 %v1029
        %v1392 = vunpack.c.l.b16 %v1030
        %v1393 = vunpack.c.h.b16 %v1030
        %v1394 = vunpack.c.l.b16 %v1031
        %v1395 = vunpack.c.h.b16 %v1031
        %v1396 = vunpack.c.l.b16 %v1032
        %v1397 = vunpack.c.h.b16 %v1032
        %v1398 = vunpack.c.l.b16 %v1033
        %v1399 = vunpack.c.h.b16 %v1033
        %v1400 = vunpack.c.l.b16 %v1034
        %v1401 = vunpack.c.h.b16 %v1034
        %v1402 = vunpack.c.l.b16 %v1035
        %v1403 = vunpack.c.h.b16 %v1035
        %v1404 = vunpack.c.l.b16 %v1036
        %v1405 = vunpack.c.h.b16 %v1036
        %v1406 = vunpack.c.l.b16 %v1037
        %v1407 = vunpack.c.h.b16 %v1037
        %v1408 = vunpack.c.l.b16 %v1038
        %v1409 = vunpack.c.h.b16 %v1038
        %v1410 = vunpack.c.l.b16 %v1039
        %v1411 = vunpack.c.h.b16 %v1039
        %v1412 = vunpack.c.l.b16 %v1040
        %v1413 = vunpack.c.h.b16 %v1040
        %v1414 = vunpack.c.l.b16 %v1041
        %v1415 = vunpack.c.h.b16 %v1041
        %v1416 = vunpack.c.l.b16 %v1042
        %v1417 = vunpack.c.h.b16 %v1042
        %v1418 = vunpack.c.l.b16 %v1043
        %v1419 = vunpack.c.h.b16 %v1043
        %v1420 = vunpack.c.l.b16 %v1044
        %v1421 = vunpack.c.h.b16 %v1044
        %v1422 = vunpack.c.l.b16 %v1045
        %v1423 = vunpack.c.h.b16 %v1045
        %v1424 = vunpack.c.l.b16 %v1046
        %v1425 = vunpack.c.h.b16 %v1046
        %v1426 = vunpack.c.l.b16 %v1047
        %v1427 = vunpack.c.h.b16 %v1047
        %v1428 = vunpack.c.l.b16 %v1048
        %v1429 = vunpack.c.h.b16 %v1048
        %v1430 = vunpack.c.l.b16 %v1049
        %v1431 = vunpack.c.h.b16 %v1049
        %v1432 = vunpack.c.l.b16 %v1050
        %v1433 = vunpack.c.h.b16 %v1050
        %v1434 = vunpack.c.l.b16 %v1051
        %v1435 = vunpack.c.h.b16 %v1051
        %v1436 = vpack.c.b16 %v1184, %v1180
        %v1437 = vpack.c.b16 %v1185, %v1181
        %v1438 = vpack.c.b16 %v1186, %v1182
        %v1439 = vpack.c.b16 %v1187, %v1183
        %v1440 = vpack.c.b16 %v1192, %v1188
        %v1441 = vpack.c.b16 %v1193, %v1189
        %v1442 = vpack.c.b16 %v1194, %v1190
        %v1443 = vpack.c.b16 %v1195, %v1191
        %v1444 = vpack.c.b16 %v1200, %v1196
        %v1445 = vpack.c.b16 %v1201, %v1197
        %v1446 = vpack.c.b16 %v1202, %v1198
        %v1447 = vpack.c.b16 %v1203, %v1199
        %v1448 = vpack.c.b16 %v1208, %v1204
        %v1449 = vpack.c.b16 %v1209, %v1205
        %v1450 = vpack.c.b16 %v1210, %v1206
        %v1451 = vpack.c.b16 %v1211, %v1207
        %v1452 = vpack.c.b16 %v1216, %v1212
        %v1453 = vpack.c.b16 %v1217, %v1213
        %v1454 = vpack.c.b16 %v1218, %v1214
        %v1455 = vpack.c.b16 %v1219, %v1215
        %v1456 = vpack.c.b16 %v1224, %v1220
        %v1457 = vpack.c.b16 %v1225, %v1221
        %v1458 = vpack.c.b16 %v1226, %v1222
        %v1459 = vpack.c.b16 %v1227, %v1223
        %v1460 = vpack.c.b16 %v1232, %v1228
        %v1461 = vpack.c.b16 %v1233, %v1229
        %v1462 = vpack.c.b16 %v1234, %v1230
        %v1463 = vpack.c.b16 %v1235, %v1231
        %v1464 = vpack.c.b16 %v1240, %v1236
        %v1465 = vpack.c.b16 %v1241, %v1237
        %v1466 = vpack.c.b16 %v1242, %v1238
        %v1467 = vpack.c.b16 %v1243, %v1239
        %v1468 = vpack.c.b16 %v1248, %v1244
        %v1469 = vpack.c.b16 %v1249, %v1245
        %v1470 = vpack.c.b16 %v1250, %v1246
        %v1471 = vpack.c.b16 %v1251, %v1247
        %v1472 = vpack.c.b16 %v1256, %v1252
        %v1473 = vpack.c.b16 %v1257, %v1253
        %v1474 = vpack.c.b16 %v1258, %v1254
        %v1475 = vpack.c.b16 %v1259, %v1255
        %v1476 = vpack.c.b16 %v1264, %v1260
        %v1477 = vpack.c.b16 %v1265, %v1261
        %v1478 = vpack.c.b16 %v1266, %v1262
        %v1479 = vpack.c.b16 %v1267, %v1263
        %v1480 = vpack.c.b16 %v1272, %v1268
        %v1481 = vpack.c.b16 %v1273, %v1269
        %v1482 = vpack.c.b16 %v1274, %v1270
        %v1483 = vpack.c.b16 %v1275, %v1271
        %v1484 = vpack.c.b16 %v1280, %v1276
        %v1485 = vpack.c.b16 %v1281, %v1277
        %v1486 = vpack.c.b16 %v1282, %v1278
        %v1487 = vpack.c.b16 %v1283, %v1279
        %v1488 = vpack.c.b16 %v1288, %v1284
        %v1489 = vpack.c.b16 %v1289, %v1285
        %v1490 = vpack.c.b16 %v1290, %v1286
        %v1491 = vpack.c.b16 %v1291, %v1287
        %v1492 = vpack.c.b16 %v1296, %v1292
        %v1493 = vpack.c.b16 %v1297, %v1293
        %v1494 = vpack.c.b16 %v1298, %v1294
        %v1495 = vpack.c.b16 %v1299, %v1295
        %v1496 = vpack.c.b16 %v1304, %v1300
        %v1497 = vpack.c.b16 %v1305, %v1301
        %v1498 = vpack.c.b16 %v1306, %v1302
        %v1499 = vpack.c.b16 %v1307, %v1303
        %v1500 = vpack.c.b16 %v1312, %v1308
        %v1501 = vpack.c.b16 %v1313, %v1309
        %v1502 = vpack.c.b16 %v1314, %v1310
        %v1503 = vpack.c.b16 %v1315, %v1311
        %v1504 = vpack.c.b16 %v1320, %v1316
        %v1505 = vpack.c.b16 %v1321, %v1317
        %v1506 = vpack.c.b16 %v1322, %v1318
        %v1507 = vpack.c.b16 %v1323, %v1319
        %v1508 = vpack.c.b16 %v1328, %v1324
        %v1509 = vpack.c.b16 %v1329, %v1325
        %v1510 = vpack.c.b16 %v1330, %v1326
        %v1511 = vpack.c.b16 %v1331, %v1327
        %v1512 = vpack.c.b16 %v1336, %v1332
        %v1513 = vpack.c.b16 %v1337, %v1333
        %v1514 = vpack.c.b16 %v1338, %v1334
        %v1515 = vpack.c.b16 %v1339, %v1335
        %v1516 = vpack.c.b16 %v1344, %v1340
        %v1517 = vpack.c.b16 %v1345, %v1341
        %v1518 = vpack.c.b16 %v1346, %v1342
        %v1519 = vpack.c.b16 %v1347, %v1343
        %v1520 = vpack.c.b16 %v1352, %v1348
        %v1521 = vpack.c.b16 %v1353, %v1349
        %v1522 = vpack.c.b16 %v1354, %v1350
        %v1523 = vpack.c.b16 %v1355, %v1351
        %v1524 = vpack.c.b16 %v1360, %v1356
        %v1525 = vpack.c.b16 %v1361, %v1357
        %v1526 = vpack.c.b16 %v1362, %v1358
        %v1527 = vpack.c.b16 %v1363, %v1359
        %v1528 = vpack.c.b16 %v1368, %v1364
        %v1529 = vpack.c.b16 %v1369, %v1365
        %v1530 = vpack.c.b16 %v1370, %v1366
        %v1531 = vpack.c.b16 %v1371, %v1367
        %v1532 = vpack.c.b16 %v1376, %v1372
        %v1533 = vpack.c.b16 %v1377, %v1373
        %v1534 = vpack.c.b16 %v1378, %v1374
        %v1535 = vpack.c.b16 %v1379, %v1375
        %v1536 = vpack.c.b16 %v1384, %v1380
        %v1537 = vpack.c.b16 %v1385, %v1381
        %v1538 = vpack.c.b16 %v1386, %v1382
        %v1539 = vpack.c.b16 %v1387, %v1383
        %v1540 = vpack.c.b16 %v1392, %v1388
        %v1541 = vpack.c.b16 %v1393, %v1389
        %v1542 = vpack.c.b16 %v1394, %v1390
        %v1543 = vpack.c.b16 %v1395, %v1391
        %v1544 = vpack.c.b16 %v1400, %v1396
        %v1545 = vpack.c.b16 %v1401, %v1397
        %v1546 = vpack.c.b16 %v1402, %v1398
        %v1547 = vpack.c.b16 %v1403, %v1399
        %v1548 = vpack.c.b16 %v1408, %v1404
        %v1549 = vpack.c.b16 %v1409, %v1405
        %v1550 = vpack.c.b16 %v1410, %v1406
        %v1551 = vpack.c.b16 %v1411, %v1407
        %v1552 = vpack.c.b16 %v1416, %v1412
        %v1553 = vpack.c.b16 %v1417, %v1413
        %v1554 = vpack.c.b16 %v1418, %v1414
        %v1555 = vpack.c.b16 %v1419, %v1415
        %v1556 = vpack.c.b16 %v1424, %v1420
        %v1557 = vpack.c.b16 %v1425, %v1421
        %v1558 = vpack.c.b16 %v1426, %v1422
        %v1559 = vpack.c.b16 %v1427, %v1423
        %v1560 = vpack.c.b16 %v1432, %v1428
        %v1561 = vpack.c.b16 %v1433, %v1429
        %v1562 = vpack.c.b16 %v1434, %v1430
        %v1563 = vpack.c.b16 %v1435, %v1431
        %1692 = vmatpush.bf16.msra.mxu0 %v1464
        %1693 = vmatpush.bf16.msra.mxu0 %v1460
        %1694 = vmatpush.bf16.msra.mxu0 %v1456
        %1695 = vmatpush.bf16.msra.mxu0 %v1452
        %1696 = vmatpush.bf16.msra.mxu0 %v1448
        %1697 = vmatpush.bf16.msra.mxu0 %v1444
        %1698 = vmatpush.bf16.msra.mxu0 %v1440
        %1699 = vmatpush.bf16.msra.mxu0 %v1436
        %1700 = vmatmul.bf16.gmra.mxu0 %v920
        %v1701 = vpop.f32.mrf.mxu0
        %v1702 = vadd.f32 0.0, %v1701
        %v1703 = vpop.f32.mrf.mxu0
        %1704 = vdwg.mxu0
        %1705 = vmatpush.bf16.msra.mxu0 %v1496
        %1706 = vmatpush.bf16.msra.mxu0 %v1492
        %1707 = vmatpush.bf16.msra.mxu0 %v1488
        %1708 = vmatpush.bf16.msra.mxu0 %v1484
        %1709 = vmatpush.bf16.msra.mxu0 %v1480
        %1710 = vmatpush.bf16.msra.mxu0 %v1476
        %1711 = vmatpush.bf16.msra.mxu0 %v1472
        %1712 = vmatpush.bf16.msra.mxu0 %v1468
        %1713 = vmatmul.bf16.gmra.mxu0 %v921
        %v1714 = vpop.f32.mrf.mxu0
        %v1715 = vadd.f32 %v1702, %v1714
        %v1716 = vpop.f32.mrf.mxu0
        %1717 = vdwg.mxu0
        %1718 = vmatpush.bf16.msra.mxu0 %v1528
        %1719 = vmatpush.bf16.msra.mxu0 %v1524
        %1720 = vmatpush.bf16.msra.mxu0 %v1520
        %1721 = vmatpush.bf16.msra.mxu0 %v1516
        %1722 = vmatpush.bf16.msra.mxu0 %v1512
        %1723 = vmatpush.bf16.msra.mxu0 %v1508
        %1724 = vmatpush.bf16.msra.mxu0 %v1504
        %1725 = vmatpush.bf16.msra.mxu0 %v1500
        %1726 = vmatmul.bf16.gmra.mxu0 %v922
        %v1727 = vpop.f32.mrf.mxu0
        %v1728 = vadd.f32 %v1715, %v1727
        %v1729 = vpop.f32.mrf.mxu0
        %1730 = vdwg.mxu0
        %1731 = vmatpush.bf16.msra.mxu0 %v1560
        %1732 = vmatpush.bf16.msra.mxu0 %v1556
        %1733 = vmatpush.bf16.msra.mxu0 %v1552
        %1734 = vmatpush.bf16.msra.mxu0 %v1548
        %1735 = vmatpush.bf16.msra.mxu0 %v1544
        %1736 = vmatpush.bf16.msra.mxu0 %v1540
        %1737 = vmatpush.bf16.msra.mxu0 %v1536
        %1738 = vmatpush.bf16.msra.mxu0 %v1532
        %1739 = vmatmul.bf16.gmra.mxu0 %v923
        %v1740 = vpop.f32.mrf.mxu0
        %v1741 = vadd.f32 %v1728, %v1740
        %v1742 = vpop.f32.mrf.mxu0
        %1743 = vdwg.mxu0
        %1744 = vmatpush.bf16.msra.mxu0 %v1465
        %1745 = vmatpush.bf16.msra.mxu0 %v1461
        %1746 = vmatpush.bf16.msra.mxu0 %v1457
        %1747 = vmatpush.bf16.msra.mxu0 %v1453
        %1748 = vmatpush.bf16.msra.mxu0 %v1449
        %1749 = vmatpush.bf16.msra.mxu0 %v1445
        %1750 = vmatpush.bf16.msra.mxu0 %v1441
        %1751 = vmatpush.bf16.msra.mxu0 %v1437
        %1752 = vmatmul.bf16.gmra.mxu0 %v920
        %v1753 = vpop.f32.mrf.mxu0
        %v1754 = vadd.f32 0.0, %v1753
        %v1755 = vpop.f32.mrf.mxu0
        %1756 = vdwg.mxu0
        %1757 = vmatpush.bf16.msra.mxu0 %v1497
        %1758 = vmatpush.bf16.msra.mxu0 %v1493
        %1759 = vmatpush.bf16.msra.mxu0 %v1489
        %1760 = vmatpush.bf16.msra.mxu0 %v1485
        %1761 = vmatpush.bf16.msra.mxu0 %v1481
        %1762 = vmatpush.bf16.msra.mxu0 %v1477
        %1763 = vmatpush.bf16.msra.mxu0 %v1473
        %1764 = vmatpush.bf16.msra.mxu0 %v1469
        %1765 = vmatmul.bf16.gmra.mxu0 %v921
        %v1766 = vpop.f32.mrf.mxu0
        %v1767 = vadd.f32 %v1754, %v1766
        %v1768 = vpop.f32.mrf.mxu0
        %1769 = vdwg.mxu0
        %1770 = vmatpush.bf16.msra.mxu0 %v1529
        %1771 = vmatpush.bf16.msra.mxu0 %v1525
        %1772 = vmatpush.bf16.msra.mxu0 %v1521
        %1773 = vmatpush.bf16.msra.mxu0 %v1517
        %1774 = vmatpush.bf16.msra.mxu0 %v1513
        %1775 = vmatpush.bf16.msra.mxu0 %v1509
        %1776 = vmatpush.bf16.msra.mxu0 %v1505
        %1777 = vmatpush.bf16.msra.mxu0 %v1501
        %1778 = vmatmul.bf16.gmra.mxu0 %v922
        %v1779 = vpop.f32.mrf.mxu0
        %v1780 = vadd.f32 %v1767, %v1779
        %v1781 = vpop.f32.mrf.mxu0
        %1782 = vdwg.mxu0
        %1783 = vmatpush.bf16.msra.mxu0 %v1561
        %1784 = vmatpush.bf16.msra.mxu0 %v1557
        %1785 = vmatpush.bf16.msra.mxu0 %v1553
        %1786 = vmatpush.bf16.msra.mxu0 %v1549
        %1787 = vmatpush.bf16.msra.mxu0 %v1545
        %1788 = vmatpush.bf16.msra.mxu0 %v1541
        %1789 = vmatpush.bf16.msra.mxu0 %v1537
        %1790 = vmatpush.bf16.msra.mxu0 %v1533
        %1791 = vmatmul.bf16.gmra.mxu0 %v923
        %v1792 = vpop.f32.mrf.mxu0
        %v1793 = vadd.f32 %v1780, %v1792
        %v1794 = vpop.f32.mrf.mxu0
        %1795 = vdwg.mxu0
        %1796 = vmatpush.bf16.msra.mxu0 %v1466
        %1797 = vmatpush.bf16.msra.mxu0 %v1462
        %1798 = vmatpush.bf16.msra.mxu0 %v1458
        %1799 = vmatpush.bf16.msra.mxu0 %v1454
        %1800 = vmatpush.bf16.msra.mxu0 %v1450
        %1801 = vmatpush.bf16.msra.mxu0 %v1446
        %1802 = vmatpush.bf16.msra.mxu0 %v1442
        %1803 = vmatpush.bf16.msra.mxu0 %v1438
        %1804 = vmatmul.bf16.gmra.mxu0 %v920
        %v1805 = vpop.f32.mrf.mxu0
        %v1806 = vadd.f32 0.0, %v1805
        %v1807 = vpop.f32.mrf.mxu0
        %1808 = vdwg.mxu0
        %1809 = vmatpush.bf16.msra.mxu0 %v1498
        %1810 = vmatpush.bf16.msra.mxu0 %v1494
        %1811 = vmatpush.bf16.msra.mxu0 %v1490
        %1812 = vmatpush.bf16.msra.mxu0 %v1486
        %1813 = vmatpush.bf16.msra.mxu0 %v1482
        %1814 = vmatpush.bf16.msra.mxu0 %v1478
        %1815 = vmatpush.bf16.msra.mxu0 %v1474
        %1816 = vmatpush.bf16.msra.mxu0 %v1470
        %1817 = vmatmul.bf16.gmra.mxu0 %v921
        %v1818 = vpop.f32.mrf.mxu0
        %v1819 = vadd.f32 %v1806, %v1818
        %v1820 = vpop.f32.mrf.mxu0
        %1821 = vdwg.mxu0
        %1822 = vmatpush.bf16.msra.mxu0 %v1530
        %1823 = vmatpush.bf16.msra.mxu0 %v1526
        %1824 = vmatpush.bf16.msra.mxu0 %v1522
        %1825 = vmatpush.bf16.msra.mxu0 %v1518
        %1826 = vmatpush.bf16.msra.mxu0 %v1514
        %1827 = vmatpush.bf16.msra.mxu0 %v1510
        %1828 = vmatpush.bf16.msra.mxu0 %v1506
        %1829 = vmatpush.bf16.msra.mxu0 %v1502
        %1830 = vmatmul.bf16.gmra.mxu0 %v922
        %v1831 = vpop.f32.mrf.mxu0
        %v1832 = vadd.f32 %v1819, %v1831
        %v1833 = vpop.f32.mrf.mxu0
        %1834 = vdwg.mxu0
        %1835 = vmatpush.bf16.msra.mxu0 %v1562
        %1836 = vmatpush.bf16.msra.mxu0 %v1558
        %1837 = vmatpush.bf16.msra.mxu0 %v1554
        %1838 = vmatpush.bf16.msra.mxu0 %v1550
        %1839 = vmatpush.bf16.msra.mxu0 %v1546
        %1840 = vmatpush.bf16.msra.mxu0 %v1542
        %1841 = vmatpush.bf16.msra.mxu0 %v1538
        %1842 = vmatpush.bf16.msra.mxu0 %v1534
        %1843 = vmatmul.bf16.gmra.mxu0 %v923
        %v1844 = vpop.f32.mrf.mxu0
        %v1845 = vadd.f32 %v1832, %v1844
        %v1846 = vpop.f32.mrf.mxu0
        %1847 = vdwg.mxu0
        %1848 = vmatpush.bf16.msra.mxu0 %v1467
        %1849 = vmatpush.bf16.msra.mxu0 %v1463
        %1850 = vmatpush.bf16.msra.mxu0 %v1459
        %1851 = vmatpush.bf16.msra.mxu0 %v1455
        %1852 = vmatpush.bf16.msra.mxu0 %v1451
        %1853 = vmatpush.bf16.msra.mxu0 %v1447
        %1854 = vmatpush.bf16.msra.mxu0 %v1443
        %1855 = vmatpush.bf16.msra.mxu0 %v1439
        %1856 = vmatmul.bf16.gmra.mxu0 %v920
        %v1857 = vpop.f32.mrf.mxu0
        %v1858 = vadd.f32 0.0, %v1857
        %v1859 = vpop.f32.mrf.mxu0
        %1860 = vdwg.mxu0
        %1861 = vmatpush.bf16.msra.mxu0 %v1499
        %1862 = vmatpush.bf16.msra.mxu0 %v1495
        %1863 = vmatpush.bf16.msra.mxu0 %v1491
        %1864 = vmatpush.bf16.msra.mxu0 %v1487
        %1865 = vmatpush.bf16.msra.mxu0 %v1483
        %1866 = vmatpush.bf16.msra.mxu0 %v1479
        %1867 = vmatpush.bf16.msra.mxu0 %v1475
        %1868 = vmatpush.bf16.msra.mxu0 %v1471
        %1869 = vmatmul.bf16.gmra.mxu0 %v921
        %v1870 = vpop.f32.mrf.mxu0
        %v1871 = vadd.f32 %v1858, %v1870
        %v1872 = vpop.f32.mrf.mxu0
        %1873 = vdwg.mxu0
        %1874 = vmatpush.bf16.msra.mxu0 %v1531
        %1875 = vmatpush.bf16.msra.mxu0 %v1527
        %1876 = vmatpush.bf16.msra.mxu0 %v1523
        %1877 = vmatpush.bf16.msra.mxu0 %v1519
        %1878 = vmatpush.bf16.msra.mxu0 %v1515
        %1879 = vmatpush.bf16.msra.mxu0 %v1511
        %1880 = vmatpush.bf16.msra.mxu0 %v1507
        %1881 = vmatpush.bf16.msra.mxu0 %v1503
        %1882 = vmatmul.bf16.gmra.mxu0 %v922
        %v1883 = vpop.f32.mrf.mxu0
        %v1884 = vadd.f32 %v1871, %v1883
        %v1885 = vpop.f32.mrf.mxu0
        %1886 = vdwg.mxu0
        %1887 = vmatpush.bf16.msra.mxu0 %v1563
        %1888 = vmatpush.bf16.msra.mxu0 %v1559
        %1889 = vmatpush.bf16.msra.mxu0 %v1555
        %1890 = vmatpush.bf16.msra.mxu0 %v1551
        %1891 = vmatpush.bf16.msra.mxu0 %v1547
        %1892 = vmatpush.bf16.msra.mxu0 %v1543
        %1893 = vmatpush.bf16.msra.mxu0 %v1539
        %1894 = vmatpush.bf16.msra.mxu0 %v1535
        %1895 = vmatmul.bf16.gmra.mxu0 %v923
        %v1896 = vpop.f32.mrf.mxu0
        %v1897 = vadd.f32 %v1884, %v1896
        %v1898 = vpop.f32.mrf.mxu0
        %1899 = vdwg.mxu0
        %v1900 = vrot.slane %v1741, 4
        %v1901 = vadd.f32 %v1741, %v1900
        %v1902 = vrot.slane %v1901, 2
        %v1903 = vadd.f32 %v1901, %v1902
        %v1904 = vrot.slane %v1903, 1
        %v1905 = vadd.f32 %v1903, %v1904
        %v1906 = vrot.slane %v1793, 4
        %v1907 = vadd.f32 %v1793, %v1906
        %v1908 = vrot.slane %v1907, 2
        %v1909 = vadd.f32 %v1907, %v1908
        %v1910 = vrot.slane %v1909, 1
        %v1911 = vadd.f32 %v1909, %v1910
        %v1912 = vrot.slane %v1845, 4
        %v1913 = vadd.f32 %v1845, %v1912
        %v1914 = vrot.slane %v1913, 2
        %v1915 = vadd.f32 %v1913, %v1914
        %v1916 = vrot.slane %v1915, 1
        %v1917 = vadd.f32 %v1915, %v1916
        %v1918 = vrot.slane %v1897, 4
        %v1919 = vadd.f32 %v1897, %v1918
        %v1920 = vrot.slane %v1919, 2
        %v1921 = vadd.f32 %v1919, %v1920
        %v1922 = vrot.slane %v1921, 1
        %v1923 = vadd.f32 %v1921, %v1922
        %v1924 = vmul.f32 %v1905, %v787
        %v1925 = vmul.f32 %v1911, %v787
        %v1926 = vmul.f32 %v1917, %v787
        %v1927 = vmul.f32 %v1923, %v787
        %v1928 = vsub.f32 %v1741, %v1924
        %v1929 = vsub.f32 %v1793, %v1925
        %v1930 = vsub.f32 %v1845, %v1926
        %v1931 = vsub.f32 %v1897, %v1927
        %v1932 = vmul.f32 %v1928, %v1928
        %v1933 = vmul.f32 %v1929, %v1929
        %v1934 = vmul.f32 %v1930, %v1930
        %v1935 = vmul.f32 %v1931, %v1931
        %v1936 = vrot.slane %v1932, 4
        %v1937 = vadd.f32 %v1932, %v1936
        %v1938 = vrot.slane %v1937, 2
        %v1939 = vadd.f32 %v1937, %v1938
        %v1940 = vrot.slane %v1939, 1
        %v1941 = vadd.f32 %v1939, %v1940
        %v1942 = vrot.slane %v1933, 4
        %v1943 = vadd.f32 %v1933, %v1942
        %v1944 = vrot.slane %v1943, 2
        %v1945 = vadd.f32 %v1943, %v1944
        %v1946 = vrot.slane %v1945, 1
        %v1947 = vadd.f32 %v1945, %v1946
        %v1948 = vrot.slane %v1934, 4
        %v1949 = vadd.f32 %v1934, %v1948
        %v1950 = vrot.slane %v1949, 2
        %v1951 = vadd.f32 %v1949, %v1950
        %v1952 = vrot.slane %v1951, 1
        %v1953 = vadd.f32 %v1951, %v1952
        %v1954 = vrot.slane %v1935, 4
        %v1955 = vadd.f32 %v1935, %v1954
        %v1956 = vrot.slane %v1955, 2
        %v1957 = vadd.f32 %v1955, %v1956
        %v1958 = vrot.slane %v1957, 1
        %v1959 = vadd.f32 %v1957, %v1958
        %v1960 = vmul.f32 %v1941, %v787
        %v1961 = vmul.f32 %v1947, %v787
        %v1962 = vmul.f32 %v1953, %v787
        %v1963 = vmul.f32 %v1959, %v787
        %s1964 = scalar_lea.vmem %s496, 2
        %v1965 = vld [vmem:[%s1964] ss:$8 sm:$0xf]
        %v1966 = vadd.f32 %v1960, 1e-05
        %v1967 = vadd.f32 %v1961, 1e-05
        %v1968 = vadd.f32 %v1962, 1e-05
        %v1969 = vadd.f32 %v1963, 1e-05
        %v1970 = vrsqrt.pop %v1966
        %v1971 = vmul.f32 %v1970, %v1966
        %v1972 = vmul.f32 %v1971, %v1970
        %v1973 = vmul.f32 0.5, %v1972
        %v1974 = vsub.f32 1.5, %v1973
        %v1975 = vmul.f32 %v1970, %v1974
        %vm1976 = vweird.f32 %v1966
        %vm1977 = vweird.f32 %v1970
        %vm1978 = vmor %vm1976, %vm1977
        %v1979 = vsel %vm1978, %v1970, %v1975
        %v1980 = vrsqrt.pop %v1967
        %v1981 = vmul.f32 %v1980, %v1967
        %v1982 = vmul.f32 %v1981, %v1980
        %v1983 = vmul.f32 0.5, %v1982
        %v1984 = vsub.f32 1.5, %v1983
        %v1985 = vmul.f32 %v1980, %v1984
        %vm1986 = vweird.f32 %v1967
        %vm1987 = vweird.f32 %v1980
        %vm1988 = vmor %vm1986, %vm1987
        %v1989 = vsel %vm1988, %v1980, %v1985
        %v1990 = vrsqrt.pop %v1968
        %v1991 = vmul.f32 %v1990, %v1968
        %v1992 = vmul.f32 %v1991, %v1990
        %v1993 = vmul.f32 0.5, %v1992
        %v1994 = vsub.f32 1.5, %v1993
        %v1995 = vmul.f32 %v1990, %v1994
        %vm1996 = vweird.f32 %v1968
        %vm1997 = vweird.f32 %v1990
        %vm1998 = vmor %vm1996, %vm1997
        %v1999 = vsel %vm1998, %v1990, %v1995
        %v2000 = vrsqrt.pop %v1969
        %v2001 = vmul.f32 %v2000, %v1969
        %v2002 = vmul.f32 %v2001, %v2000
        %v2003 = vmul.f32 0.5, %v2002
        %v2004 = vsub.f32 1.5, %v2003
        %v2005 = vmul.f32 %v2000, %v2004
        %vm2006 = vweird.f32 %v1969
        %vm2007 = vweird.f32 %v2000
        %vm2008 = vmor %vm2006, %vm2007
        %v2009 = vsel %vm2008, %v2000, %v2005
        %v2014 = vrot.slane %v1989, 7
        %v2015 = vrot.slane %v1999, 6
        %v2016 = vrot.slane %v2009, 5
        %v2017 = vsel %vm880, %v1979, %v2014
        %v2018 = vsel %vm882, %v2015, %v2016
        %v2019 = vsel %vm884, %v2017, %v2018
        %v2021 = vmul.f32 %v1965, %v2019
        %v2023 = vperm.slane %v2021, 0
        %v2024 = vperm.slane %v2021, 1
        %v2025 = vperm.slane %v2021, 2
        %v2026 = vperm.slane %v2021, 3
        %v2031 = vmul.f32 %v1928, %v2023
        %v2032 = vmul.f32 %v1929, %v2024
        %v2033 = vmul.f32 %v1930, %v2025
        %v2034 = vmul.f32 %v1931, %v2026
        %s2035 = scalar_lea.vmem %s496, 3
        %v2036 = vld [vmem:[%s2035] ss:$8 sm:$0xf]
        %v2038 = vperm.slane %v2036, 0
        %v2039 = vperm.slane %v2036, 1
        %v2040 = vperm.slane %v2036, 2
        %v2041 = vperm.slane %v2036, 3
        %v2046 = vadd.f32 %v2031, %v2038
        %v2047 = vadd.f32 %v2032, %v2039
        %v2048 = vadd.f32 %v2033, %v2040
        %v2049 = vadd.f32 %v2034, %v2041
        %v2050 = vmax.f32 %v2046, 0.0
        %v2051 = vmax.f32 %v2047, 0.0
        %v2052 = vmax.f32 %v2048, 0.0
        %v2053 = vmax.f32 %v2049, 0.0
        %v2054 = vpack.c.bf16 %v2050, %v2050
        %v2055 = vpack.c.bf16 %v2051, %v2051
        %v2056 = vpack.c.bf16 %v2052, %v2052
        %v2057 = vpack.c.bf16 %v2053, %v2053
        %v2058 = vld [vmem:[%s411] sm:$0xff]
        %v2059 = vld [vmem:[%s411 + $0x8] sm:$0xff]
        %v2060 = vld [vmem:[%s411 + $0x10] sm:$0xff]
        %v2061 = vld [vmem:[%s411 + $0x18] sm:$0xff]
        %v2062 = vld [vmem:[%s411 + $0x20] sm:$0xff]
        %v2063 = vld [vmem:[%s411 + $0x28] sm:$0xff]
        %v2064 = vld [vmem:[%s411 + $0x30] sm:$0xff]
        %v2065 = vld [vmem:[%s411 + $0x38] sm:$0xff]
        %v2066 = vld [vmem:[%s411 + $0x40] sm:$0xff]
        %v2067 = vld [vmem:[%s411 + $0x48] sm:$0xff]
        %v2068 = vld [vmem:[%s411 + $0x50] sm:$0xff]
        %v2069 = vld [vmem:[%s411 + $0x58] sm:$0xff]
        %v2070 = vld [vmem:[%s411 + $0x60] sm:$0xff]
        %v2071 = vld [vmem:[%s411 + $0x68] sm:$0xff]
        %v2072 = vld [vmem:[%s411 + $0x70] sm:$0xff]
        %v2073 = vld [vmem:[%s411 + $0x78] sm:$0xff]
        %v2074 = vld [vmem:[%s411 + $0x80] sm:$0xff]
        %v2075 = vld [vmem:[%s411 + $0x88] sm:$0xff]
        %v2076 = vld [vmem:[%s411 + $0x90] sm:$0xff]
        %v2077 = vld [vmem:[%s411 + $0x98] sm:$0xff]
        %v2078 = vld [vmem:[%s411 + $0xa0] sm:$0xff]
        %v2079 = vld [vmem:[%s411 + $0xa8] sm:$0xff]
        %v2080 = vld [vmem:[%s411 + $0xb0] sm:$0xff]
        %v2081 = vld [vmem:[%s411 + $0xb8] sm:$0xff]
        %v2082 = vld [vmem:[%s411 + $0xc0] sm:$0xff]
        %v2083 = vld [vmem:[%s411 + $0xc8] sm:$0xff]
        %v2084 = vld [vmem:[%s411 + $0xd0] sm:$0xff]
        %v2085 = vld [vmem:[%s411 + $0xd8] sm:$0xff]
        %v2086 = vld [vmem:[%s411 + $0xe0] sm:$0xff]
        %v2087 = vld [vmem:[%s411 + $0xe8] sm:$0xff]
        %v2088 = vld [vmem:[%s411 + $0xf0] sm:$0xff]
        %v2089 = vld [vmem:[%s411 + $0xf8] sm:$0xff]
        %v2090 = vld [vmem:[%s411 + $0x100] sm:$0xff]
        %v2091 = vld [vmem:[%s411 + $0x108] sm:$0xff]
        %v2092 = vld [vmem:[%s411 + $0x110] sm:$0xff]
        %v2093 = vld [vmem:[%s411 + $0x118] sm:$0xff]
        %v2094 = vld [vmem:[%s411 + $0x120] sm:$0xff]
        %v2095 = vld [vmem:[%s411 + $0x128] sm:$0xff]
        %v2096 = vld [vmem:[%s411 + $0x130] sm:$0xff]
        %v2097 = vld [vmem:[%s411 + $0x138] sm:$0xff]
        %v2098 = vld [vmem:[%s411 + $0x140] sm:$0xff]
        %v2099 = vld [vmem:[%s411 + $0x148] sm:$0xff]
        %v2100 = vld [vmem:[%s411 + $0x150] sm:$0xff]
        %v2101 = vld [vmem:[%s411 + $0x158] sm:$0xff]
        %v2102 = vld [vmem:[%s411 + $0x160] sm:$0xff]
        %v2103 = vld [vmem:[%s411 + $0x168] sm:$0xff]
        %v2104 = vld [vmem:[%s411 + $0x170] sm:$0xff]
        %v2105 = vld [vmem:[%s411 + $0x178] sm:$0xff]
        %v2106 = vld [vmem:[%s411 + $0x180] sm:$0xff]
        %v2107 = vld [vmem:[%s411 + $0x188] sm:$0xff]
        %v2108 = vld [vmem:[%s411 + $0x190] sm:$0xff]
        %v2109 = vld [vmem:[%s411 + $0x198] sm:$0xff]
        %v2110 = vld [vmem:[%s411 + $0x1a0] sm:$0xff]
        %v2111 = vld [vmem:[%s411 + $0x1a8] sm:$0xff]
        %v2112 = vld [vmem:[%s411 + $0x1b0] sm:$0xff]
        %v2113 = vld [vmem:[%s411 + $0x1b8] sm:$0xff]
        %v2114 = vld [vmem:[%s411 + $0x1c0] sm:$0xff]
        %v2115 = vld [vmem:[%s411 + $0x1c8] sm:$0xff]
        %v2116 = vld [vmem:[%s411 + $0x1d0] sm:$0xff]
        %v2117 = vld [vmem:[%s411 + $0x1d8] sm:$0xff]
        %v2118 = vld [vmem:[%s411 + $0x1e0] sm:$0xff]
        %v2119 = vld [vmem:[%s411 + $0x1e8] sm:$0xff]
        %v2120 = vld [vmem:[%s411 + $0x1f0] sm:$0xff]
        %v2121 = vld [vmem:[%s411 + $0x1f8] sm:$0xff]
        %v2122 = vld [vmem:[%s411 + $0x200] sm:$0xff]
        %v2123 = vld [vmem:[%s411 + $0x208] sm:$0xff]
        %v2124 = vld [vmem:[%s411 + $0x210] sm:$0xff]
        %v2125 = vld [vmem:[%s411 + $0x218] sm:$0xff]
        %v2126 = vld [vmem:[%s411 + $0x220] sm:$0xff]
        %v2127 = vld [vmem:[%s411 + $0x228] sm:$0xff]
        %v2128 = vld [vmem:[%s411 + $0x230] sm:$0xff]
        %v2129 = vld [vmem:[%s411 + $0x238] sm:$0xff]
        %v2130 = vld [vmem:[%s411 + $0x240] sm:$0xff]
        %v2131 = vld [vmem:[%s411 + $0x248] sm:$0xff]
        %v2132 = vld [vmem:[%s411 + $0x250] sm:$0xff]
        %v2133 = vld [vmem:[%s411 + $0x258] sm:$0xff]
        %v2134 = vld [vmem:[%s411 + $0x260] sm:$0xff]
        %v2135 = vld [vmem:[%s411 + $0x268] sm:$0xff]
        %v2136 = vld [vmem:[%s411 + $0x270] sm:$0xff]
        %v2137 = vld [vmem:[%s411 + $0x278] sm:$0xff]
        %v2138 = vld [vmem:[%s411 + $0x280] sm:$0xff]
        %v2139 = vld [vmem:[%s411 + $0x288] sm:$0xff]
        %v2140 = vld [vmem:[%s411 + $0x290] sm:$0xff]
        %v2141 = vld [vmem:[%s411 + $0x298] sm:$0xff]
        %v2142 = vld [vmem:[%s411 + $0x2a0] sm:$0xff]
        %v2143 = vld [vmem:[%s411 + $0x2a8] sm:$0xff]
        %v2144 = vld [vmem:[%s411 + $0x2b0] sm:$0xff]
        %v2145 = vld [vmem:[%s411 + $0x2b8] sm:$0xff]
        %v2146 = vld [vmem:[%s411 + $0x2c0] sm:$0xff]
        %v2147 = vld [vmem:[%s411 + $0x2c8] sm:$0xff]
        %v2148 = vld [vmem:[%s411 + $0x2d0] sm:$0xff]
        %v2149 = vld [vmem:[%s411 + $0x2d8] sm:$0xff]
        %v2150 = vld [vmem:[%s411 + $0x2e0] sm:$0xff]
        %v2151 = vld [vmem:[%s411 + $0x2e8] sm:$0xff]
        %v2152 = vld [vmem:[%s411 + $0x2f0] sm:$0xff]
        %v2153 = vld [vmem:[%s411 + $0x2f8] sm:$0xff]
        %v2154 = vld [vmem:[%s411 + $0x300] sm:$0xff]
        %v2155 = vld [vmem:[%s411 + $0x308] sm:$0xff]
        %v2156 = vld [vmem:[%s411 + $0x310] sm:$0xff]
        %v2157 = vld [vmem:[%s411 + $0x318] sm:$0xff]
        %v2158 = vld [vmem:[%s411 + $0x320] sm:$0xff]
        %v2159 = vld [vmem:[%s411 + $0x328] sm:$0xff]
        %v2160 = vld [vmem:[%s411 + $0x330] sm:$0xff]
        %v2161 = vld [vmem:[%s411 + $0x338] sm:$0xff]
        %v2162 = vld [vmem:[%s411 + $0x340] sm:$0xff]
        %v2163 = vld [vmem:[%s411 + $0x348] sm:$0xff]
        %v2164 = vld [vmem:[%s411 + $0x350] sm:$0xff]
        %v2165 = vld [vmem:[%s411 + $0x358] sm:$0xff]
        %v2166 = vld [vmem:[%s411 + $0x360] sm:$0xff]
        %v2167 = vld [vmem:[%s411 + $0x368] sm:$0xff]
        %v2168 = vld [vmem:[%s411 + $0x370] sm:$0xff]
        %v2169 = vld [vmem:[%s411 + $0x378] sm:$0xff]
        %v2170 = vld [vmem:[%s411 + $0x380] sm:$0xff]
        %v2171 = vld [vmem:[%s411 + $0x388] sm:$0xff]
        %v2172 = vld [vmem:[%s411 + $0x390] sm:$0xff]
        %v2173 = vld [vmem:[%s411 + $0x398] sm:$0xff]
        %v2174 = vld [vmem:[%s411 + $0x3a0] sm:$0xff]
        %v2175 = vld [vmem:[%s411 + $0x3a8] sm:$0xff]
        %v2176 = vld [vmem:[%s411 + $0x3b0] sm:$0xff]
        %v2177 = vld [vmem:[%s411 + $0x3b8] sm:$0xff]
        %v2178 = vld [vmem:[%s411 + $0x3c0] sm:$0xff]
        %v2179 = vld [vmem:[%s411 + $0x3c8] sm:$0xff]
        %v2180 = vld [vmem:[%s411 + $0x3d0] sm:$0xff]
        %v2181 = vld [vmem:[%s411 + $0x3d8] sm:$0xff]
        %v2182 = vld [vmem:[%s411 + $0x3e0] sm:$0xff]
        %v2183 = vld [vmem:[%s411 + $0x3e8] sm:$0xff]
        %v2184 = vld [vmem:[%s411 + $0x3f0] sm:$0xff]
        %v2185 = vld [vmem:[%s411 + $0x3f8] sm:$0xff]
        %s2186 = scalar_lea.vmem %s496, 4
        %v2187 = vld [vmem:[%s2186] ss:$8 sm:$0xf]
        %v2189 = vperm.slane %v2187, 0
        %v2190 = vperm.slane %v2187, 1
        %v2191 = vperm.slane %v2187, 2
        %v2192 = vperm.slane %v2187, 3
        %v2325 = vunpack.c.l.b16 %v2058
        %v2326 = vunpack.c.h.b16 %v2058
        %v2327 = vunpack.c.l.b16 %v2059
        %v2328 = vunpack.c.h.b16 %v2059
        %v2329 = vunpack.c.l.b16 %v2060
        %v2330 = vunpack.c.h.b16 %v2060
        %v2331 = vunpack.c.l.b16 %v2061
        %v2332 = vunpack.c.h.b16 %v2061
        %v2333 = vunpack.c.l.b16 %v2062
        %v2334 = vunpack.c.h.b16 %v2062
        %v2335 = vunpack.c.l.b16 %v2063
        %v2336 = vunpack.c.h.b16 %v2063
        %v2337 = vunpack.c.l.b16 %v2064
        %v2338 = vunpack.c.h.b16 %v2064
        %v2339 = vunpack.c.l.b16 %v2065
        %v2340 = vunpack.c.h.b16 %v2065
        %v2341 = vunpack.c.l.b16 %v2066
        %v2342 = vunpack.c.h.b16 %v2066
        %v2343 = vunpack.c.l.b16 %v2067
        %v2344 = vunpack.c.h.b16 %v2067
        %v2345 = vunpack.c.l.b16 %v2068
        %v2346 = vunpack.c.h.b16 %v2068
        %v2347 = vunpack.c.l.b16 %v2069
        %v2348 = vunpack.c.h.b16 %v2069
        %v2349 = vunpack.c.l.b16 %v2070
        %v2350 = vunpack.c.h.b16 %v2070
        %v2351 = vunpack.c.l.b16 %v2071
        %v2352 = vunpack.c.h.b16 %v2071
        %v2353 = vunpack.c.l.b16 %v2072
        %v2354 = vunpack.c.h.b16 %v2072
        %v2355 = vunpack.c.l.b16 %v2073
        %v2356 = vunpack.c.h.b16 %v2073
        %v2357 = vunpack.c.l.b16 %v2074
        %v2358 = vunpack.c.h.b16 %v2074
        %v2359 = vunpack.c.l.b16 %v2075
        %v2360 = vunpack.c.h.b16 %v2075
        %v2361 = vunpack.c.l.b16 %v2076
        %v2362 = vunpack.c.h.b16 %v2076
        %v2363 = vunpack.c.l.b16 %v2077
        %v2364 = vunpack.c.h.b16 %v2077
        %v2365 = vunpack.c.l.b16 %v2078
        %v2366 = vunpack.c.h.b16 %v2078
        %v2367 = vunpack.c.l.b16 %v2079
        %v2368 = vunpack.c.h.b16 %v2079
        %v2369 = vunpack.c.l.b16 %v2080
        %v2370 = vunpack.c.h.b16 %v2080
        %v2371 = vunpack.c.l.b16 %v2081
        %v2372 = vunpack.c.h.b16 %v2081
        %v2373 = vunpack.c.l.b16 %v2082
        %v2374 = vunpack.c.h.b16 %v2082
        %v2375 = vunpack.c.l.b16 %v2083
        %v2376 = vunpack.c.h.b16 %v2083
        %v2377 = vunpack.c.l.b16 %v2084
        %v2378 = vunpack.c.h.b16 %v2084
        %v2379 = vunpack.c.l.b16 %v2085
        %v2380 = vunpack.c.h.b16 %v2085
        %v2381 = vunpack.c.l.b16 %v2086
        %v2382 = vunpack.c.h.b16 %v2086
        %v2383 = vunpack.c.l.b16 %v2087
        %v2384 = vunpack.c.h.b16 %v2087
        %v2385 = vunpack.c.l.b16 %v2088
        %v2386 = vunpack.c.h.b16 %v2088
        %v2387 = vunpack.c.l.b16 %v2089
        %v2388 = vunpack.c.h.b16 %v2089
        %v2389 = vunpack.c.l.b16 %v2090
        %v2390 = vunpack.c.h.b16 %v2090
        %v2391 = vunpack.c.l.b16 %v2091
        %v2392 = vunpack.c.h.b16 %v2091
        %v2393 = vunpack.c.l.b16 %v2092
        %v2394 = vunpack.c.h.b16 %v2092
        %v2395 = vunpack.c.l.b16 %v2093
        %v2396 = vunpack.c.h.b16 %v2093
        %v2397 = vunpack.c.l.b16 %v2094
        %v2398 = vunpack.c.h.b16 %v2094
        %v2399 = vunpack.c.l.b16 %v2095
        %v2400 = vunpack.c.h.b16 %v2095
        %v2401 = vunpack.c.l.b16 %v2096
        %v2402 = vunpack.c.h.b16 %v2096
        %v2403 = vunpack.c.l.b16 %v2097
        %v2404 = vunpack.c.h.b16 %v2097
        %v2405 = vunpack.c.l.b16 %v2098
        %v2406 = vunpack.c.h.b16 %v2098
        %v2407 = vunpack.c.l.b16 %v2099
        %v2408 = vunpack.c.h.b16 %v2099
        %v2409 = vunpack.c.l.b16 %v2100
        %v2410 = vunpack.c.h.b16 %v2100
        %v2411 = vunpack.c.l.b16 %v2101
        %v2412 = vunpack.c.h.b16 %v2101
        %v2413 = vunpack.c.l.b16 %v2102
        %v2414 = vunpack.c.h.b16 %v2102
        %v2415 = vunpack.c.l.b16 %v2103
        %v2416 = vunpack.c.h.b16 %v2103
        %v2417 = vunpack.c.l.b16 %v2104
        %v2418 = vunpack.c.h.b16 %v2104
        %v2419 = vunpack.c.l.b16 %v2105
        %v2420 = vunpack.c.h.b16 %v2105
        %v2421 = vunpack.c.l.b16 %v2106
        %v2422 = vunpack.c.h.b16 %v2106
        %v2423 = vunpack.c.l.b16 %v2107
        %v2424 = vunpack.c.h.b16 %v2107
        %v2425 = vunpack.c.l.b16 %v2108
        %v2426 = vunpack.c.h.b16 %v2108
        %v2427 = vunpack.c.l.b16 %v2109
        %v2428 = vunpack.c.h.b16 %v2109
        %v2429 = vunpack.c.l.b16 %v2110
        %v2430 = vunpack.c.h.b16 %v2110
        %v2431 = vunpack.c.l.b16 %v2111
        %v2432 = vunpack.c.h.b16 %v2111
        %v2433 = vunpack.c.l.b16 %v2112
        %v2434 = vunpack.c.h.b16 %v2112
        %v2435 = vunpack.c.l.b16 %v2113
        %v2436 = vunpack.c.h.b16 %v2113
        %v2437 = vunpack.c.l.b16 %v2114
        %v2438 = vunpack.c.h.b16 %v2114
        %v2439 = vunpack.c.l.b16 %v2115
        %v2440 = vunpack.c.h.b16 %v2115
        %v2441 = vunpack.c.l.b16 %v2116
        %v2442 = vunpack.c.h.b16 %v2116
        %v2443 = vunpack.c.l.b16 %v2117
        %v2444 = vunpack.c.h.b16 %v2117
        %v2445 = vunpack.c.l.b16 %v2118
        %v2446 = vunpack.c.h.b16 %v2118
        %v2447 = vunpack.c.l.b16 %v2119
        %v2448 = vunpack.c.h.b16 %v2119
        %v2449 = vunpack.c.l.b16 %v2120
        %v2450 = vunpack.c.h.b16 %v2120
        %v2451 = vunpack.c.l.b16 %v2121
        %v2452 = vunpack.c.h.b16 %v2121
        %v2453 = vunpack.c.l.b16 %v2122
        %v2454 = vunpack.c.h.b16 %v2122
        %v2455 = vunpack.c.l.b16 %v2123
        %v2456 = vunpack.c.h.b16 %v2123
        %v2457 = vunpack.c.l.b16 %v2124
        %v2458 = vunpack.c.h.b16 %v2124
        %v2459 = vunpack.c.l.b16 %v2125
        %v2460 = vunpack.c.h.b16 %v2125
        %v2461 = vunpack.c.l.b16 %v2126
        %v2462 = vunpack.c.h.b16 %v2126
        %v2463 = vunpack.c.l.b16 %v2127
        %v2464 = vunpack.c.h.b16 %v2127
        %v2465 = vunpack.c.l.b16 %v2128
        %v2466 = vunpack.c.h.b16 %v2128
        %v2467 = vunpack.c.l.b16 %v2129
        %v2468 = vunpack.c.h.b16 %v2129
        %v2469 = vunpack.c.l.b16 %v2130
        %v2470 = vunpack.c.h.b16 %v2130
        %v2471 = vunpack.c.l.b16 %v2131
        %v2472 = vunpack.c.h.b16 %v2131
        %v2473 = vunpack.c.l.b16 %v2132
        %v2474 = vunpack.c.h.b16 %v2132
        %v2475 = vunpack.c.l.b16 %v2133
        %v2476 = vunpack.c.h.b16 %v2133
        %v2477 = vunpack.c.l.b16 %v2134
        %v2478 = vunpack.c.h.b16 %v2134
        %v2479 = vunpack.c.l.b16 %v2135
        %v2480 = vunpack.c.h.b16 %v2135
        %v2481 = vunpack.c.l.b16 %v2136
        %v2482 = vunpack.c.h.b16 %v2136
        %v2483 = vunpack.c.l.b16 %v2137
        %v2484 = vunpack.c.h.b16 %v2137
        %v2485 = vunpack.c.l.b16 %v2138
        %v2486 = vunpack.c.h.b16 %v2138
        %v2487 = vunpack.c.l.b16 %v2139
        %v2488 = vunpack.c.h.b16 %v2139
        %v2489 = vunpack.c.l.b16 %v2140
        %v2490 = vunpack.c.h.b16 %v2140
        %v2491 = vunpack.c.l.b16 %v2141
        %v2492 = vunpack.c.h.b16 %v2141
        %v2493 = vunpack.c.l.b16 %v2142
        %v2494 = vunpack.c.h.b16 %v2142
        %v2495 = vunpack.c.l.b16 %v2143
        %v2496 = vunpack.c.h.b16 %v2143
        %v2497 = vunpack.c.l.b16 %v2144
        %v2498 = vunpack.c.h.b16 %v2144
        %v2499 = vunpack.c.l.b16 %v2145
        %v2500 = vunpack.c.h.b16 %v2145
        %v2501 = vunpack.c.l.b16 %v2146
        %v2502 = vunpack.c.h.b16 %v2146
        %v2503 = vunpack.c.l.b16 %v2147
        %v2504 = vunpack.c.h.b16 %v2147
        %v2505 = vunpack.c.l.b16 %v2148
        %v2506 = vunpack.c.h.b16 %v2148
        %v2507 = vunpack.c.l.b16 %v2149
        %v2508 = vunpack.c.h.b16 %v2149
        %v2509 = vunpack.c.l.b16 %v2150
        %v2510 = vunpack.c.h.b16 %v2150
        %v2511 = vunpack.c.l.b16 %v2151
        %v2512 = vunpack.c.h.b16 %v2151
        %v2513 = vunpack.c.l.b16 %v2152
        %v2514 = vunpack.c.h.b16 %v2152
        %v2515 = vunpack.c.l.b16 %v2153
        %v2516 = vunpack.c.h.b16 %v2153
        %v2517 = vunpack.c.l.b16 %v2154
        %v2518 = vunpack.c.h.b16 %v2154
        %v2519 = vunpack.c.l.b16 %v2155
        %v2520 = vunpack.c.h.b16 %v2155
        %v2521 = vunpack.c.l.b16 %v2156
        %v2522 = vunpack.c.h.b16 %v2156
        %v2523 = vunpack.c.l.b16 %v2157
        %v2524 = vunpack.c.h.b16 %v2157
        %v2525 = vunpack.c.l.b16 %v2158
        %v2526 = vunpack.c.h.b16 %v2158
        %v2527 = vunpack.c.l.b16 %v2159
        %v2528 = vunpack.c.h.b16 %v2159
        %v2529 = vunpack.c.l.b16 %v2160
        %v2530 = vunpack.c.h.b16 %v2160
        %v2531 = vunpack.c.l.b16 %v2161
        %v2532 = vunpack.c.h.b16 %v2161
        %v2533 = vunpack.c.l.b16 %v2162
        %v2534 = vunpack.c.h.b16 %v2162
        %v2535 = vunpack.c.l.b16 %v2163
        %v2536 = vunpack.c.h.b16 %v2163
        %v2537 = vunpack.c.l.b16 %v2164
        %v2538 = vunpack.c.h.b16 %v2164
        %v2539 = vunpack.c.l.b16 %v2165
        %v2540 = vunpack.c.h.b16 %v2165
        %v2541 = vunpack.c.l.b16 %v2166
        %v2542 = vunpack.c.h.b16 %v2166
        %v2543 = vunpack.c.l.b16 %v2167
        %v2544 = vunpack.c.h.b16 %v2167
        %v2545 = vunpack.c.l.b16 %v2168
        %v2546 = vunpack.c.h.b16 %v2168
        %v2547 = vunpack.c.l.b16 %v2169
        %v2548 = vunpack.c.h.b16 %v2169
        %v2549 = vunpack.c.l.b16 %v2170
        %v2550 = vunpack.c.h.b16 %v2170
        %v2551 = vunpack.c.l.b16 %v2171
        %v2552 = vunpack.c.h.b16 %v2171
        %v2553 = vunpack.c.l.b16 %v2172
        %v2554 = vunpack.c.h.b16 %v2172
        %v2555 = vunpack.c.l.b16 %v2173
        %v2556 = vunpack.c.h.b16 %v2173
        %v2557 = vunpack.c.l.b16 %v2174
        %v2558 = vunpack.c.h.b16 %v2174
        %v2559 = vunpack.c.l.b16 %v2175
        %v2560 = vunpack.c.h.b16 %v2175
        %v2561 = vunpack.c.l.b16 %v2176
        %v2562 = vunpack.c.h.b16 %v2176
        %v2563 = vunpack.c.l.b16 %v2177
        %v2564 = vunpack.c.h.b16 %v2177
        %v2565 = vunpack.c.l.b16 %v2178
        %v2566 = vunpack.c.h.b16 %v2178
        %v2567 = vunpack.c.l.b16 %v2179
        %v2568 = vunpack.c.h.b16 %v2179
        %v2569 = vunpack.c.l.b16 %v2180
        %v2570 = vunpack.c.h.b16 %v2180
        %v2571 = vunpack.c.l.b16 %v2181
        %v2572 = vunpack.c.h.b16 %v2181
        %v2573 = vunpack.c.l.b16 %v2182
        %v2574 = vunpack.c.h.b16 %v2182
        %v2575 = vunpack.c.l.b16 %v2183
        %v2576 = vunpack.c.h.b16 %v2183
        %v2577 = vunpack.c.l.b16 %v2184
        %v2578 = vunpack.c.h.b16 %v2184
        %v2579 = vunpack.c.l.b16 %v2185
        %v2580 = vunpack.c.h.b16 %v2185
        %v2581 = vpack.c.b16 %v2329, %v2325
        %v2582 = vpack.c.b16 %v2330, %v2326
        %v2583 = vpack.c.b16 %v2331, %v2327
        %v2584 = vpack.c.b16 %v2332, %v2328
        %v2585 = vpack.c.b16 %v2337, %v2333
        %v2586 = vpack.c.b16 %v2338, %v2334
        %v2587 = vpack.c.b16 %v2339, %v2335
        %v2588 = vpack.c.b16 %v2340, %v2336
        %v2589 = vpack.c.b16 %v2345, %v2341
        %v2590 = vpack.c.b16 %v2346, %v2342
        %v2591 = vpack.c.b16 %v2347, %v2343
        %v2592 = vpack.c.b16 %v2348, %v2344
        %v2593 = vpack.c.b16 %v2353, %v2349
        %v2594 = vpack.c.b16 %v2354, %v2350
        %v2595 = vpack.c.b16 %v2355, %v2351
        %v2596 = vpack.c.b16 %v2356, %v2352
        %v2597 = vpack.c.b16 %v2361, %v2357
        %v2598 = vpack.c.b16 %v2362, %v2358
        %v2599 = vpack.c.b16 %v2363, %v2359
        %v2600 = vpack.c.b16 %v2364, %v2360
        %v2601 = vpack.c.b16 %v2369, %v2365
        %v2602 = vpack.c.b16 %v2370, %v2366
        %v2603 = vpack.c.b16 %v2371, %v2367
        %v2604 = vpack.c.b16 %v2372, %v2368
        %v2605 = vpack.c.b16 %v2377, %v2373
        %v2606 = vpack.c.b16 %v2378, %v2374
        %v2607 = vpack.c.b16 %v2379, %v2375
        %v2608 = vpack.c.b16 %v2380, %v2376
        %v2609 = vpack.c.b16 %v2385, %v2381
        %v2610 = vpack.c.b16 %v2386, %v2382
        %v2611 = vpack.c.b16 %v2387, %v2383
        %v2612 = vpack.c.b16 %v2388, %v2384
        %v2613 = vpack.c.b16 %v2393, %v2389
        %v2614 = vpack.c.b16 %v2394, %v2390
        %v2615 = vpack.c.b16 %v2395, %v2391
        %v2616 = vpack.c.b16 %v2396, %v2392
        %v2617 = vpack.c.b16 %v2401, %v2397
        %v2618 = vpack.c.b16 %v2402, %v2398
        %v2619 = vpack.c.b16 %v2403, %v2399
        %v2620 = vpack.c.b16 %v2404, %v2400
        %v2621 = vpack.c.b16 %v2409, %v2405
        %v2622 = vpack.c.b16 %v2410, %v2406
        %v2623 = vpack.c.b16 %v2411, %v2407
        %v2624 = vpack.c.b16 %v2412, %v2408
        %v2625 = vpack.c.b16 %v2417, %v2413
        %v2626 = vpack.c.b16 %v2418, %v2414
        %v2627 = vpack.c.b16 %v2419, %v2415
        %v2628 = vpack.c.b16 %v2420, %v2416
        %v2629 = vpack.c.b16 %v2425, %v2421
        %v2630 = vpack.c.b16 %v2426, %v2422
        %v2631 = vpack.c.b16 %v2427, %v2423
        %v2632 = vpack.c.b16 %v2428, %v2424
        %v2633 = vpack.c.b16 %v2433, %v2429
        %v2634 = vpack.c.b16 %v2434, %v2430
        %v2635 = vpack.c.b16 %v2435, %v2431
        %v2636 = vpack.c.b16 %v2436, %v2432
        %v2637 = vpack.c.b16 %v2441, %v2437
        %v2638 = vpack.c.b16 %v2442, %v2438
        %v2639 = vpack.c.b16 %v2443, %v2439
        %v2640 = vpack.c.b16 %v2444, %v2440
        %v2641 = vpack.c.b16 %v2449, %v2445
        %v2642 = vpack.c.b16 %v2450, %v2446
        %v2643 = vpack.c.b16 %v2451, %v2447
        %v2644 = vpack.c.b16 %v2452, %v2448
        %v2645 = vpack.c.b16 %v2457, %v2453
        %v2646 = vpack.c.b16 %v2458, %v2454
        %v2647 = vpack.c.b16 %v2459, %v2455
        %v2648 = vpack.c.b16 %v2460, %v2456
        %v2649 = vpack.c.b16 %v2465, %v2461
        %v2650 = vpack.c.b16 %v2466, %v2462
        %v2651 = vpack.c.b16 %v2467, %v2463
        %v2652 = vpack.c.b16 %v2468, %v2464
        %v2653 = vpack.c.b16 %v2473, %v2469
        %v2654 = vpack.c.b16 %v2474, %v2470
        %v2655 = vpack.c.b16 %v2475, %v2471
        %v2656 = vpack.c.b16 %v2476, %v2472
        %v2657 = vpack.c.b16 %v2481, %v2477
        %v2658 = vpack.c.b16 %v2482, %v2478
        %v2659 = vpack.c.b16 %v2483, %v2479
        %v2660 = vpack.c.b16 %v2484, %v2480
        %v2661 = vpack.c.b16 %v2489, %v2485
        %v2662 = vpack.c.b16 %v2490, %v2486
        %v2663 = vpack.c.b16 %v2491, %v2487
        %v2664 = vpack.c.b16 %v2492, %v2488
        %v2665 = vpack.c.b16 %v2497, %v2493
        %v2666 = vpack.c.b16 %v2498, %v2494
        %v2667 = vpack.c.b16 %v2499, %v2495
        %v2668 = vpack.c.b16 %v2500, %v2496
        %v2669 = vpack.c.b16 %v2505, %v2501
        %v2670 = vpack.c.b16 %v2506, %v2502
        %v2671 = vpack.c.b16 %v2507, %v2503
        %v2672 = vpack.c.b16 %v2508, %v2504
        %v2673 = vpack.c.b16 %v2513, %v2509
        %v2674 = vpack.c.b16 %v2514, %v2510
        %v2675 = vpack.c.b16 %v2515, %v2511
        %v2676 = vpack.c.b16 %v2516, %v2512
        %v2677 = vpack.c.b16 %v2521, %v2517
        %v2678 = vpack.c.b16 %v2522, %v2518
        %v2679 = vpack.c.b16 %v2523, %v2519
        %v2680 = vpack.c.b16 %v2524, %v2520
        %v2681 = vpack.c.b16 %v2529, %v2525
        %v2682 = vpack.c.b16 %v2530, %v2526
        %v2683 = vpack.c.b16 %v2531, %v2527
        %v2684 = vpack.c.b16 %v2532, %v2528
        %v2685 = vpack.c.b16 %v2537, %v2533
        %v2686 = vpack.c.b16 %v2538, %v2534
        %v2687 = vpack.c.b16 %v2539, %v2535
        %v2688 = vpack.c.b16 %v2540, %v2536
        %v2689 = vpack.c.b16 %v2545, %v2541
        %v2690 = vpack.c.b16 %v2546, %v2542
        %v2691 = vpack.c.b16 %v2547, %v2543
        %v2692 = vpack.c.b16 %v2548, %v2544
        %v2693 = vpack.c.b16 %v2553, %v2549
        %v2694 = vpack.c.b16 %v2554, %v2550
        %v2695 = vpack.c.b16 %v2555, %v2551
        %v2696 = vpack.c.b16 %v2556, %v2552
        %v2697 = vpack.c.b16 %v2561, %v2557
        %v2698 = vpack.c.b16 %v2562, %v2558
        %v2699 = vpack.c.b16 %v2563, %v2559
        %v2700 = vpack.c.b16 %v2564, %v2560
        %v2701 = vpack.c.b16 %v2569, %v2565
        %v2702 = vpack.c.b16 %v2570, %v2566
        %v2703 = vpack.c.b16 %v2571, %v2567
        %v2704 = vpack.c.b16 %v2572, %v2568
        %v2705 = vpack.c.b16 %v2577, %v2573
        %v2706 = vpack.c.b16 %v2578, %v2574
        %v2707 = vpack.c.b16 %v2579, %v2575
        %v2708 = vpack.c.b16 %v2580, %v2576
        %2837 = vmatpush.bf16.msra.mxu0 %v2609
        %2838 = vmatpush.bf16.msra.mxu0 %v2605
        %2839 = vmatpush.bf16.msra.mxu0 %v2601
        %2840 = vmatpush.bf16.msra.mxu0 %v2597
        %2841 = vmatpush.bf16.msra.mxu0 %v2593
        %2842 = vmatpush.bf16.msra.mxu0 %v2589
        %2843 = vmatpush.bf16.msra.mxu0 %v2585
        %2844 = vmatpush.bf16.msra.mxu0 %v2581
        %2845 = vmatmul.bf16.gmra.mxu0 %v2054
        %v2846 = vpop.f32.mrf.mxu0
        %v2847 = vadd.f32 %v2189, %v2846
        %v2848 = vpop.f32.mrf.mxu0
        %2849 = vdwg.mxu0
        %2850 = vmatpush.bf16.msra.mxu0 %v2641
        %2851 = vmatpush.bf16.msra.mxu0 %v2637
        %2852 = vmatpush.bf16.msra.mxu0 %v2633
        %2853 = vmatpush.bf16.msra.mxu0 %v2629
        %2854 = vmatpush.bf16.msra.mxu0 %v2625
        %2855 = vmatpush.bf16.msra.mxu0 %v2621
        %2856 = vmatpush.bf16.msra.mxu0 %v2617
        %2857 = vmatpush.bf16.msra.mxu0 %v2613
        %2858 = vmatmul.bf16.gmra.mxu0 %v2055
        %v2859 = vpop.f32.mrf.mxu0
        %v2860 = vadd.f32 %v2847, %v2859
        %v2861 = vpop.f32.mrf.mxu0
        %2862 = vdwg.mxu0
        %2863 = vmatpush.bf16.msra.mxu0 %v2673
        %2864 = vmatpush.bf16.msra.mxu0 %v2669
        %2865 = vmatpush.bf16.msra.mxu0 %v2665
        %2866 = vmatpush.bf16.msra.mxu0 %v2661
        %2867 = vmatpush.bf16.msra.mxu0 %v2657
        %2868 = vmatpush.bf16.msra.mxu0 %v2653
        %2869 = vmatpush.bf16.msra.mxu0 %v2649
        %2870 = vmatpush.bf16.msra.mxu0 %v2645
        %2871 = vmatmul.bf16.gmra.mxu0 %v2056
        %v2872 = vpop.f32.mrf.mxu0
        %v2873 = vadd.f32 %v2860, %v2872
        %v2874 = vpop.f32.mrf.mxu0
        %2875 = vdwg.mxu0
        %2876 = vmatpush.bf16.msra.mxu0 %v2705
        %2877 = vmatpush.bf16.msra.mxu0 %v2701
        %2878 = vmatpush.bf16.msra.mxu0 %v2697
        %2879 = vmatpush.bf16.msra.mxu0 %v2693
        %2880 = vmatpush.bf16.msra.mxu0 %v2689
        %2881 = vmatpush.bf16.msra.mxu0 %v2685
        %2882 = vmatpush.bf16.msra.mxu0 %v2681
        %2883 = vmatpush.bf16.msra.mxu0 %v2677
        %2884 = vmatmul.bf16.gmra.mxu0 %v2057
        %v2885 = vpop.f32.mrf.mxu0
        %v2886 = vadd.f32 %v2873, %v2885
        %v2887 = vpop.f32.mrf.mxu0
        %2888 = vdwg.mxu0
        %2889 = vmatpush.bf16.msra.mxu0 %v2610
        %2890 = vmatpush.bf16.msra.mxu0 %v2606
        %2891 = vmatpush.bf16.msra.mxu0 %v2602
        %2892 = vmatpush.bf16.msra.mxu0 %v2598
        %2893 = vmatpush.bf16.msra.mxu0 %v2594
        %2894 = vmatpush.bf16.msra.mxu0 %v2590
        %2895 = vmatpush.bf16.msra.mxu0 %v2586
        %2896 = vmatpush.bf16.msra.mxu0 %v2582
        %2897 = vmatmul.bf16.gmra.mxu0 %v2054
        %v2898 = vpop.f32.mrf.mxu0
        %v2899 = vadd.f32 %v2190, %v2898
        %v2900 = vpop.f32.mrf.mxu0
        %2901 = vdwg.mxu0
        %2902 = vmatpush.bf16.msra.mxu0 %v2642
        %2903 = vmatpush.bf16.msra.mxu0 %v2638
        %2904 = vmatpush.bf16.msra.mxu0 %v2634
        %2905 = vmatpush.bf16.msra.mxu0 %v2630
        %2906 = vmatpush.bf16.msra.mxu0 %v2626
        %2907 = vmatpush.bf16.msra.mxu0 %v2622
        %2908 = vmatpush.bf16.msra.mxu0 %v2618
        %2909 = vmatpush.bf16.msra.mxu0 %v2614
        %2910 = vmatmul.bf16.gmra.mxu0 %v2055
        %v2911 = vpop.f32.mrf.mxu0
        %v2912 = vadd.f32 %v2899, %v2911
        %v2913 = vpop.f32.mrf.mxu0
        %2914 = vdwg.mxu0
        %2915 = vmatpush.bf16.msra.mxu0 %v2674
        %2916 = vmatpush.bf16.msra.mxu0 %v2670
        %2917 = vmatpush.bf16.msra.mxu0 %v2666
        %2918 = vmatpush.bf16.msra.mxu0 %v2662
        %2919 = vmatpush.bf16.msra.mxu0 %v2658
        %2920 = vmatpush.bf16.msra.mxu0 %v2654
        %2921 = vmatpush.bf16.msra.mxu0 %v2650
        %2922 = vmatpush.bf16.msra.mxu0 %v2646
        %2923 = vmatmul.bf16.gmra.mxu0 %v2056
        %v2924 = vpop.f32.mrf.mxu0
        %v2925 = vadd.f32 %v2912, %v2924
        %v2926 = vpop.f32.mrf.mxu0
        %2927 = vdwg.mxu0
        %2928 = vmatpush.bf16.msra.mxu0 %v2706
        %2929 = vmatpush.bf16.msra.mxu0 %v2702
        %2930 = vmatpush.bf16.msra.mxu0 %v2698
        %2931 = vmatpush.bf16.msra.mxu0 %v2694
        %2932 = vmatpush.bf16.msra.mxu0 %v2690
        %2933 = vmatpush.bf16.msra.mxu0 %v2686
        %2934 = vmatpush.bf16.msra.mxu0 %v2682
        %2935 = vmatpush.bf16.msra.mxu0 %v2678
        %2936 = vmatmul.bf16.gmra.mxu0 %v2057
        %v2937 = vpop.f32.mrf.mxu0
        %v2938 = vadd.f32 %v2925, %v2937
        %v2939 = vpop.f32.mrf.mxu0
        %2940 = vdwg.mxu0
        %2941 = vmatpush.bf16.msra.mxu0 %v2611
        %2942 = vmatpush.bf16.msra.mxu0 %v2607
        %2943 = vmatpush.bf16.msra.mxu0 %v2603
        %2944 = vmatpush.bf16.msra.mxu0 %v2599
        %2945 = vmatpush.bf16.msra.mxu0 %v2595
        %2946 = vmatpush.bf16.msra.mxu0 %v2591
        %2947 = vmatpush.bf16.msra.mxu0 %v2587
        %2948 = vmatpush.bf16.msra.mxu0 %v2583
        %2949 = vmatmul.bf16.gmra.mxu0 %v2054
        %v2950 = vpop.f32.mrf.mxu0
        %v2951 = vadd.f32 %v2191, %v2950
        %v2952 = vpop.f32.mrf.mxu0
        %2953 = vdwg.mxu0
        %2954 = vmatpush.bf16.msra.mxu0 %v2643
        %2955 = vmatpush.bf16.msra.mxu0 %v2639
        %2956 = vmatpush.bf16.msra.mxu0 %v2635
        %2957 = vmatpush.bf16.msra.mxu0 %v2631
        %2958 = vmatpush.bf16.msra.mxu0 %v2627
        %2959 = vmatpush.bf16.msra.mxu0 %v2623
        %2960 = vmatpush.bf16.msra.mxu0 %v2619
        %2961 = vmatpush.bf16.msra.mxu0 %v2615
        %2962 = vmatmul.bf16.gmra.mxu0 %v2055
        %v2963 = vpop.f32.mrf.mxu0
        %v2964 = vadd.f32 %v2951, %v2963
        %v2965 = vpop.f32.mrf.mxu0
        %2966 = vdwg.mxu0
        %2967 = vmatpush.bf16.msra.mxu0 %v2675
        %2968 = vmatpush.bf16.msra.mxu0 %v2671
        %2969 = vmatpush.bf16.msra.mxu0 %v2667
        %2970 = vmatpush.bf16.msra.mxu0 %v2663
        %2971 = vmatpush.bf16.msra.mxu0 %v2659
        %2972 = vmatpush.bf16.msra.mxu0 %v2655
        %2973 = vmatpush.bf16.msra.mxu0 %v2651
        %2974 = vmatpush.bf16.msra.mxu0 %v2647
        %2975 = vmatmul.bf16.gmra.mxu0 %v2056
        %v2976 = vpop.f32.mrf.mxu0
        %v2977 = vadd.f32 %v2964, %v2976
        %v2978 = vpop.f32.mrf.mxu0
        %2979 = vdwg.mxu0
        %2980 = vmatpush.bf16.msra.mxu0 %v2707
        %2981 = vmatpush.bf16.msra.mxu0 %v2703
        %2982 = vmatpush.bf16.msra.mxu0 %v2699
        %2983 = vmatpush.bf16.msra.mxu0 %v2695
        %2984 = vmatpush.bf16.msra.mxu0 %v2691
        %2985 = vmatpush.bf16.msra.mxu0 %v2687
        %2986 = vmatpush.bf16.msra.mxu0 %v2683
        %2987 = vmatpush.bf16.msra.mxu0 %v2679
        %2988 = vmatmul.bf16.gmra.mxu0 %v2057
        %v2989 = vpop.f32.mrf.mxu0
        %v2990 = vadd.f32 %v2977, %v2989
        %v2991 = vpop.f32.mrf.mxu0
        %2992 = vdwg.mxu0
        %2993 = vmatpush.bf16.msra.mxu0 %v2612
        %2994 = vmatpush.bf16.msra.mxu0 %v2608
        %2995 = vmatpush.bf16.msra.mxu0 %v2604
        %2996 = vmatpush.bf16.msra.mxu0 %v2600
        %2997 = vmatpush.bf16.msra.mxu0 %v2596
        %2998 = vmatpush.bf16.msra.mxu0 %v2592
        %2999 = vmatpush.bf16.msra.mxu0 %v2588
        %3000 = vmatpush.bf16.msra.mxu0 %v2584
        %3001 = vmatmul.bf16.gmra.mxu0 %v2054
        %v3002 = vpop.f32.mrf.mxu0
        %v3003 = vadd.f32 %v2192, %v3002
        %v3004 = vpop.f32.mrf.mxu0
        %3005 = vdwg.mxu0
        %3006 = vmatpush.bf16.msra.mxu0 %v2644
        %3007 = vmatpush.bf16.msra.mxu0 %v2640
        %3008 = vmatpush.bf16.msra.mxu0 %v2636
        %3009 = vmatpush.bf16.msra.mxu0 %v2632
        %3010 = vmatpush.bf16.msra.mxu0 %v2628
        %3011 = vmatpush.bf16.msra.mxu0 %v2624
        %3012 = vmatpush.bf16.msra.mxu0 %v2620
        %3013 = vmatpush.bf16.msra.mxu0 %v2616
        %3014 = vmatmul.bf16.gmra.mxu0 %v2055
        %v3015 = vpop.f32.mrf.mxu0
        %v3016 = vadd.f32 %v3003, %v3015
        %v3017 = vpop.f32.mrf.mxu0
        %3018 = vdwg.mxu0
        %3019 = vmatpush.bf16.msra.mxu0 %v2676
        %3020 = vmatpush.bf16.msra.mxu0 %v2672
        %3021 = vmatpush.bf16.msra.mxu0 %v2668
        %3022 = vmatpush.bf16.msra.mxu0 %v2664
        %3023 = vmatpush.bf16.msra.mxu0 %v2660
        %3024 = vmatpush.bf16.msra.mxu0 %v2656
        %3025 = vmatpush.bf16.msra.mxu0 %v2652
        %3026 = vmatpush.bf16.msra.mxu0 %v2648
        %3027 = vmatmul.bf16.gmra.mxu0 %v2056
        %v3028 = vpop.f32.mrf.mxu0
        %v3029 = vadd.f32 %v3016, %v3028
        %v3030 = vpop.f32.mrf.mxu0
        %3031 = vdwg.mxu0
        %3032 = vmatpush.bf16.msra.mxu0 %v2708
        %3033 = vmatpush.bf16.msra.mxu0 %v2704
        %3034 = vmatpush.bf16.msra.mxu0 %v2700
        %3035 = vmatpush.bf16.msra.mxu0 %v2696
        %3036 = vmatpush.bf16.msra.mxu0 %v2692
        %3037 = vmatpush.bf16.msra.mxu0 %v2688
        %3038 = vmatpush.bf16.msra.mxu0 %v2684
        %3039 = vmatpush.bf16.msra.mxu0 %v2680
        %3040 = vmatmul.bf16.gmra.mxu0 %v2057
        %v3041 = vpop.f32.mrf.mxu0
        %v3042 = vadd.f32 %v3029, %v3041
        %v3043 = vpop.f32.mrf.mxu0
        %3044 = vdwg.mxu0
        %v3045 = vxor.u32 %v2886, 2147483648
        %v3046 = vxor.u32 %v2938, 2147483648
        %v3047 = vxor.u32 %v2990, 2147483648
        %v3048 = vxor.u32 %v3042, 2147483648
        %v3049 = vmul.f32 %v3045, 1.442695
        %v3050 = vpow.pop %v3049
        %v3051 = vmul.f32 %v3046, 1.442695
        %v3052 = vpow.pop %v3051
        %v3053 = vmul.f32 %v3047, 1.442695
        %v3054 = vpow.pop %v3053
        %v3055 = vmul.f32 %v3048, 1.442695
        %v3056 = vpow.pop %v3055
        %v3057 = vadd.f32 %v3050, 1.0
        %v3058 = vadd.f32 %v3052, 1.0
        %v3059 = vadd.f32 %v3054, 1.0
        %v3060 = vadd.f32 %v3056, 1.0
        %v3061 = vrcp.pop %v3057
        %v3062 = vmul.f32 %v3057, %v3061
        %v3063 = vsub.f32 1.0, %v3062
        %v3064 = vmul.f32 %v3061, %v3063
        %v3065 = vadd.f32 %v3061, %v3064
        %vm3066 = vweird.f32 %v3057
        %vm3067 = vweird.f32 %v3061
        %vm3068 = vmor %vm3066, %vm3067
        %v3069 = vsel %vm3068, %v3061, %v3065
        %v3070 = vand.u32 2147483647, %v3057
        %vm3071 = vcmp.eq.f32.partialorder %v3070, 8.507059e+37
        %v3072 = vand.u32 %v3057, 2147483648
        %v3073 = vor.u32 1.1754944e-38, %v3072
        %v3074 = vsel %vm3071, %v3073, %v3069
        %v3075 = vmul.f32 1.0, %v3074
        %v3076 = vrcp.pop %v3058
        %v3077 = vmul.f32 %v3058, %v3076
        %v3078 = vsub.f32 1.0, %v3077
        %v3079 = vmul.f32 %v3076, %v3078
        %v3080 = vadd.f32 %v3076, %v3079
        %vm3081 = vweird.f32 %v3058
        %vm3082 = vweird.f32 %v3076
        %vm3083 = vmor %vm3081, %vm3082
        %v3084 = vsel %vm3083, %v3076, %v3080
        %v3085 = vand.u32 2147483647, %v3058
        %vm3086 = vcmp.eq.f32.partialorder %v3085, 8.507059e+37
        %v3087 = vand.u32 %v3058, 2147483648
        %v3088 = vor.u32 1.1754944e-38, %v3087
        %v3089 = vsel %vm3086, %v3088, %v3084
        %v3090 = vmul.f32 1.0, %v3089
        %v3091 = vrcp.pop %v3059
        %v3092 = vmul.f32 %v3059, %v3091
        %v3093 = vsub.f32 1.0, %v3092
        %v3094 = vmul.f32 %v3091, %v3093
        %v3095 = vadd.f32 %v3091, %v3094
        %vm3096 = vweird.f32 %v3059
        %vm3097 = vweird.f32 %v3091
        %vm3098 = vmor %vm3096, %vm3097
        %v3099 = vsel %vm3098, %v3091, %v3095
        %v3100 = vand.u32 2147483647, %v3059
        %vm3101 = vcmp.eq.f32.partialorder %v3100, 8.507059e+37
        %v3102 = vand.u32 %v3059, 2147483648
        %v3103 = vor.u32 1.1754944e-38, %v3102
        %v3104 = vsel %vm3101, %v3103, %v3099
        %v3105 = vmul.f32 1.0, %v3104
        %v3106 = vrcp.pop %v3060
        %v3107 = vmul.f32 %v3060, %v3106
        %v3108 = vsub.f32 1.0, %v3107
        %v3109 = vmul.f32 %v3106, %v3108
        %v3110 = vadd.f32 %v3106, %v3109
        %vm3111 = vweird.f32 %v3060
        %vm3112 = vweird.f32 %v3106
        %vm3113 = vmor %vm3111, %vm3112
        %v3114 = vsel %vm3113, %v3106, %v3110
        %v3115 = vand.u32 2147483647, %v3060
        %vm3116 = vcmp.eq.f32.partialorder %v3115, 8.507059e+37
        %v3117 = vand.u32 %v3060, 2147483648
        %v3118 = vor.u32 1.1754944e-38, %v3117
        %v3119 = vsel %vm3116, %v3118, %v3114
        %v3120 = vmul.f32 1.0, %v3119
        %v3121 = vmul.f32 %v2050, %v3075
        %v3122 = vmul.f32 %v2051, %v3090
        %v3123 = vmul.f32 %v2052, %v3105
        %v3124 = vmul.f32 %v2053, %v3120
        %3125 = vst [vmem:[%s505] sm:$0xff] %v3121
        %3126 = vst [vmem:[%s505 + $0x8] sm:$0xff] %v3122
        %3127 = vst [vmem:[%s505 + $0x10] sm:$0xff] %v3123
        %3128 = vst [vmem:[%s505 + $0x18] sm:$0xff] %v3124
        %v3129 = vsub.f32 %v2050, %v3121
        %v3130 = vsub.f32 %v2051, %v3122
        %v3131 = vsub.f32 %v2052, %v3123
        %v3132 = vsub.f32 %v2053, %v3124
        %3133 = vst [vmem:[%s510] sm:$0xff] %v3129
        %3134 = vst [vmem:[%s510 + $0x8] sm:$0xff] %v3130
        %3135 = vst [vmem:[%s510 + $0x10] sm:$0xff] %v3131
        %3136 = vst [vmem:[%s510 + $0x18] sm:$0xff] %v3132
        %s3137 = scalar_lea.vmem %s496, 5
        %v3138 = vld [vmem:[%s3137] ss:$8 sm:$0xf]
        %v3139 = vpack.c.bf16 %v3121, %v3121
        %v3140 = vpack.c.bf16 %v3122, %v3122
        %v3141 = vpack.c.bf16 %v3123, %v3123
        %v3142 = vpack.c.bf16 %v3124, %v3124
        %v3143 = vld [vmem:[%s421] sm:$0xf]
        %v3144 = vld [vmem:[%s421 + $0x4] sm:$0xf]
        %v3145 = vld [vmem:[%s421 + $0x8] sm:$0xf]
        %v3146 = vld [vmem:[%s421 + $0xc] sm:$0xf]
        %v3147 = vld [vmem:[%s421 + $0x10] sm:$0xf]
        %v3148 = vld [vmem:[%s421 + $0x14] sm:$0xf]
        %v3149 = vld [vmem:[%s421 + $0x18] sm:$0xf]
        %v3150 = vld [vmem:[%s421 + $0x1c] sm:$0xf]
        %v3151 = vld [vmem:[%s421 + $0x20] sm:$0xf]
        %v3152 = vld [vmem:[%s421 + $0x24] sm:$0xf]
        %v3153 = vld [vmem:[%s421 + $0x28] sm:$0xf]
        %v3154 = vld [vmem:[%s421 + $0x2c] sm:$0xf]
        %v3155 = vld [vmem:[%s421 + $0x30] sm:$0xf]
        %v3156 = vld [vmem:[%s421 + $0x34] sm:$0xf]
        %v3157 = vld [vmem:[%s421 + $0x38] sm:$0xf]
        %v3158 = vld [vmem:[%s421 + $0x3c] sm:$0xf]
        %v3159 = vld [vmem:[%s421 + $0x40] sm:$0xf]
        %v3160 = vld [vmem:[%s421 + $0x44] sm:$0xf]
        %v3161 = vld [vmem:[%s421 + $0x48] sm:$0xf]
        %v3162 = vld [vmem:[%s421 + $0x4c] sm:$0xf]
        %v3163 = vld [vmem:[%s421 + $0x50] sm:$0xf]
        %v3164 = vld [vmem:[%s421 + $0x54] sm:$0xf]
        %v3165 = vld [vmem:[%s421 + $0x58] sm:$0xf]
        %v3166 = vld [vmem:[%s421 + $0x5c] sm:$0xf]
        %v3167 = vld [vmem:[%s421 + $0x60] sm:$0xf]
        %v3168 = vld [vmem:[%s421 + $0x64] sm:$0xf]
        %v3169 = vld [vmem:[%s421 + $0x68] sm:$0xf]
        %v3170 = vld [vmem:[%s421 + $0x6c] sm:$0xf]
        %v3171 = vld [vmem:[%s421 + $0x70] sm:$0xf]
        %v3172 = vld [vmem:[%s421 + $0x74] sm:$0xf]
        %v3173 = vld [vmem:[%s421 + $0x78] sm:$0xf]
        %v3174 = vld [vmem:[%s421 + $0x7c] sm:$0xf]
        %v3175 = vld [vmem:[%s421 + $0x80] sm:$0xf]
        %v3176 = vld [vmem:[%s421 + $0x84] sm:$0xf]
        %v3177 = vld [vmem:[%s421 + $0x88] sm:$0xf]
        %v3178 = vld [vmem:[%s421 + $0x8c] sm:$0xf]
        %v3179 = vld [vmem:[%s421 + $0x90] sm:$0xf]
        %v3180 = vld [vmem:[%s421 + $0x94] sm:$0xf]
        %v3181 = vld [vmem:[%s421 + $0x98] sm:$0xf]
        %v3182 = vld [vmem:[%s421 + $0x9c] sm:$0xf]
        %v3183 = vld [vmem:[%s421 + $0xa0] sm:$0xf]
        %v3184 = vld [vmem:[%s421 + $0xa4] sm:$0xf]
        %v3185 = vld [vmem:[%s421 + $0xa8] sm:$0xf]
        %v3186 = vld [vmem:[%s421 + $0xac] sm:$0xf]
        %v3187 = vld [vmem:[%s421 + $0xb0] sm:$0xf]
        %v3188 = vld [vmem:[%s421 + $0xb4] sm:$0xf]
        %v3189 = vld [vmem:[%s421 + $0xb8] sm:$0xf]
        %v3190 = vld [vmem:[%s421 + $0xbc] sm:$0xf]
        %v3191 = vld [vmem:[%s421 + $0xc0] sm:$0xf]
        %v3192 = vld [vmem:[%s421 + $0xc4] sm:$0xf]
        %v3193 = vld [vmem:[%s421 + $0xc8] sm:$0xf]
        %v3194 = vld [vmem:[%s421 + $0xcc] sm:$0xf]
        %v3195 = vld [vmem:[%s421 + $0xd0] sm:$0xf]
        %v3196 = vld [vmem:[%s421 + $0xd4] sm:$0xf]
        %v3197 = vld [vmem:[%s421 + $0xd8] sm:$0xf]
        %v3198 = vld [vmem:[%s421 + $0xdc] sm:$0xf]
        %v3199 = vld [vmem:[%s421 + $0xe0] sm:$0xf]
        %v3200 = vld [vmem:[%s421 + $0xe4] sm:$0xf]
        %v3201 = vld [vmem:[%s421 + $0xe8] sm:$0xf]
        %v3202 = vld [vmem:[%s421 + $0xec] sm:$0xf]
        %v3203 = vld [vmem:[%s421 + $0xf0] sm:$0xf]
        %v3204 = vld [vmem:[%s421 + $0xf4] sm:$0xf]
        %v3205 = vld [vmem:[%s421 + $0xf8] sm:$0xf]
        %v3206 = vld [vmem:[%s421 + $0xfc] sm:$0xf]
        %v3208 = vperm.slane %v3138, 0
        %v3274 = vunpack.c.l.b16 %v3143
        %v3275 = vunpack.c.l.b16 %v3144
        %v3276 = vunpack.c.l.b16 %v3145
        %v3277 = vunpack.c.l.b16 %v3146
        %v3278 = vunpack.c.l.b16 %v3147
        %v3279 = vunpack.c.l.b16 %v3148
        %v3280 = vunpack.c.l.b16 %v3149
        %v3281 = vunpack.c.l.b16 %v3150
        %v3282 = vunpack.c.l.b16 %v3151
        %v3283 = vunpack.c.l.b16 %v3152
        %v3284 = vunpack.c.l.b16 %v3153
        %v3285 = vunpack.c.l.b16 %v3154
        %v3286 = vunpack.c.l.b16 %v3155
        %v3287 = vunpack.c.l.b16 %v3156
        %v3288 = vunpack.c.l.b16 %v3157
        %v3289 = vunpack.c.l.b16 %v3158
        %v3290 = vunpack.c.l.b16 %v3159
        %v3291 = vunpack.c.l.b16 %v3160
        %v3292 = vunpack.c.l.b16 %v3161
        %v3293 = vunpack.c.l.b16 %v3162
        %v3294 = vunpack.c.l.b16 %v3163
        %v3295 = vunpack.c.l.b16 %v3164
        %v3296 = vunpack.c.l.b16 %v3165
        %v3297 = vunpack.c.l.b16 %v3166
        %v3298 = vunpack.c.l.b16 %v3167
        %v3299 = vunpack.c.l.b16 %v3168
        %v3300 = vunpack.c.l.b16 %v3169
        %v3301 = vunpack.c.l.b16 %v3170
        %v3302 = vunpack.c.l.b16 %v3171
        %v3303 = vunpack.c.l.b16 %v3172
        %v3304 = vunpack.c.l.b16 %v3173
        %v3305 = vunpack.c.l.b16 %v3174
        %v3306 = vunpack.c.l.b16 %v3175
        %v3307 = vunpack.c.l.b16 %v3176
        %v3308 = vunpack.c.l.b16 %v3177
        %v3309 = vunpack.c.l.b16 %v3178
        %v3310 = vunpack.c.l.b16 %v3179
        %v3311 = vunpack.c.l.b16 %v3180
        %v3312 = vunpack.c.l.b16 %v3181
        %v3313 = vunpack.c.l.b16 %v3182
        %v3314 = vunpack.c.l.b16 %v3183
        %v3315 = vunpack.c.l.b16 %v3184
        %v3316 = vunpack.c.l.b16 %v3185
        %v3317 = vunpack.c.l.b16 %v3186
        %v3318 = vunpack.c.l.b16 %v3187
        %v3319 = vunpack.c.l.b16 %v3188
        %v3320 = vunpack.c.l.b16 %v3189
        %v3321 = vunpack.c.l.b16 %v3190
        %v3322 = vunpack.c.l.b16 %v3191
        %v3323 = vunpack.c.l.b16 %v3192
        %v3324 = vunpack.c.l.b16 %v3193
        %v3325 = vunpack.c.l.b16 %v3194
        %v3326 = vunpack.c.l.b16 %v3195
        %v3327 = vunpack.c.l.b16 %v3196
        %v3328 = vunpack.c.l.b16 %v3197
        %v3329 = vunpack.c.l.b16 %v3198
        %v3330 = vunpack.c.l.b16 %v3199
        %v3331 = vunpack.c.l.b16 %v3200
        %v3332 = vunpack.c.l.b16 %v3201
        %v3333 = vunpack.c.l.b16 %v3202
        %v3334 = vunpack.c.l.b16 %v3203
        %v3335 = vunpack.c.l.b16 %v3204
        %v3336 = vunpack.c.l.b16 %v3205
        %v3337 = vunpack.c.l.b16 %v3206
        %v3338 = vpack.c.b16 %v3275, %v3274
        %v3339 = vpack.c.b16 %v3277, %v3276
        %v3340 = vpack.c.b16 %v3279, %v3278
        %v3341 = vpack.c.b16 %v3281, %v3280
        %v3342 = vpack.c.b16 %v3283, %v3282
        %v3343 = vpack.c.b16 %v3285, %v3284
        %v3344 = vpack.c.b16 %v3287, %v3286
        %v3345 = vpack.c.b16 %v3289, %v3288
        %v3346 = vpack.c.b16 %v3291, %v3290
        %v3347 = vpack.c.b16 %v3293, %v3292
        %v3348 = vpack.c.b16 %v3295, %v3294
        %v3349 = vpack.c.b16 %v3297, %v3296
        %v3350 = vpack.c.b16 %v3299, %v3298
        %v3351 = vpack.c.b16 %v3301, %v3300
        %v3352 = vpack.c.b16 %v3303, %v3302
        %v3353 = vpack.c.b16 %v3305, %v3304
        %v3354 = vpack.c.b16 %v3307, %v3306
        %v3355 = vpack.c.b16 %v3309, %v3308
        %v3356 = vpack.c.b16 %v3311, %v3310
        %v3357 = vpack.c.b16 %v3313, %v3312
        %v3358 = vpack.c.b16 %v3315, %v3314
        %v3359 = vpack.c.b16 %v3317, %v3316
        %v3360 = vpack.c.b16 %v3319, %v3318
        %v3361 = vpack.c.b16 %v3321, %v3320
        %v3362 = vpack.c.b16 %v3323, %v3322
        %v3363 = vpack.c.b16 %v3325, %v3324
        %v3364 = vpack.c.b16 %v3327, %v3326
        %v3365 = vpack.c.b16 %v3329, %v3328
        %v3366 = vpack.c.b16 %v3331, %v3330
        %v3367 = vpack.c.b16 %v3333, %v3332
        %v3368 = vpack.c.b16 %v3335, %v3334
        %v3369 = vpack.c.b16 %v3337, %v3336
        %3402 = vmatpush.bf16.msra.mxu0 %v3345
        %3403 = vmatpush.bf16.msra.mxu0 %v3344
        %3404 = vmatpush.bf16.msra.mxu0 %v3343
        %3405 = vmatpush.bf16.msra.mxu0 %v3342
        %3406 = vmatpush.bf16.msra.mxu0 %v3341
        %3407 = vmatpush.bf16.msra.mxu0 %v3340
        %3408 = vmatpush.bf16.msra.mxu0 %v3339
        %3409 = vmatpush.bf16.msra.mxu0 %v3338
        %3410 = vmatmul.bf16.gmra.mxu0 %v3139
        %v3411 = vpop.f32.mrf.mxu0
        %v3412 = vadd.f32 %v3208, %v3411
        %v3413 = vpop.f32.mrf.mxu0
        %3414 = vdwg.mxu0
        %3415 = vmatpush.bf16.msra.mxu0 %v3353
        %3416 = vmatpush.bf16.msra.mxu0 %v3352
        %3417 = vmatpush.bf16.msra.mxu0 %v3351
        %3418 = vmatpush.bf16.msra.mxu0 %v3350
        %3419 = vmatpush.bf16.msra.mxu0 %v3349
        %3420 = vmatpush.bf16.msra.mxu0 %v3348
        %3421 = vmatpush.bf16.msra.mxu0 %v3347
        %3422 = vmatpush.bf16.msra.mxu0 %v3346
        %3423 = vmatmul.bf16.gmra.mxu0 %v3140
        %v3424 = vpop.f32.mrf.mxu0
        %v3425 = vadd.f32 %v3412, %v3424
        %v3426 = vpop.f32.mrf.mxu0
        %3427 = vdwg.mxu0
        %3428 = vmatpush.bf16.msra.mxu0 %v3361
        %3429 = vmatpush.bf16.msra.mxu0 %v3360
        %3430 = vmatpush.bf16.msra.mxu0 %v3359
        %3431 = vmatpush.bf16.msra.mxu0 %v3358
        %3432 = vmatpush.bf16.msra.mxu0 %v3357
        %3433 = vmatpush.bf16.msra.mxu0 %v3356
        %3434 = vmatpush.bf16.msra.mxu0 %v3355
        %3435 = vmatpush.bf16.msra.mxu0 %v3354
        %3436 = vmatmul.bf16.gmra.mxu0 %v3141
        %v3437 = vpop.f32.mrf.mxu0
        %v3438 = vadd.f32 %v3425, %v3437
        %v3439 = vpop.f32.mrf.mxu0
        %3440 = vdwg.mxu0
        %3441 = vmatpush.bf16.msra.mxu0 %v3369
        %3442 = vmatpush.bf16.msra.mxu0 %v3368
        %3443 = vmatpush.bf16.msra.mxu0 %v3367
        %3444 = vmatpush.bf16.msra.mxu0 %v3366
        %3445 = vmatpush.bf16.msra.mxu0 %v3365
        %3446 = vmatpush.bf16.msra.mxu0 %v3364
        %3447 = vmatpush.bf16.msra.mxu0 %v3363
        %3448 = vmatpush.bf16.msra.mxu0 %v3362
        %3449 = vmatmul.bf16.gmra.mxu0 %v3142
        %v3450 = vpop.f32.mrf.mxu0
        %v3451 = vadd.f32 %v3438, %v3450
        %v3452 = vpop.f32.mrf.mxu0
        %3453 = vdwg.mxu0
        %v3454 = vtanh.pop %v3451
        %3455 = vst [vmem:[%s500] sm:$0xff] %v3454
        %p3456 = scmp.lt.s32.totalorder %s29, 1
        %s3457 = scalar_select %p3456, %s29, 1
        %s3458 = smul.addr %s3457, 8
        %s3459 = scalar_lea.vmem %s6, %s3458
        %p3460 = scmp.lt.s32.totalorder %s29, 1
        %s3461 = scalar_select %p3460, %s29, 1
        %s3462 = smul.addr %s3461, 4
        %s3463 = smul.addr %s3462, 8
        %s3464 = scalar_lea.vmem %s7, %s3463
        %p3465 = scmp.lt.s32.totalorder %s29, 1
        %s3466 = scalar_select %p3465, %s29, 1
        %s3467 = smul.addr %s3466, 4
        %s3468 = smul.addr %s3467, 8
        %s3469 = scalar_lea.vmem %s8, %s3468
        // Predicated region
        $region61: #{cpah_forward.1} parent=43 // pred_check
          %p3470 = pneg %p203
        $region62: #{cpah_forward.1} parent=43 // pred_check_branch
          %3472 = sbr.rel (%p3470) target = $region64
        $region63: #{cpah_forward.1} parent=43 // pred_region
          _
        $region64: #{cpah_forward.1} parent=43 // pred_fallthru
          _
        // Predicated region
        $region65: #{cpah_forward.1} parent=43 // pred_check
          %p3473 = pneg %p229
        $region66: #{cpah_forward.1} parent=43 // pred_check_branch
          %3475 = sbr.rel (%p3473) target = $region68
        $region67: #{cpah_forward.1} parent=43 // pred_region
          _
        $region68: #{cpah_forward.1} parent=43 // pred_fallthru
          _
        // Predicated region
        $region69: #{cpah_forward.1} parent=43 // pred_check
          %p3476 = pneg %p255
        $region70: #{cpah_forward.1} parent=43 // pred_check_branch
          %3478 = sbr.rel (%p3476) target = $region72
        $region71: #{cpah_forward.1} parent=43 // pred_region
          _
        $region72: #{cpah_forward.1} parent=43 // pred_fallthru
          _
      $region44: #{cpah_forward.1} parent=5 // pred_fallthru
        _
      %p3479 = scmp.le.s32.totalorder 2, %s24
      // Predicated region
      $region73: #{cpah_forward.1} parent=5 // pred_check
        %p3480 = pneg %p3479
      $region74: #{cpah_forward.1} parent=5 // pred_check_branch
        %3482 = sbr.rel (%p3480) target = $region76
      $region75: #{cpah_forward.1} parent=5 // pred_region
        %s3483 = ssub.s32 %s24, 2
        // Predicated region
        $region77: #{cpah_forward.1} parent=75 // pred_check
          %p3484 = pneg %p209
        $region78: #{cpah_forward.1} parent=75 // pred_check_branch
          %3486 = sbr.rel (%p3484) target = $region80
        $region79: #{cpah_forward.1} parent=75 // pred_region
          %p3487 = scmp.lt.s32.totalorder %s30, 1
          %s3488 = scalar_select %p3487, %s30, 1
          %s3489 = smul.addr %s3488, 8
          %s3490 = scalar_lea.vmem %s6, %s3489
        $region80: #{cpah_forward.1} parent=75 // pred_fallthru
          _
        // Predicated region
        $region81: #{cpah_forward.1} parent=75 // pred_check
          %p3491 = pneg %p235
        $region82: #{cpah_forward.1} parent=75 // pred_check_branch
          %3493 = sbr.rel (%p3491) target = $region84
        $region83: #{cpah_forward.1} parent=75 // pred_region
          %p3494 = scmp.lt.s32.totalorder %s30, 1
          %s3495 = scalar_select %p3494, %s30, 1
          %s3496 = smul.addr %s3495, 4
          %s3497 = smul.addr %s3496, 8
          %s3498 = scalar_lea.vmem %s7, %s3497
        $region84: #{cpah_forward.1} parent=75 // pred_fallthru
          _
        // Predicated region
        $region85: #{cpah_forward.1} parent=75 // pred_check
          %p3499 = pneg %p261
        $region86: #{cpah_forward.1} parent=75 // pred_check_branch
          %3501 = sbr.rel (%p3499) target = $region88
        $region87: #{cpah_forward.1} parent=75 // pred_region
          %p3502 = scmp.lt.s32.totalorder %s30, 1
          %s3503 = scalar_select %p3502, %s30, 1
          %s3504 = smul.addr %s3503, 4
          %s3505 = smul.addr %s3504, 8
          %s3506 = scalar_lea.vmem %s8, %s3505
        $region88: #{cpah_forward.1} parent=75 // pred_fallthru
          _
      $region76: #{cpah_forward.1} parent=5 // pred_fallthru
        _
    $region6: #{cpah_forward.1} parent=1 // loop_footer
      %s28 = sadd.s32 1, %s24
    $region7: #{cpah_forward.1} parent=1 // loop_footer_branch
      %23 = sbr.rel target = $region3
    $region8: #{cpah_forward.1} parent=1 // loop_exit
      _
    %3507 = vsyncpa [#allocation3], 1
    %s3508 = scalar_lea.sflag [#allocation3], 1
    %3509 = vsyncpa %s3508, 1
    %3510 = vsyncpa [#allocation5], 1
    %s3511 = scalar_lea.sflag [#allocation5], 1
    %3512 = vsyncpa %s3511, 1
    %3513 = vsyncpa [#allocation8], 1
    %s3514 = scalar_lea.sflag [#allocation8], 1
    %3515 = vsyncpa %s3514, 1

</llo_original>
